<compile_context>
chip_gen: v7x
topology: tpu7x:2x2x1
jax: 0.10.0
libtpu: 0.0.40
codegen_flags: <defaults>
</compile_context>

<pallas_src>
import functools

import jax
import jax.numpy as jnp
from jax.experimental import pallas as pl
from jax.experimental.pallas import tpu as pltpu

_BN_EPS = 1e-3


# ----------------------------------------------------------------------------
# Per-generation configuration and tile selection
# ----------------------------------------------------------------------------
def _tpu_config():
    kind = ""
    try:
        kind = jax.devices()[0].device_kind.lower()
    except Exception:
        pass
    if "v5" in kind:
        return {"budget": 12 << 20, "vmem_limit": 64 << 20, "min_steps": 2}
    if "v6" in kind:
        return {"budget": 24 << 20, "vmem_limit": 64 << 20, "min_steps": 2}
    # v7x (2 TensorCores, 64 MiB VMEM per core) or unknown: keep the working
    # set conservative and aim for >=4 total grid steps so each core pipelines.
    return {"budget": 24 << 20, "vmem_limit": 48 << 20, "min_steps": 4}


_TPU_CFG = _tpu_config()


def _cparams(n_axes):
    return pltpu.CompilerParams(
        dimension_semantics=("parallel",) * n_axes,
        vmem_limit_bytes=_TPU_CFG["vmem_limit"])


def _divisors_desc(n):
    d = set()
    i = 1
    while i * i <= n:
        if n % i == 0:
            d.add(i)
            d.add(n // i)
        i += 1
    return sorted(d, reverse=True)


def _choose_tile(total, stream_row_bytes, scratch_row_bytes=0, fixed_bytes=0,
                 align=8, budget=None, min_steps=None):
    """Largest tile dividing `total` whose estimated VMEM working set fits the
    per-generation budget; prefers >= min_steps grid steps (pipelining /
    megacore) but never shrinks below what the budget allows.  Only streamed
    rows are double-counted for double-buffering; single-copy scratch is not.
    """
    budget = _TPU_CFG["budget"] if budget is None else budget
    min_steps = _TPU_CFG["min_steps"] if min_steps is None else min_steps

    def cost(t):
        return 2 * t * stream_row_bytes + t * scratch_row_bytes + fixed_bytes

    cands = [d for d in _divisors_desc(total) if d % align == 0 or d == total]
    fitting = [d for d in cands if cost(d) <= budget]
    preferred = [d for d in fitting if total // d >= min_steps]
    if preferred:
        return preferred[0]
    if fitting:
        return fitting[0]
    return cands[-1]       # budget is a soft target; take the smallest tile


# ----------------------------------------------------------------------------
# Kernels (matmuls with f32 accumulation, f32 bias + SiLU epilogue)
# ----------------------------------------------------------------------------
def _dual_pw_kernel(x_ref, wa_ref, ba_ref, wb_ref, bb_ref, oa_ref, ob_ref):
    # Fused cv1 + cv2: x is loaded once per tile, two matmuls, two outputs.
    x = x_ref[...]
    ya = jnp.dot(x, wa_ref[...], preferred_element_type=jnp.float32) + ba_ref[...]
    oa_ref[...] = (ya * jax.nn.sigmoid(ya)).astype(oa_ref.dtype)
    yb = jnp.dot(x, wb_ref[...], preferred_element_type=jnp.float32) + bb_ref[...]
    ob_ref[...] = (yb * jax.nn.sigmoid(yb)).astype(ob_ref.dtype)


def _concat_pw_kernel(a_ref, b_ref, wa_ref, wb_ref, bias_ref, o_ref):
    # Fused torch.cat([a, b], channel) + 1x1 conv: a @ W_top + b @ W_bot.
    y = jnp.dot(a_ref[...], wa_ref[...], preferred_element_type=jnp.float32)
    y = y + jnp.dot(b_ref[...], wb_ref[...], preferred_element_type=jnp.float32)
    y = y + bias_ref[...]
    o_ref[...] = (y * jax.nn.sigmoid(y)).astype(o_ref.dtype)


def _bottleneck_kernel(x_ref, halo_ref, w1_ref, b1_ref, w2_ref, b2_ref,
                       o_ref, h_ref, *, shortcut):
    """Fused Bottleneck: h = SiLU(x@W1+b1); y = SiLU(conv3x3(h)); y (+= x).

    x_ref    : (1, bh, W, C)    current out1 row-block (also the residual)
    halo_ref : (1, 1, 2, W, C)  out1 rows just above / below this block
    w1_ref   : (C, C)           folded 1x1 weight
    b1_ref   : (1, C)  f32
    w2_ref   : (9*C, C)         folded 3x3 weight, tap-major (kh, kw, cin)
    b2_ref   : (1, C)  f32
    o_ref    : (1, bh, W, C)
    h_ref    : (bh+2, W+2, C)   VMEM scratch holding zero-padded h
    """
    _, bh, wdt, c = x_ref.shape
    i = pl.program_id(1)
    nblk = pl.num_programs(1)

    def pw(v2d):                          # 1x1 conv + BN bias + SiLU (f32)
        y = jnp.dot(v2d, w1_ref[...], preferred_element_type=jnp.float32)
        y = y + b1_ref[...]
        return y * jax.nn.sigmoid(y)

    # Zero-pad columns of the h scratch; all rows/columns 1..W are overwritten
    # below, so the scratch is fully defined every grid step.
    zcol = jnp.zeros((bh + 2, 1, c), h_ref.dtype)
    h_ref[:, 0:1, :] = zcol
    h_ref[:, wdt + 1:wdt + 2, :] = zcol

    # h for the bh interior rows.
    x = x_ref[...].reshape(bh, wdt, c)
    h_main = pw(x.reshape(bh * wdt, c)).reshape(bh, wdt, c)
    h_ref[1:bh + 1, 1:wdt + 1, :] = h_main.astype(h_ref.dtype)

    # h for the two halo rows (recomputed in-VMEM, cheap); zeroed at image
    # borders because the 3x3 conv zero-pads h, not out1.
    halo = halo_ref[...].reshape(2 * wdt, c)
    h_halo = pw(halo).reshape(2, wdt, c)
    top_ok = jnp.where(i > 0, 1.0, 0.0).astype(jnp.float32)
    bot_ok = jnp.where(i < nblk - 1, 1.0, 0.0).astype(jnp.float32)
    h_ref[0:1, 1:wdt + 1, :] = (h_halo[0:1] * top_ok).astype(h_ref.dtype)
    h_ref[bh + 1:bh + 2, 1:wdt + 1, :] = (h_halo[1:2] * bot_ok).astype(h_ref.dtype)

    # 3x3 conv as 9 accumulated MXU matmuls with static tap slices (no big
    # (rows, 9*C) tap-concat buffer).
    acc = jnp.zeros((bh * wdt, c), jnp.float32)
    for kh in range(3):
        for kw in range(3):
            tap = h_ref[kh:kh + bh, kw:kw + wdt, :].reshape(bh * wdt, c)
            t = kh * 3 + kw
            acc = acc + jnp.dot(tap, w2_ref[t * c:(t + 1) * c, :],
                                preferred_element_type=jnp.float32)

    y = acc.reshape(bh, wdt, c) + b2_ref[...].reshape(1, 1, c)
    y = y * jax.nn.sigmoid(y)
    if shortcut:
        y = y + x.astype(jnp.float32)
    o_ref[...] = y.reshape(1, bh, wdt, c).astype(o_ref.dtype)


# ----------------------------------------------------------------------------
# Wrappers (layout glue only; no padded HBM copies)
# ----------------------------------------------------------------------------
def dual_pointwise_conv_bn_silu(x_nhwc, w_a, b_a, w_b, b_b):
    """Fused cv1 + cv2 (both 1x1 on the same input): one HBM read of x."""
    n, hgt, wid, cin = x_nhwc.shape
    ca, cb = w_a.shape[1], w_b.shape[1]
    m = n * hgt * wid
    s = jnp.dtype(x_nhwc.dtype).itemsize
    bm = _choose_tile(m,
                      stream_row_bytes=(cin + ca + cb) * s,
                      scratch_row_bytes=(ca + cb) * 4,
                      fixed_bytes=2 * cin * (ca + cb) * s,
                      align=8)
    xm = x_nhwc.reshape(m, cin)
    oa, ob = pl.pallas_call(
        _dual_pw_kernel,
        out_shape=(jax.ShapeDtypeStruct((m, ca), x_nhwc.dtype),
                   jax.ShapeDtypeStruct((m, cb), x_nhwc.dtype)),
        grid=(m // bm,),
        in_specs=[
            pl.BlockSpec((bm, cin), lambda i: (i, 0)),
            pl.BlockSpec((cin, ca), lambda i: (0, 0)),
            pl.BlockSpec((1, ca), lambda i: (0, 0)),
            pl.BlockSpec((cin, cb), lambda i: (0, 0)),
            pl.BlockSpec((1, cb), lambda i: (0, 0)),
        ],
        out_specs=(pl.BlockSpec((bm, ca), lambda i: (i, 0)),
                   pl.BlockSpec((bm, cb), lambda i: (i, 0))),
        compiler_params=_cparams(1),
    )(xm, w_a, b_a.reshape(1, ca).astype(jnp.float32),
      w_b, b_b.reshape(1, cb).astype(jnp.float32))
    return (oa.reshape(n, hgt, wid, ca), ob.reshape(n, hgt, wid, cb))


def concat_pointwise_conv_bn_silu(a_nhwc, b_nhwc, w_top, w_bot, bias):
    """Fused channel-concat + 1x1 conv + BN + SiLU (cv3)."""
    n, hgt, wid, ca = a_nhwc.shape
    cb = b_nhwc.shape[-1]
    cout = w_top.shape[1]
    m = n * hgt * wid
    s = jnp.dtype(a_nhwc.dtype).itemsize
    bm = _choose_tile(m,
                      stream_row_bytes=(ca + cb + cout) * s,
                      scratch_row_bytes=cout * 4,
                      fixed_bytes=2 * (ca + cb) * cout * s,
                      align=8)
    out = pl.pallas_call(
        _concat_pw_kernel,
        out_shape=jax.ShapeDtypeStruct((m, cout), a_nhwc.dtype),
        grid=(m // bm,),
        in_specs=[
            pl.BlockSpec((bm, ca), lambda i: (i, 0)),
            pl.BlockSpec((bm, cb), lambda i: (i, 0)),
            pl.BlockSpec((ca, cout), lambda i: (0, 0)),
            pl.BlockSpec((cb, cout), lambda i: (0, 0)),
            pl.BlockSpec((1, cout), lambda i: (0, 0)),
        ],
        out_specs=pl.BlockSpec((bm, cout), lambda i: (i, 0)),
        compiler_params=_cparams(1),
    )(a_nhwc.reshape(m, ca), b_nhwc.reshape(m, cb),
      w_top, w_bot, bias.reshape(1, cout).astype(jnp.float32))
    return out.reshape(n, hgt, wid, cout)


def _build_halo(out1, bh):
    """(N, H//bh, 2, W, C): for each row-block, the out1 rows above and below.
    Border blocks get zero rows (they are masked in-kernel anyway)."""
    n, hgt, wid, c = out1.shape
    nb = hgt // bh
    zero = jnp.zeros((n, 1, wid, c), out1.dtype)
    if nb == 1:
        top = zero
        bot = zero
    else:
        top = jnp.concatenate([zero, out1[:, bh - 1:hgt - 1:bh]], axis=1)
        bot = jnp.concatenate([out1[:, bh:hgt:bh], zero], axis=1)
    return jnp.stack([top, bot], axis=2)


def bottleneck_fused(out1, w1, b1, w2, b2, shortcut=True):
    """One YOLO Bottleneck, fused: SiLU(1x1) -> SiLU(3x3 pad=1) (+ residual).

    `h` stays in VMEM (never written to HBM); the residual is the resident
    input tile; the 3x3 halo rows are recomputed from a 2-row side input.
    """
    n, hgt, wid, c = out1.shape
    s = jnp.dtype(out1.dtype).itemsize
    min_steps = max(1, -(-_TPU_CFG["min_steps"] // n))
    bh = _choose_tile(
        hgt,
        stream_row_bytes=2 * wid * c * s,                        # in + out block
        scratch_row_bytes=(wid + 2) * c * s + 2 * wid * c * 4,   # h scratch + f32 acc/taps
        fixed_bytes=(2 * (2 * wid * c * s)                       # halo rows (dbl-buffered)
                     + 2 * 10 * c * c * s                        # w1 + w2
                     + 2 * (wid + 2) * c * s),                   # scratch halo rows
        align=1, min_steps=min_steps)
    nb = hgt // bh
    halo = _build_halo(out1, bh)

    return pl.pallas_call(
        functools.partial(_bottleneck_kernel, shortcut=shortcut),
        out_shape=jax.ShapeDtypeStruct((n, hgt, wid, c), out1.dtype),
        grid=(n, nb),
        in_specs=[
            pl.BlockSpec((1, bh, wid, c), lambda b, i: (b, i, 0, 0)),
            pl.BlockSpec((1, 1, 2, wid, c), lambda b, i: (b, i, 0, 0, 0)),
            pl.BlockSpec((c, c), lambda b, i: (0, 0)),
            pl.BlockSpec((1, c), lambda b, i: (0, 0)),
            pl.BlockSpec((9 * c, c), lambda b, i: (0, 0)),
            pl.BlockSpec((1, c), lambda b, i: (0, 0)),
        ],
        out_specs=pl.BlockSpec((1, bh, wid, c), lambda b, i: (b, i, 0, 0)),
        scratch_shapes=[pltpu.VMEM((bh + 2, wid + 2, c), out1.dtype)],
        compiler_params=_cparams(2),
    )(out1, halo, w1, b1.reshape(1, c).astype(jnp.float32),
      w2, b2.reshape(1, c).astype(jnp.float32))


# ----------------------------------------------------------------------------
# Parameters (deterministic; BN folded into conv weights + bias)
# ----------------------------------------------------------------------------
def init_conv_bn(key, c_in, c_out, k):
    kw_, kg, kb, km, kv = jax.random.split(key, 5)
    w = 0.1 * jax.random.normal(kw_, (c_out, c_in, k, k), jnp.float32)
    gamma = 1.0 + 0.1 * jax.random.normal(kg, (c_out,), jnp.float32)
    beta = 0.1 * jax.random.normal(kb, (c_out,), jnp.float32)
    mean = 0.1 * jax.random.normal(km, (c_out,), jnp.float32)
    var = 0.5 + jnp.abs(jax.random.normal(kv, (c_out,), jnp.float32))
    scale = gamma / jnp.sqrt(var + _BN_EPS)
    bias = beta - mean * scale
    w_fold = w * scale[:, None, None, None]            # fold BN scale into conv
    if k == 1:
        w_mat = w_fold[:, :, 0, 0].T                   # (Cin, Cout)
    else:
        # (Cout,Cin,kh,kw) -> (kh,kw,Cin,Cout) -> (k*k*Cin, Cout) tap-major
        w_mat = jnp.transpose(w_fold, (2, 3, 1, 0)).reshape(k * k * c_in, c_out)
    return w_mat, bias


def init_c3_params(key, c1, c2, n):
    ch = c2 // 2
    keys = jax.random.split(key, 3 + 2 * n)
    params = {
        "cv1": init_conv_bn(keys[0], c1, ch, 1),
        "cv2": init_conv_bn(keys[1], c1, ch, 1),
        "cv3": init_conv_bn(keys[2], c2, c2, 1),
        "m": [],
    }
    for i in range(n):
        params["m"].append({
            "cv1": init_conv_bn(keys[3 + 2 * i], ch, ch, 1),
            "cv2": init_conv_bn(keys[4 + 2 * i], ch, ch, 3),
        })
    return params


def cast_params(params, dtype):
    """Cast folded conv weights to `dtype` (e.g. bf16); biases stay f32."""
    def cp(p):
        w, b = p
        return (w.astype(dtype), b)
    return {
        "cv1": cp(params["cv1"]),
        "cv2": cp(params["cv2"]),
        "cv3": cp(params["cv3"]),
        "m": [{"cv1": cp(bp["cv1"]), "cv2": cp(bp["cv2"])} for bp in params["m"]],
    }


# ----------------------------------------------------------------------------
# C3 forward (Pallas) and pure-JAX reference
# ----------------------------------------------------------------------------
def c3_forward(x_nchw, params, shortcut=True):
    x = jnp.transpose(x_nchw, (0, 2, 3, 1))                      # NCHW -> NHWC
    (w_a, b_a), (w_b, b_b) = params["cv1"], params["cv2"]
    out1, out2 = dual_pointwise_conv_bn_silu(x, w_a, b_a, w_b, b_b)
    for bp in params["m"]:
        out1 = bottleneck_fused(out1, bp["cv1"][0], bp["cv1"][1],
                                bp["cv2"][0], bp["cv2"][1], shortcut=shortcut)
    w3, b3 = params["cv3"]
    ch = out1.shape[-1]
    out = concat_pointwise_conv_bn_silu(out1, out2, w3[:ch], w3[ch:], b3)
    return jnp.transpose(out, (0, 3, 1, 2))                      # NHWC -> NCHW


def _ref_pw(x, w_mat, bias):
    y = jnp.einsum("nhwc,cd->nhwd", x, w_mat) + bias
    return y * jax.nn.sigmoid(y)


def _ref_c3(x_nchw, params, shortcut=True):
    x = jnp.transpose(x_nchw, (0, 2, 3, 1))
    out1 = _ref_pw(x, *params["cv1"])
    for bp in params["m"]:
        h = _ref_pw(out1, *bp["cv1"])
        w9, b = bp["cv2"]
        cout = w9.shape[1]
        cin = w9.shape[0] // 9
        w_hwio = w9.reshape(3, 3, cin, cout)
        y = jax.lax.conv_general_dilated(
            h, w_hwio, (1, 1), "SAME",
            dimension_numbers=("NHWC", "HWIO", "NHWC")) + b
        y = y * jax.nn.sigmoid(y)
        out1 = y + (out1 if shortcut else 0.0)
    out2 = _ref_pw(x, *params["cv2"])
    out = _ref_pw(jnp.concatenate([out1, out2], axis=-1), *params["cv3"])
    return jnp.transpose(out, (0, 3, 1, 2))


if __name__ == "__main__":
    key = jax.random.PRNGKey(0)
    kx, kp = jax.random.split(key)
    c1, c2, n_bottleneck = 4, 8, 1
    x = jax.random.normal(kx, (2, c1, 16, 16), jnp.float32)      # NCHW like torch
    params = init_c3_params(kp, c1, c2, n_bottleneck)

    # f32 path: check against the pure-JAX reference.
    fwd = jax.jit(functools.partial(c3_forward, params=params))
    out = fwd(x)
    jax.block_until_ready(out)
    assert out.shape == (2, c2, 16, 16), out.shape

    ref = _ref_c3(x, params)
    assert jnp.allclose(out, ref, rtol=2e-3, atol=2e-3), float(
        jnp.max(jnp.abs(out - ref)))

    # bf16 storage / MXU path: f32 accumulation + f32 epilogue in-kernel.
    params_bf16 = cast_params(params, jnp.bfloat16)
    fwd_bf16 = jax.jit(functools.partial(c3_forward, params=params_bf16))
    out_bf16 = fwd_bf16(x.astype(jnp.bfloat16)).astype(jnp.float32)
    jax.block_until_ready(out_bf16)
    assert out_bf16.shape == (2, c2, 16, 16)
    assert jnp.allclose(out_bf16, ref, rtol=5e-2, atol=5e-2), float(
        jnp.max(jnp.abs(out_bf16 - ref)))

    print("KERNEL_OK")
</pallas_src>

<mosaic_0001>
module attributes {stable_mosaic.version = 11 : i64} {
  func.func @_dual_pw_kernel(%arg0: i32, %arg1: memref<128x4xf32, #tpu.memory_space<vmem>>, %arg2: memref<4x4xf32, #tpu.memory_space<vmem>>, %arg3: memref<1x4xf32, #tpu.memory_space<vmem>>, %arg4: memref<4x4xf32, #tpu.memory_space<vmem>>, %arg5: memref<1x4xf32, #tpu.memory_space<vmem>>, %arg6: memref<128x4xf32, #tpu.memory_space<vmem>>, %arg7: memref<128x4xf32, #tpu.memory_space<vmem>>) attributes {dimension_semantics = [#tpu.dimension_semantics<parallel>], iteration_bounds = array<i64: 4>, scalar_prefetch = 0 : i64, scratch_operands = 0 : i64, tpu.core_type = #tpu.core_type<tc>, window_params = [{transform_indices = @transform_0, window_bounds = array<i64: 128, 4>}, {pipeline_mode = #tpu.pipeline_mode<synchronous>, transform_indices = @transform_1, window_bounds = array<i64: 4, 4>}, {pipeline_mode = #tpu.pipeline_mode<synchronous>, transform_indices = @transform_2, window_bounds = array<i64: 1, 4>}, {pipeline_mode = #tpu.pipeline_mode<synchronous>, transform_indices = @transform_3, window_bounds = array<i64: 4, 4>}, {pipeline_mode = #tpu.pipeline_mode<synchronous>, transform_indices = @transform_4, window_bounds = array<i64: 1, 4>}, {transform_indices = @transform_5, window_bounds = array<i64: 128, 4>}, {transform_indices = @transform_6, window_bounds = array<i64: 128, 4>}]} {
    %c0 = arith.constant 0 : index
    %c0_0 = arith.constant 0 : index
    %0 = vector.load %arg1[%c0, %c0_0] : memref<128x4xf32, #tpu.memory_space<vmem>>, vector<128x4xf32>
    %c0_1 = arith.constant 0 : index
    %c0_2 = arith.constant 0 : index
    %1 = vector.load %arg2[%c0_1, %c0_2] : memref<4x4xf32, #tpu.memory_space<vmem>>, vector<4x4xf32>
    %cst = arith.constant dense<0.000000e+00> : vector<128x4xf32>
    %2 = tpu.matmul %0, %1, %cst {dimension_numbers = #tpu.dot_dimension_numbers<[1], [0], [0], [1], [0, 0, 1, 1], [], []>} : vector<128x4xf32>, vector<4x4xf32>, vector<128x4xf32> -> vector<128x4xf32>
    %c0_3 = arith.constant 0 : index
    %c0_4 = arith.constant 0 : index
    %3 = vector.load %arg3[%c0_3, %c0_4] : memref<1x4xf32, #tpu.memory_space<vmem>>, vector<1x4xf32>
    %4 = vector.broadcast %3 : vector<1x4xf32> to vector<128x4xf32>
    %5 = arith.addf %2, %4 : vector<128x4xf32>
    %6 = arith.negf %5 : vector<128x4xf32>
    %7 = math.exp %6 : vector<128x4xf32>
    %cst_5 = arith.constant 1.000000e+00 : f32
    %8 = vector.broadcast %cst_5 : f32 to vector<128x4xf32>
    %9 = arith.addf %8, %7 : vector<128x4xf32>
    %10 = arith.divf %8, %9 : vector<128x4xf32>
    %11 = arith.mulf %5, %10 : vector<128x4xf32>
    %c0_6 = arith.constant 0 : index
    %c0_7 = arith.constant 0 : index
    %12 = vector.load %arg6[%c0_6, %c0_7] : memref<128x4xf32, #tpu.memory_space<vmem>>, vector<128x4xf32>
    tpu.vector_store %arg6[%c0_6, %c0_7], %11 {strides = array<i32>} : memref<128x4xf32, #tpu.memory_space<vmem>>, vector<128x4xf32>,
    %c0_8 = arith.constant 0 : index
    %c0_9 = arith.constant 0 : index
    %13 = vector.load %arg4[%c0_8, %c0_9] : memref<4x4xf32, #tpu.memory_space<vmem>>, vector<4x4xf32>
    %cst_10 = arith.constant dense<0.000000e+00> : vector<128x4xf32>
    %14 = tpu.matmul %0, %13, %cst_10 {dimension_numbers = #tpu.dot_dimension_numbers<[1], [0], [0], [1], [0, 0, 1, 1], [], []>} : vector<128x4xf32>, vector<4x4xf32>, vector<128x4xf32> -> vector<128x4xf32>
    %c0_11 = arith.constant 0 : index
    %c0_12 = arith.constant 0 : index
    %15 = vector.load %arg5[%c0_11, %c0_12] : memref<1x4xf32, #tpu.memory_space<vmem>>, vector<1x4xf32>
    %16 = vector.broadcast %15 : vector<1x4xf32> to vector<128x4xf32>
    %17 = arith.addf %14, %16 : vector<128x4xf32>
    %18 = arith.negf %17 : vector<128x4xf32>
    %19 = math.exp %18 : vector<128x4xf32>
    %cst_13 = arith.constant 1.000000e+00 : f32
    %20 = vector.broadcast %cst_13 : f32 to vector<128x4xf32>
    %21 = arith.addf %20, %19 : vector<128x4xf32>
    %22 = arith.divf %20, %21 : vector<128x4xf32>
    %23 = arith.mulf %17, %22 : vector<128x4xf32>
    %c0_14 = arith.constant 0 : index
    %c0_15 = arith.constant 0 : index
    %24 = vector.load %arg7[%c0_14, %c0_15] : memref<128x4xf32, #tpu.memory_space<vmem>>, vector<128x4xf32>
    tpu.vector_store %arg7[%c0_14, %c0_15], %23 {strides = array<i32>} : memref<128x4xf32, #tpu.memory_space<vmem>>, vector<128x4xf32>,
    return
  }
  func.func @transform_0(%arg0: i32) -> (i32, i32) {
    %c0_i32 = arith.constant 0 : i32
    %c0_i32_0 = arith.constant 0 : i32
    return %arg0, %c0_i32 : i32, i32
  }
  func.func @transform_1(%arg0: i32) -> (i32, i32) {
    %c0_i32 = arith.constant 0 : i32
    %c0_i32_0 = arith.constant 0 : i32
    %c0_i32_1 = arith.constant 0 : i32
    return %c0_i32, %c0_i32_0 : i32, i32
  }
  func.func @transform_2(%arg0: i32) -> (i32, i32) {
    %c0_i32 = arith.constant 0 : i32
    %c0_i32_0 = arith.constant 0 : i32
    %c0_i32_1 = arith.constant 0 : i32
    return %c0_i32, %c0_i32_0 : i32, i32
  }
  func.func @transform_3(%arg0: i32) -> (i32, i32) {
    %c0_i32 = arith.constant 0 : i32
    %c0_i32_0 = arith.constant 0 : i32
    %c0_i32_1 = arith.constant 0 : i32
    return %c0_i32, %c0_i32_0 : i32, i32
  }
  func.func @transform_4(%arg0: i32) -> (i32, i32) {
    %c0_i32 = arith.constant 0 : i32
    %c0_i32_0 = arith.constant 0 : i32
    %c0_i32_1 = arith.constant 0 : i32
    return %c0_i32, %c0_i32_0 : i32, i32
  }
  func.func @transform_5(%arg0: i32) -> (i32, i32) {
    %c0_i32 = arith.constant 0 : i32
    %c0_i32_0 = arith.constant 0 : i32
    return %arg0, %c0_i32 : i32, i32
  }
  func.func @transform_6(%arg0: i32) -> (i32, i32) {
    %c0_i32 = arith.constant 0 : i32
    %c0_i32_0 = arith.constant 0 : i32
    return %arg0, %c0_i32 : i32, i32
  }
}

module attributes {stable_mosaic.version = 11 : i64} {
  func.func @_bottleneck_kernel(%arg0: i32, %arg1: i32, %arg2: memref<1x8x16x4xf32, #tpu.memory_space<vmem>>, %arg3: memref<1x1x2x16x4xf32, #tpu.memory_space<vmem>>, %arg4: memref<4x4xf32, #tpu.memory_space<vmem>>, %arg5: memref<1x4xf32, #tpu.memory_space<vmem>>, %arg6: memref<36x4xf32, #tpu.memory_space<vmem>>, %arg7: memref<1x4xf32, #tpu.memory_space<vmem>>, %arg8: memref<1x8x16x4xf32, #tpu.memory_space<vmem>>, %arg9: memref<10x18x4xf32, #tpu.memory_space<vmem>>) attributes {dimension_semantics = [#tpu.dimension_semantics<parallel>, #tpu.dimension_semantics<parallel>], iteration_bounds = array<i64: 2, 2>, scalar_prefetch = 0 : i64, scratch_operands = 1 : i64, tpu.core_type = #tpu.core_type<tc>, window_params = [{transform_indices = @transform_0, window_bounds = array<i64: 1, 8, 16, 4>}, {transform_indices = @transform_1, window_bounds = array<i64: 1, 1, 2, 16, 4>}, {pipeline_mode = #tpu.pipeline_mode<synchronous>, transform_indices = @transform_2, window_bounds = array<i64: 4, 4>}, {pipeline_mode = #tpu.pipeline_mode<synchronous>, transform_indices = @transform_3, window_bounds = array<i64: 1, 4>}, {pipeline_mode = #tpu.pipeline_mode<synchronous>, transform_indices = @transform_4, window_bounds = array<i64: 36, 4>}, {pipeline_mode = #tpu.pipeline_mode<synchronous>, transform_indices = @transform_5, window_bounds = array<i64: 1, 4>}, {transform_indices = @transform_6, window_bounds = array<i64: 1, 8, 16, 4>}]} {
    %cst = arith.constant 0.000000e+00 : f32
    %0 = vector.broadcast %cst : f32 to vector<10x1x4xf32>
    %c0 = arith.constant 0 : index
    %c0_0 = arith.constant 0 : index
    %c0_1 = arith.constant 0 : index
    %1 = vector.load %arg9[%c0, %c0_0, %c0_1] : memref<10x18x4xf32, #tpu.memory_space<vmem>>, vector<10x1x4xf32>
    tpu.vector_store %arg9[%c0, %c0_0, %c0_1], %0 {strides = array<i32>} : memref<10x18x4xf32, #tpu.memory_space<vmem>>, vector<10x1x4xf32>,
    %c0_2 = arith.constant 0 : index
    %c17 = arith.constant 17 : index
    %c0_3 = arith.constant 0 : index
    %2 = vector.load %arg9[%c0_2, %c17, %c0_3] : memref<10x18x4xf32, #tpu.memory_space<vmem>>, vector<10x1x4xf32>
    tpu.vector_store %arg9[%c0_2, %c17, %c0_3], %0 {strides = array<i32>} : memref<10x18x4xf32, #tpu.memory_space<vmem>>, vector<10x1x4xf32>,
    %c0_4 = arith.constant 0 : index
    %c0_5 = arith.constant 0 : index
    %c0_6 = arith.constant 0 : index
    %c0_7 = arith.constant 0 : index
    %3 = vector.load %arg2[%c0_4, %c0_5, %c0_6, %c0_7] : memref<1x8x16x4xf32, #tpu.memory_space<vmem>>, vector<1x8x16x4xf32>
    %4 = vector.shape_cast %3 : vector<1x8x16x4xf32> to vector<8x16x4xf32>
    %5 = vector.shape_cast %4 : vector<8x16x4xf32> to vector<128x4xf32>
    %c0_8 = arith.constant 0 : index
    %c0_9 = arith.constant 0 : index
    %6 = vector.load %arg4[%c0_8, %c0_9] : memref<4x4xf32, #tpu.memory_space<vmem>>, vector<4x4xf32>
    %cst_10 = arith.constant dense<0.000000e+00> : vector<128x4xf32>
    %7 = tpu.matmul %5, %6, %cst_10 {dimension_numbers = #tpu.dot_dimension_numbers<[1], [0], [0], [1], [0, 0, 1, 1], [], []>} : vector<128x4xf32>, vector<4x4xf32>, vector<128x4xf32> -> vector<128x4xf32>
    %c0_11 = arith.constant 0 : index
    %c0_12 = arith.constant 0 : index
    %8 = vector.load %arg5[%c0_11, %c0_12] : memref<1x4xf32, #tpu.memory_space<vmem>>, vector<1x4xf32>
    %9 = vector.broadcast %8 : vector<1x4xf32> to vector<128x4xf32>
    %10 = arith.addf %7, %9 : vector<128x4xf32>
    %11 = arith.negf %10 : vector<128x4xf32>
    %12 = math.exp %11 : vector<128x4xf32>
    %cst_13 = arith.constant 1.000000e+00 : f32
    %13 = vector.broadcast %cst_13 : f32 to vector<128x4xf32>
    %14 = arith.addf %13, %12 : vector<128x4xf32>
    %15 = arith.divf %13, %14 : vector<128x4xf32>
    %16 = arith.mulf %10, %15 : vector<128x4xf32>
    %17 = vector.shape_cast %16 : vector<128x4xf32> to vector<8x16x4xf32>
    %c1 = arith.constant 1 : index
    %c1_14 = arith.constant 1 : index
    %c0_15 = arith.constant 0 : index
    %18 = vector.load %arg9[%c1, %c1_14, %c0_15] : memref<10x18x4xf32, #tpu.memory_space<vmem>>, vector<8x16x4xf32>
    tpu.vector_store %arg9[%c1, %c1_14, %c0_15], %17 {strides = array<i32>} : memref<10x18x4xf32, #tpu.memory_space<vmem>>, vector<8x16x4xf32>,
    %c0_16 = arith.constant 0 : index
    %c0_17 = arith.constant 0 : index
    %c0_18 = arith.constant 0 : index
    %c0_19 = arith.constant 0 : index
    %c0_20 = arith.constant 0 : index
    %19 = vector.load %arg3[%c0_16, %c0_17, %c0_18, %c0_19, %c0_20] : memref<1x1x2x16x4xf32, #tpu.memory_space<vmem>>, vector<1x1x2x16x4xf32>
    %20 = vector.shape_cast %19 : vector<1x1x2x16x4xf32> to vector<32x4xf32>
    %c0_21 = arith.constant 0 : index
    %c0_22 = arith.constant 0 : index
    %21 = vector.load %arg4[%c0_21, %c0_22] : memref<4x4xf32, #tpu.memory_space<vmem>>, vector<4x4xf32>
    %cst_23 = arith.constant dense<0.000000e+00> : vector<32x4xf32>
    %22 = tpu.matmul %20, %21, %cst_23 {dimension_numbers = #tpu.dot_dimension_numbers<[1], [0], [0], [1], [0, 0, 1, 1], [], []>} : vector<32x4xf32>, vector<4x4xf32>, vector<32x4xf32> -> vector<32x4xf32>
    %c0_24 = arith.constant 0 : index
    %c0_25 = arith.constant 0 : index
    %23 = vector.load %arg5[%c0_24, %c0_25] : memref<1x4xf32, #tpu.memory_space<vmem>>, vector<1x4xf32>
    %24 = vector.broadcast %23 : vector<1x4xf32> to vector<32x4xf32>
    %25 = arith.addf %22, %24 : vector<32x4xf32>
    %26 = arith.negf %25 : vector<32x4xf32>
    %27 = math.exp %26 : vector<32x4xf32>
    %cst_26 = arith.constant 1.000000e+00 : f32
    %28 = vector.broadcast %cst_26 : f32 to vector<32x4xf32>
    %29 = arith.addf %28, %27 : vector<32x4xf32>
    %30 = arith.divf %28, %29 : vector<32x4xf32>
    %31 = arith.mulf %25, %30 : vector<32x4xf32>
    %32 = vector.shape_cast %31 : vector<32x4xf32> to vector<2x16x4xf32>
    %c0_i32 = arith.constant 0 : i32
    %33 = arith.cmpi sgt, %arg1, %c0_i32 : i32
    %cst_27 = arith.constant 1.000000e+00 : f32
    %cst_28 = arith.constant 0.000000e+00 : f32
    %34 = arith.select %33, %cst_27, %cst_28 : f32
    %c1_i32 = arith.constant 1 : i32
    %35 = arith.cmpi slt, %arg1, %c1_i32 : i32
    %cst_29 = arith.constant 1.000000e+00 : f32
    %cst_30 = arith.constant 0.000000e+00 : f32
    %36 = arith.select %35, %cst_29, %cst_30 : f32
    %37 = vector.extract_strided_slice %32 {offsets = [0, 0, 0], sizes = [1, 16, 4], strides = [1, 1, 1]} : vector<2x16x4xf32> to vector<1x16x4xf32>
    %38 = vector.broadcast %34 : f32 to vector<1x16x4xf32>
    %39 = arith.mulf %37, %38 : vector<1x16x4xf32>
    %c0_31 = arith.constant 0 : index
    %c1_32 = arith.constant 1 : index
    %c0_33 = arith.constant 0 : index
    %40 = vector.load %arg9[%c0_31, %c1_32, %c0_33] : memref<10x18x4xf32, #tpu.memory_space<vmem>>, vector<1x16x4xf32>
    tpu.vector_store %arg9[%c0_31, %c1_32, %c0_33], %39 {strides = array<i32>} : memref<10x18x4xf32, #tpu.memory_space<vmem>>, vector<1x16x4xf32>,
    %41 = vector.extract_strided_slice %32 {offsets = [1, 0, 0], sizes = [1, 16, 4], strides = [1, 1, 1]} : vector<2x16x4xf32> to vector<1x16x4xf32>
    %42 = vector.broadcast %36 : f32 to vector<1x16x4xf32>
    %43 = arith.mulf %41, %42 : vector<1x16x4xf32>
    %c9 = arith.constant 9 : index
    %c1_34 = arith.constant 1 : index
    %c0_35 = arith.constant 0 : index
    %44 = vector.load %arg9[%c9, %c1_34, %c0_35] : memref<10x18x4xf32, #tpu.memory_space<vmem>>, vector<1x16x4xf32>
    tpu.vector_store %arg9[%c9, %c1_34, %c0_35], %43 {strides = array<i32>} : memref<10x18x4xf32, #tpu.memory_space<vmem>>, vector<1x16x4xf32>,
    %cst_36 = arith.constant 0.000000e+00 : f32
    %45 = vector.broadcast %cst_36 : f32 to vector<128x4xf32>
    %c0_37 = arith.constant 0 : index
    %c0_38 = arith.constant 0 : index
    %c0_39 = arith.constant 0 : index
    %46 = vector.load %arg9[%c0_37, %c0_38, %c0_39] : memref<10x18x4xf32, #tpu.memory_space<vmem>>, vector<8x16x4xf32>
    %47 = vector.shape_cast %46 : vector<8x16x4xf32> to vector<128x4xf32>
    %c0_40 = arith.constant 0 : index
    %c0_41 = arith.constant 0 : index
    %48 = vector.load %arg6[%c0_40, %c0_41] : memref<36x4xf32, #tpu.memory_space<vmem>>, vector<4x4xf32>
    %cst_42 = arith.constant dense<0.000000e+00> : vector<128x4xf32>
    %49 = tpu.matmul %47, %48, %cst_42 {dimension_numbers = #tpu.dot_dimension_numbers<[1], [0], [0], [1], [0, 0, 1, 1], [], []>} : vector<128x4xf32>, vector<4x4xf32>, vector<128x4xf32> -> vector<128x4xf32>
    %50 = arith.addf %45, %49 : vector<128x4xf32>
    %c0_43 = arith.constant 0 : index
    %c1_44 = arith.constant 1 : index
    %c0_45 = arith.constant 0 : index
    %51 = vector.load %arg9[%c0_43, %c1_44, %c0_45] : memref<10x18x4xf32, #tpu.memory_space<vmem>>, vector<8x16x4xf32>
    %52 = vector.shape_cast %51 : vector<8x16x4xf32> to vector<128x4xf32>
    %c4 = arith.constant 4 : index
    %c0_46 = arith.constant 0 : index
    %53 = vector.load %arg6[%c4, %c0_46] : memref<36x4xf32, #tpu.memory_space<vmem>>, vector<4x4xf32>
    %cst_47 = arith.constant dense<0.000000e+00> : vector<128x4xf32>
    %54 = tpu.matmul %52, %53, %cst_47 {dimension_numbers = #tpu.dot_dimension_numbers<[1], [0], [0], [1], [0, 0, 1, 1], [], []>} : vector<128x4xf32>, vector<4x4xf32>, vector<128x4xf32> -> vector<128x4xf32>
    %55 = arith.addf %50, %54 : vector<128x4xf32>
    %c0_48 = arith.constant 0 : index
    %c2 = arith.constant 2 : index
    %c0_49 = arith.constant 0 : index
    %56 = vector.load %arg9[%c0_48, %c2, %c0_49] : memref<10x18x4xf32, #tpu.memory_space<vmem>>, vector<8x16x4xf32>
    %57 = vector.shape_cast %56 : vector<8x16x4xf32> to vector<128x4xf32>
    %c8 = arith.constant 8 : index
    %c0_50 = arith.constant 0 : index
    %58 = vector.load %arg6[%c8, %c0_50] : memref<36x4xf32, #tpu.memory_space<vmem>>, vector<4x4xf32>
    %cst_51 = arith.constant dense<0.000000e+00> : vector<128x4xf32>
    %59 = tpu.matmul %57, %58, %cst_51 {dimension_numbers = #tpu.dot_dimension_numbers<[1], [0], [0], [1], [0, 0, 1, 1], [], []>} : vector<128x4xf32>, vector<4x4xf32>, vector<128x4xf32> -> vector<128x4xf32>
    %60 = arith.addf %55, %59 : vector<128x4xf32>
    %c1_52 = arith.constant 1 : index
    %c0_53 = arith.constant 0 : index
    %c0_54 = arith.constant 0 : index
    %61 = vector.load %arg9[%c1_52, %c0_53, %c0_54] : memref<10x18x4xf32, #tpu.memory_space<vmem>>, vector<8x16x4xf32>
    %62 = vector.shape_cast %61 : vector<8x16x4xf32> to vector<128x4xf32>
    %c12 = arith.constant 12 : index
    %c0_55 = arith.constant 0 : index
    %63 = vector.load %arg6[%c12, %c0_55] : memref<36x4xf32, #tpu.memory_space<vmem>>, vector<4x4xf32>
    %cst_56 = arith.constant dense<0.000000e+00> : vector<128x4xf32>
    %64 = tpu.matmul %62, %63, %cst_56 {dimension_numbers = #tpu.dot_dimension_numbers<[1], [0], [0], [1], [0, 0, 1, 1], [], []>} : vector<128x4xf32>, vector<4x4xf32>, vector<128x4xf32> -> vector<128x4xf32>
    %65 = arith.addf %60, %64 : vector<128x4xf32>
    %c1_57 = arith.constant 1 : index
    %c1_58 = arith.constant 1 : index
    %c0_59 = arith.constant 0 : index
    %66 = vector.load %arg9[%c1_57, %c1_58, %c0_59] : memref<10x18x4xf32, #tpu.memory_space<vmem>>, vector<8x16x4xf32>
    %67 = vector.shape_cast %66 : vector<8x16x4xf32> to vector<128x4xf32>
    %c16 = arith.constant 16 : index
    %c0_60 = arith.constant 0 : index
    %68 = vector.load %arg6[%c16, %c0_60] : memref<36x4xf32, #tpu.memory_space<vmem>>, vector<4x4xf32>
    %cst_61 = arith.constant dense<0.000000e+00> : vector<128x4xf32>
    %69 = tpu.matmul %67, %68, %cst_61 {dimension_numbers = #tpu.dot_dimension_numbers<[1], [0], [0], [1], [0, 0, 1, 1], [], []>} : vector<128x4xf32>, vector<4x4xf32>, vector<128x4xf32> -> vector<128x4xf32>
    %70 = arith.addf %65, %69 : vector<128x4xf32>
    %c1_62 = arith.constant 1 : index
    %c2_63 = arith.constant 2 : index
    %c0_64 = arith.constant 0 : index
    %71 = vector.load %arg9[%c1_62, %c2_63, %c0_64] : memref<10x18x4xf32, #tpu.memory_space<vmem>>, vector<8x16x4xf32>
    %72 = vector.shape_cast %71 : vector<8x16x4xf32> to vector<128x4xf32>
    %c20 = arith.constant 20 : index
    %c0_65 = arith.constant 0 : index
    %73 = vector.load %arg6[%c20, %c0_65] : memref<36x4xf32, #tpu.memory_space<vmem>>, vector<4x4xf32>
    %cst_66 = arith.constant dense<0.000000e+00> : vector<128x4xf32>
    %74 = tpu.matmul %72, %73, %cst_66 {dimension_numbers = #tpu.dot_dimension_numbers<[1], [0], [0], [1], [0, 0, 1, 1], [], []>} : vector<128x4xf32>, vector<4x4xf32>, vector<128x4xf32> -> vector<128x4xf32>
    %75 = arith.addf %70, %74 : vector<128x4xf32>
    %c2_67 = arith.constant 2 : index
    %c0_68 = arith.constant 0 : index
    %c0_69 = arith.constant 0 : index
    %76 = vector.load %arg9[%c2_67, %c0_68, %c0_69] : memref<10x18x4xf32, #tpu.memory_space<vmem>>, vector<8x16x4xf32>
    %77 = vector.shape_cast %76 : vector<8x16x4xf32> to vector<128x4xf32>
    %c24 = arith.constant 24 : index
    %c0_70 = arith.constant 0 : index
    %78 = vector.load %arg6[%c24, %c0_70] : memref<36x4xf32, #tpu.memory_space<vmem>>, vector<4x4xf32>
    %cst_71 = arith.constant dense<0.000000e+00> : vector<128x4xf32>
    %79 = tpu.matmul %77, %78, %cst_71 {dimension_numbers = #tpu.dot_dimension_numbers<[1], [0], [0], [1], [0, 0, 1, 1], [], []>} : vector<128x4xf32>, vector<4x4xf32>, vector<128x4xf32> -> vector<128x4xf32>
    %80 = arith.addf %75, %79 : vector<128x4xf32>
    %c2_72 = arith.constant 2 : index
    %c1_73 = arith.constant 1 : index
    %c0_74 = arith.constant 0 : index
    %81 = vector.load %arg9[%c2_72, %c1_73, %c0_74] : memref<10x18x4xf32, #tpu.memory_space<vmem>>, vector<8x16x4xf32>
    %82 = vector.shape_cast %81 : vector<8x16x4xf32> to vector<128x4xf32>
    %c28 = arith.constant 28 : index
    %c0_75 = arith.constant 0 : index
    %83 = vector.load %arg6[%c28, %c0_75] : memref<36x4xf32, #tpu.memory_space<vmem>>, vector<4x4xf32>
    %cst_76 = arith.constant dense<0.000000e+00> : vector<128x4xf32>
    %84 = tpu.matmul %82, %83, %cst_76 {dimension_numbers = #tpu.dot_dimension_numbers<[1], [0], [0], [1], [0, 0, 1, 1], [], []>} : vector<128x4xf32>, vector<4x4xf32>, vector<128x4xf32> -> vector<128x4xf32>
    %85 = arith.addf %80, %84 : vector<128x4xf32>
    %c2_77 = arith.constant 2 : index
    %c2_78 = arith.constant 2 : index
    %c0_79 = arith.constant 0 : index
    %86 = vector.load %arg9[%c2_77, %c2_78, %c0_79] : memref<10x18x4xf32, #tpu.memory_space<vmem>>, vector<8x16x4xf32>
    %87 = vector.shape_cast %86 : vector<8x16x4xf32> to vector<128x4xf32>
    %c32 = arith.constant 32 : index
    %c0_80 = arith.constant 0 : index
    %88 = vector.load %arg6[%c32, %c0_80] : memref<36x4xf32, #tpu.memory_space<vmem>>, vector<4x4xf32>
    %cst_81 = arith.constant dense<0.000000e+00> : vector<128x4xf32>
    %89 = tpu.matmul %87, %88, %cst_81 {dimension_numbers = #tpu.dot_dimension_numbers<[1], [0], [0], [1], [0, 0, 1, 1], [], []>} : vector<128x4xf32>, vector<4x4xf32>, vector<128x4xf32> -> vector<128x4xf32>
    %90 = arith.addf %85, %89 : vector<128x4xf32>
    %91 = vector.shape_cast %90 : vector<128x4xf32> to vector<8x16x4xf32>
    %c0_82 = arith.constant 0 : index
    %c0_83 = arith.constant 0 : index
    %92 = vector.load %arg7[%c0_82, %c0_83] : memref<1x4xf32, #tpu.memory_space<vmem>>, vector<1x4xf32>
    %93 = vector.shape_cast %92 : vector<1x4xf32> to vector<1x1x4xf32>
    %94 = vector.broadcast %93 : vector<1x1x4xf32> to vector<8x16x4xf32>
    %95 = arith.addf %91, %94 : vector<8x16x4xf32>
    %96 = arith.negf %95 : vector<8x16x4xf32>
    %97 = math.exp %96 : vector<8x16x4xf32>
    %cst_84 = arith.constant 1.000000e+00 : f32
    %98 = vector.broadcast %cst_84 : f32 to vector<8x16x4xf32>
    %99 = arith.addf %98, %97 : vector<8x16x4xf32>
    %100 = arith.divf %98, %99 : vector<8x16x4xf32>
    %101 = arith.mulf %95, %100 : vector<8x16x4xf32>
    %102 = arith.addf %101, %4 : vector<8x16x4xf32>
    %103 = vector.shape_cast %102 : vector<8x16x4xf32> to vector<1x8x16x4xf32>
    %c0_85 = arith.constant 0 : index
    %c0_86 = arith.constant 0 : index
    %c0_87 = arith.constant 0 : index
    %c0_88 = arith.constant 0 : index
    %104 = vector.load %arg8[%c0_85, %c0_86, %c0_87, %c0_88] : memref<1x8x16x4xf32, #tpu.memory_space<vmem>>, vector<1x8x16x4xf32>
    tpu.vector_store %arg8[%c0_85, %c0_86, %c0_87, %c0_88], %103 {strides = array<i32>} : memref<1x8x16x4xf32, #tpu.memory_space<vmem>>, vector<1x8x16x4xf32>,
    return
  }
  func.func @transform_0(%arg0: i32, %arg1: i32) -> (i32, i32, i32, i32) {
    %c0_i32 = arith.constant 0 : i32
    %c0_i32_0 = arith.constant 0 : i32
    %c0_i32_1 = arith.constant 0 : i32
    return %arg0, %arg1, %c0_i32, %c0_i32_0 : i32, i32, i32, i32
  }
  func.func @transform_1(%arg0: i32, %arg1: i32) -> (i32, i32, i32, i32, i32) {
    %c0_i32 = arith.constant 0 : i32
    %c0_i32_0 = arith.constant 0 : i32
    %c0_i32_1 = arith.constant 0 : i32
    %c0_i32_2 = arith.constant 0 : i32
    return %arg0, %arg1, %c0_i32, %c0_i32_0, %c0_i32_1 : i32, i32, i32, i32, i32
  }
  func.func @transform_2(%arg0: i32, %arg1: i32) -> (i32, i32) {
    %c0_i32 = arith.constant 0 : i32
    %c0_i32_0 = arith.constant 0 : i32
    %c0_i32_1 = arith.constant 0 : i32
    return %c0_i32, %c0_i32_0 : i32, i32
  }
  func.func @transform_3(%arg0: i32, %arg1: i32) -> (i32, i32) {
    %c0_i32 = arith.constant 0 : i32
    %c0_i32_0 = arith.constant 0 : i32
    %c0_i32_1 = arith.constant 0 : i32
    return %c0_i32, %c0_i32_0 : i32, i32
  }
  func.func @transform_4(%arg0: i32, %arg1: i32) -> (i32, i32) {
    %c0_i32 = arith.constant 0 : i32
    %c0_i32_0 = arith.constant 0 : i32
    %c0_i32_1 = arith.constant 0 : i32
    return %c0_i32, %c0_i32_0 : i32, i32
  }
  func.func @transform_5(%arg0: i32, %arg1: i32) -> (i32, i32) {
    %c0_i32 = arith.constant 0 : i32
    %c0_i32_0 = arith.constant 0 : i32
    %c0_i32_1 = arith.constant 0 : i32
    return %c0_i32, %c0_i32_0 : i32, i32
  }
  func.func @transform_6(%arg0: i32, %arg1: i32) -> (i32, i32, i32, i32) {
    %c0_i32 = arith.constant 0 : i32
    %c0_i32_0 = arith.constant 0 : i32
    %c0_i32_1 = arith.constant 0 : i32
    return %arg0, %arg1, %c0_i32, %c0_i32_0 : i32, i32, i32, i32
  }
}

module attributes {stable_mosaic.version = 11 : i64} {
  func.func @_concat_pw_kernel(%arg0: i32, %arg1: memref<128x4xf32, #tpu.memory_space<vmem>>, %arg2: memref<128x4xf32, #tpu.memory_space<vmem>>, %arg3: memref<4x8xf32, #tpu.memory_space<vmem>>, %arg4: memref<4x8xf32, #tpu.memory_space<vmem>>, %arg5: memref<1x8xf32, #tpu.memory_space<vmem>>, %arg6: memref<128x8xf32, #tpu.memory_space<vmem>>) attributes {dimension_semantics = [#tpu.dimension_semantics<parallel>], iteration_bounds = array<i64: 4>, scalar_prefetch = 0 : i64, scratch_operands = 0 : i64, tpu.core_type = #tpu.core_type<tc>, window_params = [{transform_indices = @transform_0, window_bounds = array<i64: 128, 4>}, {transform_indices = @transform_1, window_bounds = array<i64: 128, 4>}, {pipeline_mode = #tpu.pipeline_mode<synchronous>, transform_indices = @transform_2, window_bounds = array<i64: 4, 8>}, {pipeline_mode = #tpu.pipeline_mode<synchronous>, transform_indices = @transform_3, window_bounds = array<i64: 4, 8>}, {pipeline_mode = #tpu.pipeline_mode<synchronous>, transform_indices = @transform_4, window_bounds = array<i64: 1, 8>}, {transform_indices = @transform_5, window_bounds = array<i64: 128, 8>}]} {
    %c0 = arith.constant 0 : index
    %c0_0 = arith.constant 0 : index
    %0 = vector.load %arg1[%c0, %c0_0] : memref<128x4xf32, #tpu.memory_space<vmem>>, vector<128x4xf32>
    %c0_1 = arith.constant 0 : index
    %c0_2 = arith.constant 0 : index
    %1 = vector.load %arg3[%c0_1, %c0_2] : memref<4x8xf32, #tpu.memory_space<vmem>>, vector<4x8xf32>
    %cst = arith.constant dense<0.000000e+00> : vector<128x8xf32>
    %2 = tpu.matmul %0, %1, %cst {dimension_numbers = #tpu.dot_dimension_numbers<[1], [0], [0], [1], [0, 0, 1, 1], [], []>} : vector<128x4xf32>, vector<4x8xf32>, vector<128x8xf32> -> vector<128x8xf32>
    %c0_3 = arith.constant 0 : index
    %c0_4 = arith.constant 0 : index
    %3 = vector.load %arg2[%c0_3, %c0_4] : memref<128x4xf32, #tpu.memory_space<vmem>>, vector<128x4xf32>
    %c0_5 = arith.constant 0 : index
    %c0_6 = arith.constant 0 : index
    %4 = vector.load %arg4[%c0_5, %c0_6] : memref<4x8xf32, #tpu.memory_space<vmem>>, vector<4x8xf32>
    %cst_7 = arith.constant dense<0.000000e+00> : vector<128x8xf32>
    %5 = tpu.matmul %3, %4, %cst_7 {dimension_numbers = #tpu.dot_dimension_numbers<[1], [0], [0], [1], [0, 0, 1, 1], [], []>} : vector<128x4xf32>, vector<4x8xf32>, vector<128x8xf32> -> vector<128x8xf32>
    %6 = arith.addf %2, %5 : vector<128x8xf32>
    %c0_8 = arith.constant 0 : index
    %c0_9 = arith.constant 0 : index
    %7 = vector.load %arg5[%c0_8, %c0_9] : memref<1x8xf32, #tpu.memory_space<vmem>>, vector<1x8xf32>
    %8 = vector.broadcast %7 : vector<1x8xf32> to vector<128x8xf32>
    %9 = arith.addf %6, %8 : vector<128x8xf32>
    %10 = arith.negf %9 : vector<128x8xf32>
    %11 = math.exp %10 : vector<128x8xf32>
    %cst_10 = arith.constant 1.000000e+00 : f32
    %12 = vector.broadcast %cst_10 : f32 to vector<128x8xf32>
    %13 = arith.addf %12, %11 : vector<128x8xf32>
    %14 = arith.divf %12, %13 : vector<128x8xf32>
    %15 = arith.mulf %9, %14 : vector<128x8xf32>
    %c0_11 = arith.constant 0 : index
    %c0_12 = arith.constant 0 : index
    %16 = vector.load %arg6[%c0_11, %c0_12] : memref<128x8xf32, #tpu.memory_space<vmem>>, vector<128x8xf32>
    tpu.vector_store %arg6[%c0_11, %c0_12], %15 {strides = array<i32>} : memref<128x8xf32, #tpu.memory_space<vmem>>, vector<128x8xf32>,
    return
  }
  func.func @transform_0(%arg0: i32) -> (i32, i32) {
    %c0_i32 = arith.constant 0 : i32
    %c0_i32_0 = arith.constant 0 : i32
    return %arg0, %c0_i32 : i32, i32
  }
  func.func @transform_1(%arg0: i32) -> (i32, i32) {
    %c0_i32 = arith.constant 0 : i32
    %c0_i32_0 = arith.constant 0 : i32
    return %arg0, %c0_i32 : i32, i32
  }
  func.func @transform_2(%arg0: i32) -> (i32, i32) {
    %c0_i32 = arith.constant 0 : i32
    %c0_i32_0 = arith.constant 0 : i32
    %c0_i32_1 = arith.constant 0 : i32
    return %c0_i32, %c0_i32_0 : i32, i32
  }
  func.func @transform_3(%arg0: i32) -> (i32, i32) {
    %c0_i32 = arith.constant 0 : i32
    %c0_i32_0 = arith.constant 0 : i32
    %c0_i32_1 = arith.constant 0 : i32
    return %c0_i32, %c0_i32_0 : i32, i32
  }
  func.func @transform_4(%arg0: i32) -> (i32, i32) {
    %c0_i32 = arith.constant 0 : i32
    %c0_i32_0 = arith.constant 0 : i32
    %c0_i32_1 = arith.constant 0 : i32
    return %c0_i32, %c0_i32_0 : i32, i32
  }
  func.func @transform_5(%arg0: i32) -> (i32, i32) {
    %c0_i32 = arith.constant 0 : i32
    %c0_i32_0 = arith.constant 0 : i32
    return %arg0, %c0_i32 : i32, i32
  }
}

</mosaic_0001>

<llo_original>
// kernel: c3_forward.3
$region0: #{c3_forward.3}
  #allocation0 [shape = 'u32[]', space=smem, size = 0x4, offset = 0x4, fixed_abs, tag = 'smem constant byte address 0x4 - core index']
  #allocation1 [shape = 'u32[144,128]{1,0:T(1,128)}', space=vmem, size = 0x12000, scoped, tag = 'internal scratch']
  %s0 = inlined_call_operand.vmem [shape: f32[512,4], index: 0, kind: input, shape index: {}]
  %s1 = inlined_call_operand.vmem [shape: f32[4,4], index: 1, kind: input, shape index: {}]
  %s2 = inlined_call_operand.vmem [shape: f32[1,4], index: 2, kind: input, shape index: {}]
  %s3 = inlined_call_operand.vmem [shape: f32[4,4], index: 3, kind: input, shape index: {}]
  %s4 = inlined_call_operand.vmem [shape: f32[1,4], index: 4, kind: input, shape index: {}]
  %s5 = inlined_call_operand.vmem [shape: f32[512,4], index: 5, kind: output, shape index: {0}]
  %s6 = inlined_call_operand.vmem [shape: f32[512,4], index: 6, kind: output, shape index: {1}]
  %7 = xla_tuple %s5, %s6
  %s8 = sld [smem:[#allocation0]]
  $region61: #{c3_forward.3} parent=0
    _
  %s10 = ssub.s32 1, %s8
  %s11 = scalar_select 0, %s10, %s8
  loop: start=0, step=1, limit=6
  $region2: #{c3_forward.3} parent=0 // loop_pre_header
    _
  $region3: #{c3_forward.3} parent=0 // loop_header
    %s13 = sphi 0, %s17
    %p14 = scmp.ge.s32.totalorder %s13, 6
    %s23 = sphi 0, %s25
    %s26 = sphi 0, %s23
    %s27 = sphi 0, %s26
    %s43 = sphi 0, %s27
    %s47 = sphi 0, %s47
    %s49 = sphi 0, %s47
    %s50 = sphi 0, %s49
    %s64 = sphi 0, %s50
    %s68 = sphi 0, %s68
    %s70 = sphi 0, %s68
    %s71 = sphi 0, %s70
    %s85 = sphi 0, %s71
    %s89 = sphi 0, %s89
    %s91 = sphi 0, %s89
    %s92 = sphi 0, %s91
    %s106 = sphi 0, %s92
    %s110 = sphi 0, %s110
    %s112 = sphi 0, %s110
    %s113 = sphi 0, %s112
    %s127 = sphi 0, %s113
    %s133 = sphi 0, %s135
    %s136 = sphi 0, %s133
    %s137 = sphi 0, %s136
    %s153 = sphi 0, %s137
    %s159 = sphi 0, %s161
    %s162 = sphi 0, %s159
    %s163 = sphi 0, %s162
    %s179 = sphi 0, %s163
  $region4: #{c3_forward.3} parent=0 // loop_header_branch
    %16 = sbr.rel (%p14) target = $region8
  $region5: #{c3_forward.3} parent=0 // loop_body
    %s18 = ssub.s32 %s13, 1
    %s19 = ssub.s32 %s13, 2
    %s20 = sadd.s32 %s13, 1
    %s21 = ssub.s32 %s13, %s20
    %p22 = scmp.eq.s32.totalorder %s21, 0
    %s24 = sadd.s32 %s23, 1
    %s25 = scalar_select %p22, %s23, %s24
    %p28 = pneg %p22
    %p29 = scmp.eq.s32.totalorder %s13, 3
    %p30 = por %p28, %p29
    %p31 = scmp.ne.s32.totalorder %s23, %s26
    %p32 = scmp.eq.s32.totalorder %s13, 0
    %p33 = por %p31, %p32
    %p34 = scmp.ne.s32.totalorder %s23, %s26
    %p35 = scmp.eq.s32.totalorder %s18, 3
    %p36 = por %p34, %p35
    %p37 = scmp.ne.s32.totalorder %s26, %s27
    %p38 = scmp.eq.s32.totalorder %s18, 0
    %p39 = por %p37, %p38
    %p40 = scmp.ne.s32.totalorder %s26, %s27
    %p41 = scmp.eq.s32.totalorder %s19, 3
    %p42 = por %p40, %p41
    %p44 = scmp.ne.s32.totalorder %s27, %s43
    %p45 = scmp.eq.s32.totalorder %s19, 0
    %p46 = por %p44, %p45
    %s48 = sadd.s32 %s47, 1
    %p51 = scmp.eq.s32.totalorder %s13, 3
    %p52 = scmp.ne.s32.totalorder %s47, %s49
    %p53 = scmp.eq.s32.totalorder %s13, 0
    %p54 = por %p52, %p53
    %p55 = scmp.ne.s32.totalorder %s47, %s49
    %p56 = scmp.eq.s32.totalorder %s18, 3
    %p57 = por %p55, %p56
    %p58 = scmp.ne.s32.totalorder %s49, %s50
    %p59 = scmp.eq.s32.totalorder %s18, 0
    %p60 = por %p58, %p59
    %p61 = scmp.ne.s32.totalorder %s49, %s50
    %p62 = scmp.eq.s32.totalorder %s19, 3
    %p63 = por %p61, %p62
    %p65 = scmp.ne.s32.totalorder %s50, %s64
    %p66 = scmp.eq.s32.totalorder %s19, 0
    %p67 = por %p65, %p66
    %s69 = sadd.s32 %s68, 1
    %p72 = scmp.eq.s32.totalorder %s13, 3
    %p73 = scmp.ne.s32.totalorder %s68, %s70
    %p74 = scmp.eq.s32.totalorder %s13, 0
    %p75 = por %p73, %p74
    %p76 = scmp.ne.s32.totalorder %s68, %s70
    %p77 = scmp.eq.s32.totalorder %s18, 3
    %p78 = por %p76, %p77
    %p79 = scmp.ne.s32.totalorder %s70, %s71
    %p80 = scmp.eq.s32.totalorder %s18, 0
    %p81 = por %p79, %p80
    %p82 = scmp.ne.s32.totalorder %s70, %s71
    %p83 = scmp.eq.s32.totalorder %s19, 3
    %p84 = por %p82, %p83
    %p86 = scmp.ne.s32.totalorder %s71, %s85
    %p87 = scmp.eq.s32.totalorder %s19, 0
    %p88 = por %p86, %p87
    %s90 = sadd.s32 %s89, 1
    %p93 = scmp.eq.s32.totalorder %s13, 3
    %p94 = scmp.ne.s32.totalorder %s89, %s91
    %p95 = scmp.eq.s32.totalorder %s13, 0
    %p96 = por %p94, %p95
    %p97 = scmp.ne.s32.totalorder %s89, %s91
    %p98 = scmp.eq.s32.totalorder %s18, 3
    %p99 = por %p97, %p98
    %p100 = scmp.ne.s32.totalorder %s91, %s92
    %p101 = scmp.eq.s32.totalorder %s18, 0
    %p102 = por %p100, %p101
    %p103 = scmp.ne.s32.totalorder %s91, %s92
    %p104 = scmp.eq.s32.totalorder %s19, 3
    %p105 = por %p103, %p104
    %p107 = scmp.ne.s32.totalorder %s92, %s106
    %p108 = scmp.eq.s32.totalorder %s19, 0
    %p109 = por %p107, %p108
    %s111 = sadd.s32 %s110, 1
    %p114 = scmp.eq.s32.totalorder %s13, 3
    %p115 = scmp.ne.s32.totalorder %s110, %s112
    %p116 = scmp.eq.s32.totalorder %s13, 0
    %p117 = por %p115, %p116
    %p118 = scmp.ne.s32.totalorder %s110, %s112
    %p119 = scmp.eq.s32.totalorder %s18, 3
    %p120 = por %p118, %p119
    %p121 = scmp.ne.s32.totalorder %s112, %s113
    %p122 = scmp.eq.s32.totalorder %s18, 0
    %p123 = por %p121, %p122
    %p124 = scmp.ne.s32.totalorder %s112, %s113
    %p125 = scmp.eq.s32.totalorder %s19, 3
    %p126 = por %p124, %p125
    %p128 = scmp.ne.s32.totalorder %s113, %s127
    %p129 = scmp.eq.s32.totalorder %s19, 0
    %p130 = por %p128, %p129
    %s131 = ssub.s32 %s13, %s20
    %p132 = scmp.eq.s32.totalorder %s131, 0
    %s134 = sadd.s32 %s133, 1
    %s135 = scalar_select %p132, %s133, %s134
    %p138 = pneg %p132
    %p139 = scmp.eq.s32.totalorder %s13, 3
    %p140 = por %p138, %p139
    %p141 = scmp.ne.s32.totalorder %s133, %s136
    %p142 = scmp.eq.s32.totalorder %s13, 0
    %p143 = por %p141, %p142
    %p144 = scmp.ne.s32.totalorder %s133, %s136
    %p145 = scmp.eq.s32.totalorder %s18, 3
    %p146 = por %p144, %p145
    %p147 = scmp.ne.s32.totalorder %s136, %s137
    %p148 = scmp.eq.s32.totalorder %s18, 0
    %p149 = por %p147, %p148
    %p150 = scmp.ne.s32.totalorder %s136, %s137
    %p151 = scmp.eq.s32.totalorder %s19, 3
    %p152 = por %p150, %p151
    %p154 = scmp.ne.s32.totalorder %s137, %s153
    %p155 = scmp.eq.s32.totalorder %s19, 0
    %p156 = por %p154, %p155
    %s157 = ssub.s32 %s13, %s20
    %p158 = scmp.eq.s32.totalorder %s157, 0
    %s160 = sadd.s32 %s159, 1
    %s161 = scalar_select %p158, %s159, %s160
    %p164 = pneg %p158
    %p165 = scmp.eq.s32.totalorder %s13, 3
    %p166 = por %p164, %p165
    %p167 = scmp.ne.s32.totalorder %s159, %s162
    %p168 = scmp.eq.s32.totalorder %s13, 0
    %p169 = por %p167, %p168
    %p170 = scmp.ne.s32.totalorder %s159, %s162
    %p171 = scmp.eq.s32.totalorder %s18, 3
    %p172 = por %p170, %p171
    %p173 = scmp.ne.s32.totalorder %s162, %s163
    %p174 = scmp.eq.s32.totalorder %s18, 0
    %p175 = por %p173, %p174
    %p176 = scmp.ne.s32.totalorder %s162, %s163
    %p177 = scmp.eq.s32.totalorder %s19, 3
    %p178 = por %p176, %p177
    %p180 = scmp.ne.s32.totalorder %s163, %s179
    %p181 = scmp.eq.s32.totalorder %s19, 0
    %p182 = por %p180, %p181
    %p183 = scmp.le.s32.totalorder 1, %s13
    %p184 = scmp.lt.s32.totalorder %s13, 5
    %p185 = pnand %p183, %p184
    %p186 = pneg %p185
    // Predicated region
    $region9: #{c3_forward.3} parent=5 // pred_check
      _
    $region10: #{c3_forward.3} parent=5 // pred_check_branch
      %188 = sbr.rel (%p185) target = $region12
    $region11: #{c3_forward.3} parent=5 // pred_region
      %s189 = ssub.s32 %s13, 1
      // Predicated region
      $region13: #{c3_forward.3} parent=11 // pred_check
        %p190 = pneg %p60
      $region14: #{c3_forward.3} parent=11 // pred_check_branch
        %192 = sbr.rel (%p190) target = $region16
      $region15: #{c3_forward.3} parent=11 // pred_region
        _
      $region16: #{c3_forward.3} parent=11 // pred_fallthru
        _
      // Predicated region
      $region17: #{c3_forward.3} parent=11 // pred_check
        %p193 = pneg %p81
      $region18: #{c3_forward.3} parent=11 // pred_check_branch
        %195 = sbr.rel (%p193) target = $region20
      $region19: #{c3_forward.3} parent=11 // pred_region
        _
      $region20: #{c3_forward.3} parent=11 // pred_fallthru
        _
      // Predicated region
      $region21: #{c3_forward.3} parent=11 // pred_check
        %p196 = pneg %p102
      $region22: #{c3_forward.3} parent=11 // pred_check_branch
        %198 = sbr.rel (%p196) target = $region24
      $region23: #{c3_forward.3} parent=11 // pred_region
        _
      $region24: #{c3_forward.3} parent=11 // pred_fallthru
        _
      // Predicated region
      $region25: #{c3_forward.3} parent=11 // pred_check
        %p199 = pneg %p123
      $region26: #{c3_forward.3} parent=11 // pred_check_branch
        %201 = sbr.rel (%p199) target = $region28
      $region27: #{c3_forward.3} parent=11 // pred_region
        _
      $region28: #{c3_forward.3} parent=11 // pred_fallthru
        _
    $region12: #{c3_forward.3} parent=5 // pred_fallthru
      _
    %p202 = scmp.lt.s32.totalorder %s13, 4
    // Predicated region
    $region29: #{c3_forward.3} parent=5 // pred_check
      %p203 = pneg %p202
    $region30: #{c3_forward.3} parent=5 // pred_check_branch
      %205 = sbr.rel (%p203) target = $region32
    $region31: #{c3_forward.3} parent=5 // pred_region
      // Predicated region
      $region33: #{c3_forward.3} parent=31 // pred_check
        %p206 = pneg %p33
      $region34: #{c3_forward.3} parent=31 // pred_check_branch
        %208 = sbr.rel (%p206) target = $region36
      $region35: #{c3_forward.3} parent=31 // pred_region
        %s209 = smul.u32 16, %s13
        %p210 = scmp.lt.s32.totalorder %s209, 63
        %s211 = scalar_select %p210, %s209, 63
        %s212 = smul.addr %s211, 8
        %s213 = scalar_lea.vmem %s0, %s212
        %s214 = smul.u32 16, %s13
      $region36: #{c3_forward.3} parent=31 // pred_fallthru
        _
    $region32: #{c3_forward.3} parent=5 // pred_fallthru
      _
    %p215 = scmp.le.s32.totalorder 1, %s13
    %p216 = scmp.lt.s32.totalorder %s13, 5
    %p217 = pnand %p215, %p216
    %p218 = pneg %p217
    // Predicated region
    $region37: #{c3_forward.3} parent=5 // pred_check
      _
    $region38: #{c3_forward.3} parent=5 // pred_check_branch
      %220 = sbr.rel (%p217) target = $region40
    $region39: #{c3_forward.3} parent=5 // pred_region
      %s221 = ssub.s32 %s13, 1
      %s222 = smul.u32 16, %s18
      %p223 = scmp.lt.s32.totalorder %s222, 63
      %s224 = scalar_select %p223, %s222, 63
      %s225 = smul.addr %s224, 8
      %s226 = scalar_lea.vmem %s0, %s225
      %p227 = pneg %p39
      %p228 = pneg %p36
      %p229 = pneg %p60
      %p230 = pneg %p57
      %p231 = pneg %p81
      %p232 = pneg %p78
      %p233 = pneg %p102
      %p234 = pneg %p99
      %p235 = pneg %p123
      %p236 = pneg %p120
      %p237 = pneg %p149
      %p238 = pneg %p146
      %s239 = smul.u32 16, %s18
      %p240 = scmp.lt.s32.totalorder %s239, 63
      %s241 = scalar_select %p240, %s239, 63
      %s242 = smul.addr %s241, 8
      %s243 = scalar_lea.vmem %s5, %s242
      %p244 = pneg %p175
      %p245 = pneg %p172
      %s246 = smul.u32 16, %s18
      %p247 = scmp.lt.s32.totalorder %s246, 63
      %s248 = scalar_select %p247, %s246, 63
      %s249 = smul.addr %s248, 8
      %s250 = scalar_lea.vmem %s6, %s249
      %s251 = smul.u32 16, %s18
      %p252 = scmp.lt.s32.totalorder %s251, 63
      %s253 = scalar_select %p252, %s251, 63
      %s254 = smul.addr %s253, 8
      %s255 = scalar_lea.vmem %s0, %s254
      %s256 = smul.u32 16, %s18
      %s257 = smul.u32 16, %s18
      %p258 = scmp.lt.s32.totalorder %s257, 63
      %s259 = scalar_select %p258, %s257, 63
      %s260 = smul.addr %s259, 8
      %s261 = scalar_lea.vmem %s5, %s260
      %s262 = smul.u32 16, %s18
      %s263 = smul.u32 16, %s18
      %p264 = scmp.lt.s32.totalorder %s263, 63
      %s265 = scalar_select %p264, %s263, 63
      %s266 = smul.addr %s265, 8
      %s267 = scalar_lea.vmem %s6, %s266
      %s268 = smul.u32 16, %s18
      %v269 = vld [vmem:[%s255] sm:$0xff]
      %v270 = vld [vmem:[%s255 + $0x8] sm:$0xff]
      %v271 = vld [vmem:[%s255 + $0x10] sm:$0xff]
      %v272 = vld [vmem:[%s255 + $0x18] sm:$0xff]
      %v273 = vld [vmem:[%s255 + $0x20] sm:$0xff]
      %v274 = vld [vmem:[%s255 + $0x28] sm:$0xff]
      %v275 = vld [vmem:[%s255 + $0x30] sm:$0xff]
      %v276 = vld [vmem:[%s255 + $0x38] sm:$0xff]
      %v277 = vld [vmem:[%s255 + $0x40] sm:$0xff]
      %v278 = vld [vmem:[%s255 + $0x48] sm:$0xff]
      %v279 = vld [vmem:[%s255 + $0x50] sm:$0xff]
      %v280 = vld [vmem:[%s255 + $0x58] sm:$0xff]
      %v281 = vld [vmem:[%s255 + $0x60] sm:$0xff]
      %v282 = vld [vmem:[%s255 + $0x68] sm:$0xff]
      %v283 = vld [vmem:[%s255 + $0x70] sm:$0xff]
      %v284 = vld [vmem:[%s255 + $0x78] sm:$0xff]
      %v285 = vld [vmem:[%s1] sm:$0xf]
      %v286 = vld [vmem:[%s2] sm:$0x1]
      %v288 = vlaneseq
      %v289 = vshrl.u32 %v288, 7
      %v290 = vsub.s32 0, %v289
      %v291 = vrot.slane %v286, %v290
      %vm293 = vcmask 31744
      %v295 = vsel %vm293, %v269, 0
      %v298 = vsel %vm293, %v270, 0
      %v301 = vsel %vm293, %v271, 0
      %v304 = vsel %vm293, %v272, 0
      %v307 = vsel %vm293, %v273, 0
      %v310 = vsel %vm293, %v274, 0
      %v313 = vsel %vm293, %v275, 0
      %v316 = vsel %vm293, %v276, 0
      %v319 = vsel %vm293, %v277, 0
      %v322 = vsel %vm293, %v278, 0
      %v325 = vsel %vm293, %v279, 0
      %v328 = vsel %vm293, %v280, 0
      %v331 = vsel %vm293, %v281, 0
      %v334 = vsel %vm293, %v282, 0
      %v337 = vsel %vm293, %v283, 0
      %v340 = vsel %vm293, %v284, 0
      %vm342 = vcmask 1043456
      %v344 = vsel %vm342, %v285, 0
      %346 = vmatprep.subr.mxu0 0.0
      %347 = vmatpush1.msra.mxu0 %v344
      %348 = vmatprep.subr.mxu0 0.0
      %349 = vmatpush1.msra.mxu0 0.0
      %350 = vmatprep.subr.mxu0 0.0
      %351 = vmatpush1.msra.mxu0 0.0
      %352 = vmatprep.subr.mxu0 0.0
      %353 = vmatpush1.msra.mxu0 0.0
      %354 = vmatprep.subr.mxu0 0.0
      %355 = vmatpush1.msra.mxu0 0.0
      %356 = vmatprep.subr.mxu0 0.0
      %357 = vmatpush1.msra.mxu0 0.0
      %358 = vmatprep.subr.mxu0 0.0
      %359 = vmatpush1.msra.mxu0 0.0
      %360 = vmatprep.subr.mxu0 0.0
      %361 = vmatpush1.msra.mxu0 0.0
      %362 = vmatprep.subr.mxu0 0.0
      %363 = vmatpush1.msra.mxu0 0.0
      %364 = vmatprep.subr.mxu0 0.0
      %365 = vmatpush1.msra.mxu0 0.0
      %366 = vmatprep.subr.mxu0 0.0
      %367 = vmatpush1.msra.mxu0 0.0
      %368 = vmatprep.subr.mxu0 0.0
      %369 = vmatpush1.msra.mxu0 0.0
      %370 = vmatprep.subr.mxu0 0.0
      %371 = vmatpush1.msra.mxu0 0.0
      %372 = vmatprep.subr.mxu0 0.0
      %373 = vmatpush1.msra.mxu0 0.0
      %374 = vmatprep.subr.mxu0 0.0
      %375 = vmatpush1.msra.mxu0 0.0
      %376 = vmatprep.subr.mxu0 0.0
      %377 = vmatpush1.msra.mxu0 0.0
      %378 = vmatprep.subr.mxu0 0.0
      %379 = vmatpush1.msra.mxu0 0.0
      %380 = vmatprep.subr.mxu0 0.0
      %381 = vmatpush1.msra.mxu0 0.0
      %382 = vmatprep.subr.mxu0 0.0
      %383 = vmatpush1.msra.mxu0 0.0
      %384 = vmatprep.subr.mxu0 0.0
      %385 = vmatpush1.msra.mxu0 0.0
      %386 = vmatprep.subr.mxu0 0.0
      %387 = vmatpush1.msra.mxu0 0.0
      %388 = vmatprep.subr.mxu0 0.0
      %389 = vmatpush1.msra.mxu0 0.0
      %390 = vmatprep.subr.mxu0 0.0
      %391 = vmatpush1.msra.mxu0 0.0
      %392 = vmatprep.subr.mxu0 0.0
      %393 = vmatpush1.msra.mxu0 0.0
      %394 = vmatprep.subr.mxu0 0.0
      %395 = vmatpush1.msra.mxu0 0.0
      %396 = vmatprep.subr.mxu0 0.0
      %397 = vmatpush1.msra.mxu0 0.0
      %398 = vmatprep.subr.mxu0 0.0
      %399 = vmatpush1.msra.mxu0 0.0
      %400 = vmatprep.subr.mxu0 0.0
      %401 = vmatpush1.msra.mxu0 0.0
      %402 = vmatprep.subr.mxu0 0.0
      %403 = vmatpush1.msra.mxu0 0.0
      %404 = vmatprep.subr.mxu0 0.0
      %405 = vmatpush1.msra.mxu0 0.0
      %406 = vmatprep.subr.mxu0 0.0
      %407 = vmatpush1.msra.mxu0 0.0
      %408 = vmatprep.subr.mxu0 0.0
      %409 = vmatpush1.msra.mxu0 0.0
      %410 = vmatprep.mubr.f32.mxu0 0.0
      %411 = vmatmul.mubr.f32.gmra.mrb[0].mxu0 %v295
      %v412 = vpop.f32.mrb[0].mxu0
      %v413 = vadd.f32 %v291, %v412
      %v414 = vpop.f32.mrb[0].mxu0
      %415 = vmatprep.mubr.f32.mxu0 0.0
      %416 = vmatmul.mubr.f32.gmra.mrb[0].mxu0 %v298
      %v417 = vpop.f32.mrb[0].mxu0
      %v418 = vadd.f32 %v291, %v417
      %v419 = vpop.f32.mrb[0].mxu0
      %420 = vmatprep.mubr.f32.mxu0 0.0
      %421 = vmatmul.mubr.f32.gmra.mrb[0].mxu0 %v301
      %v422 = vpop.f32.mrb[0].mxu0
      %v423 = vadd.f32 %v291, %v422
      %v424 = vpop.f32.mrb[0].mxu0
      %425 = vmatprep.mubr.f32.mxu0 0.0
      %426 = vmatmul.mubr.f32.gmra.mrb[0].mxu0 %v304
      %v427 = vpop.f32.mrb[0].mxu0
      %v428 = vadd.f32 %v291, %v427
      %v429 = vpop.f32.mrb[0].mxu0
      %430 = vmatprep.mubr.f32.mxu0 0.0
      %431 = vmatmul.mubr.f32.gmra.mrb[0].mxu0 %v307
      %v432 = vpop.f32.mrb[0].mxu0
      %v433 = vadd.f32 %v291, %v432
      %v434 = vpop.f32.mrb[0].mxu0
      %435 = vmatprep.mubr.f32.mxu0 0.0
      %436 = vmatmul.mubr.f32.gmra.mrb[0].mxu0 %v310
      %v437 = vpop.f32.mrb[0].mxu0
      %v438 = vadd.f32 %v291, %v437
      %v439 = vpop.f32.mrb[0].mxu0
      %440 = vmatprep.mubr.f32.mxu0 0.0
      %441 = vmatmul.mubr.f32.gmra.mrb[0].mxu0 %v313
      %v442 = vpop.f32.mrb[0].mxu0
      %v443 = vadd.f32 %v291, %v442
      %v444 = vpop.f32.mrb[0].mxu0
      %445 = vmatprep.mubr.f32.mxu0 0.0
      %446 = vmatmul.mubr.f32.gmra.mrb[0].mxu0 %v316
      %v447 = vpop.f32.mrb[0].mxu0
      %v448 = vadd.f32 %v291, %v447
      %v449 = vpop.f32.mrb[0].mxu0
      %450 = vmatprep.mubr.f32.mxu0 0.0
      %451 = vmatmul.mubr.f32.gmra.mrb[0].mxu0 %v319
      %v452 = vpop.f32.mrb[0].mxu0
      %v453 = vadd.f32 %v291, %v452
      %v454 = vpop.f32.mrb[0].mxu0
      %455 = vmatprep.mubr.f32.mxu0 0.0
      %456 = vmatmul.mubr.f32.gmra.mrb[0].mxu0 %v322
      %v457 = vpop.f32.mrb[0].mxu0
      %v458 = vadd.f32 %v291, %v457
      %v459 = vpop.f32.mrb[0].mxu0
      %460 = vmatprep.mubr.f32.mxu0 0.0
      %461 = vmatmul.mubr.f32.gmra.mrb[0].mxu0 %v325
      %v462 = vpop.f32.mrb[0].mxu0
      %v463 = vadd.f32 %v291, %v462
      %v464 = vpop.f32.mrb[0].mxu0
      %465 = vmatprep.mubr.f32.mxu0 0.0
      %466 = vmatmul.mubr.f32.gmra.mrb[0].mxu0 %v328
      %v467 = vpop.f32.mrb[0].mxu0
      %v468 = vadd.f32 %v291, %v467
      %v469 = vpop.f32.mrb[0].mxu0
      %470 = vmatprep.mubr.f32.mxu0 0.0
      %471 = vmatmul.mubr.f32.gmra.mrb[0].mxu0 %v331
      %v472 = vpop.f32.mrb[0].mxu0
      %v473 = vadd.f32 %v291, %v472
      %v474 = vpop.f32.mrb[0].mxu0
      %475 = vmatprep.mubr.f32.mxu0 0.0
      %476 = vmatmul.mubr.f32.gmra.mrb[0].mxu0 %v334
      %v477 = vpop.f32.mrb[0].mxu0
      %v478 = vadd.f32 %v291, %v477
      %v479 = vpop.f32.mrb[0].mxu0
      %480 = vmatprep.mubr.f32.mxu0 0.0
      %481 = vmatmul.mubr.f32.gmra.mrb[0].mxu0 %v337
      %v482 = vpop.f32.mrb[0].mxu0
      %v483 = vadd.f32 %v291, %v482
      %v484 = vpop.f32.mrb[0].mxu0
      %485 = vmatprep.mubr.f32.mxu0 0.0
      %486 = vmatmul.mubr.f32.gmra.mrb[0].mxu0 %v340
      %v487 = vpop.f32.mrb[0].mxu0
      %v488 = vadd.f32 %v291, %v487
      %v489 = vpop.f32.mrb[0].mxu0
      %490 = vdwg.mxu0
      %v491 = vxor.u32 %v413, 2147483648
      %v492 = vxor.u32 %v418, 2147483648
      %v493 = vxor.u32 %v423, 2147483648
      %v494 = vxor.u32 %v428, 2147483648
      %v495 = vxor.u32 %v433, 2147483648
      %v496 = vxor.u32 %v438, 2147483648
      %v497 = vxor.u32 %v443, 2147483648
      %v498 = vxor.u32 %v448, 2147483648
      %v499 = vxor.u32 %v453, 2147483648
      %v500 = vxor.u32 %v458, 2147483648
      %v501 = vxor.u32 %v463, 2147483648
      %v502 = vxor.u32 %v468, 2147483648
      %v503 = vxor.u32 %v473, 2147483648
      %v504 = vxor.u32 %v478, 2147483648
      %v505 = vxor.u32 %v483, 2147483648
      %v506 = vxor.u32 %v488, 2147483648
      %v507 = vmul.f32 %v491, 1.442695
      %v508 = vpow.pop %v507
      %v509 = vmul.f32 %v492, 1.442695
      %v510 = vpow.pop %v509
      %v511 = vmul.f32 %v493, 1.442695
      %v512 = vpow.pop %v511
      %v513 = vmul.f32 %v494, 1.442695
      %v514 = vpow.pop %v513
      %v515 = vmul.f32 %v495, 1.442695
      %v516 = vpow.pop %v515
      %v517 = vmul.f32 %v496, 1.442695
      %v518 = vpow.pop %v517
      %v519 = vmul.f32 %v497, 1.442695
      %v520 = vpow.pop %v519
      %v521 = vmul.f32 %v498, 1.442695
      %v522 = vpow.pop %v521
      %v523 = vmul.f32 %v499, 1.442695
      %v524 = vpow.pop %v523
      %v525 = vmul.f32 %v500, 1.442695
      %v526 = vpow.pop %v525
      %v527 = vmul.f32 %v501, 1.442695
      %v528 = vpow.pop %v527
      %v529 = vmul.f32 %v502, 1.442695
      %v530 = vpow.pop %v529
      %v531 = vmul.f32 %v503, 1.442695
      %v532 = vpow.pop %v531
      %v533 = vmul.f32 %v504, 1.442695
      %v534 = vpow.pop %v533
      %v535 = vmul.f32 %v505, 1.442695
      %v536 = vpow.pop %v535
      %v537 = vmul.f32 %v506, 1.442695
      %v538 = vpow.pop %v537
      %v539 = vadd.f32 %v508, 1.0
      %v540 = vadd.f32 %v510, 1.0
      %v541 = vadd.f32 %v512, 1.0
      %v542 = vadd.f32 %v514, 1.0
      %v543 = vadd.f32 %v516, 1.0
      %v544 = vadd.f32 %v518, 1.0
      %v545 = vadd.f32 %v520, 1.0
      %v546 = vadd.f32 %v522, 1.0
      %v547 = vadd.f32 %v524, 1.0
      %v548 = vadd.f32 %v526, 1.0
      %v549 = vadd.f32 %v528, 1.0
      %v550 = vadd.f32 %v530, 1.0
      %v551 = vadd.f32 %v532, 1.0
      %v552 = vadd.f32 %v534, 1.0
      %v553 = vadd.f32 %v536, 1.0
      %v554 = vadd.f32 %v538, 1.0
      %v555 = vrcp.pop %v539
      %v556 = vmul.f32 1.0, %v555
      %v557 = vrcp.pop %v540
      %v558 = vmul.f32 1.0, %v557
      %v559 = vrcp.pop %v541
      %v560 = vmul.f32 1.0, %v559
      %v561 = vrcp.pop %v542
      %v562 = vmul.f32 1.0, %v561
      %v563 = vrcp.pop %v543
      %v564 = vmul.f32 1.0, %v563
      %v565 = vrcp.pop %v544
      %v566 = vmul.f32 1.0, %v565
      %v567 = vrcp.pop %v545
      %v568 = vmul.f32 1.0, %v567
      %v569 = vrcp.pop %v546
      %v570 = vmul.f32 1.0, %v569
      %v571 = vrcp.pop %v547
      %v572 = vmul.f32 1.0, %v571
      %v573 = vrcp.pop %v548
      %v574 = vmul.f32 1.0, %v573
      %v575 = vrcp.pop %v549
      %v576 = vmul.f32 1.0, %v575
      %v577 = vrcp.pop %v550
      %v578 = vmul.f32 1.0, %v577
      %v579 = vrcp.pop %v551
      %v580 = vmul.f32 1.0, %v579
      %v581 = vrcp.pop %v552
      %v582 = vmul.f32 1.0, %v581
      %v583 = vrcp.pop %v553
      %v584 = vmul.f32 1.0, %v583
      %v585 = vrcp.pop %v554
      %v586 = vmul.f32 1.0, %v585
      %v587 = vmul.f32 %v413, %v556
      %v588 = vmul.f32 %v418, %v558
      %v589 = vmul.f32 %v423, %v560
      %v590 = vmul.f32 %v428, %v562
      %v591 = vmul.f32 %v433, %v564
      %v592 = vmul.f32 %v438, %v566
      %v593 = vmul.f32 %v443, %v568
      %v594 = vmul.f32 %v448, %v570
      %v595 = vmul.f32 %v453, %v572
      %v596 = vmul.f32 %v458, %v574
      %v597 = vmul.f32 %v463, %v576
      %v598 = vmul.f32 %v468, %v578
      %v599 = vmul.f32 %v473, %v580
      %v600 = vmul.f32 %v478, %v582
      %v601 = vmul.f32 %v483, %v584
      %v602 = vmul.f32 %v488, %v586
      %603 = vst.msk [vmem:[%s261] sm:$0xff] %vm293, %v587
      %604 = vst.msk [vmem:[%s261 + $0x8] sm:$0xff] %vm293, %v588
      %605 = vst.msk [vmem:[%s261 + $0x10] sm:$0xff] %vm293, %v589
      %606 = vst.msk [vmem:[%s261 + $0x18] sm:$0xff] %vm293, %v590
      %607 = vst.msk [vmem:[%s261 + $0x20] sm:$0xff] %vm293, %v591
      %608 = vst.msk [vmem:[%s261 + $0x28] sm:$0xff] %vm293, %v592
      %609 = vst.msk [vmem:[%s261 + $0x30] sm:$0xff] %vm293, %v593
      %610 = vst.msk [vmem:[%s261 + $0x38] sm:$0xff] %vm293, %v594
      %611 = vst.msk [vmem:[%s261 + $0x40] sm:$0xff] %vm293, %v595
      %612 = vst.msk [vmem:[%s261 + $0x48] sm:$0xff] %vm293, %v596
      %613 = vst.msk [vmem:[%s261 + $0x50] sm:$0xff] %vm293, %v597
      %614 = vst.msk [vmem:[%s261 + $0x58] sm:$0xff] %vm293, %v598
      %615 = vst.msk [vmem:[%s261 + $0x60] sm:$0xff] %vm293, %v599
      %616 = vst.msk [vmem:[%s261 + $0x68] sm:$0xff] %vm293, %v600
      %617 = vst.msk [vmem:[%s261 + $0x70] sm:$0xff] %vm293, %v601
      %618 = vst.msk [vmem:[%s261 + $0x78] sm:$0xff] %vm293, %v602
      %v619 = vld [vmem:[%s3] sm:$0xf]
      %v620 = vld [vmem:[%s4] sm:$0x1]
      %v622 = vlaneseq
      %v623 = vshrl.u32 %v622, 7
      %v624 = vsub.s32 0, %v623
      %v625 = vrot.slane %v620, %v624
      %v628 = vsel %vm342, %v619, 0
      %630 = vmatprep.subr.mxu0 0.0
      %631 = vmatpush1.msra.mxu0 %v628
      %632 = vmatprep.subr.mxu0 0.0
      %633 = vmatpush1.msra.mxu0 0.0
      %634 = vmatprep.subr.mxu0 0.0
      %635 = vmatpush1.msra.mxu0 0.0
      %636 = vmatprep.subr.mxu0 0.0
      %637 = vmatpush1.msra.mxu0 0.0
      %638 = vmatprep.subr.mxu0 0.0
      %639 = vmatpush1.msra.mxu0 0.0
      %640 = vmatprep.subr.mxu0 0.0
      %641 = vmatpush1.msra.mxu0 0.0
      %642 = vmatprep.subr.mxu0 0.0
      %643 = vmatpush1.msra.mxu0 0.0
      %644 = vmatprep.subr.mxu0 0.0
      %645 = vmatpush1.msra.mxu0 0.0
      %646 = vmatprep.subr.mxu0 0.0
      %647 = vmatpush1.msra.mxu0 0.0
      %648 = vmatprep.subr.mxu0 0.0
      %649 = vmatpush1.msra.mxu0 0.0
      %650 = vmatprep.subr.mxu0 0.0
      %651 = vmatpush1.msra.mxu0 0.0
      %652 = vmatprep.subr.mxu0 0.0
      %653 = vmatpush1.msra.mxu0 0.0
      %654 = vmatprep.subr.mxu0 0.0
      %655 = vmatpush1.msra.mxu0 0.0
      %656 = vmatprep.subr.mxu0 0.0
      %657 = vmatpush1.msra.mxu0 0.0
      %658 = vmatprep.subr.mxu0 0.0
      %659 = vmatpush1.msra.mxu0 0.0
      %660 = vmatprep.subr.mxu0 0.0
      %661 = vmatpush1.msra.mxu0 0.0
      %662 = vmatprep.subr.mxu0 0.0
      %663 = vmatpush1.msra.mxu0 0.0
      %664 = vmatprep.subr.mxu0 0.0
      %665 = vmatpush1.msra.mxu0 0.0
      %666 = vmatprep.subr.mxu0 0.0
      %667 = vmatpush1.msra.mxu0 0.0
      %668 = vmatprep.subr.mxu0 0.0
      %669 = vmatpush1.msra.mxu0 0.0
      %670 = vmatprep.subr.mxu0 0.0
      %671 = vmatpush1.msra.mxu0 0.0
      %672 = vmatprep.subr.mxu0 0.0
      %673 = vmatpush1.msra.mxu0 0.0
      %674 = vmatprep.subr.mxu0 0.0
      %675 = vmatpush1.msra.mxu0 0.0
      %676 = vmatprep.subr.mxu0 0.0
      %677 = vmatpush1.msra.mxu0 0.0
      %678 = vmatprep.subr.mxu0 0.0
      %679 = vmatpush1.msra.mxu0 0.0
      %680 = vmatprep.subr.mxu0 0.0
      %681 = vmatpush1.msra.mxu0 0.0
      %682 = vmatprep.subr.mxu0 0.0
      %683 = vmatpush1.msra.mxu0 0.0
      %684 = vmatprep.subr.mxu0 0.0
      %685 = vmatpush1.msra.mxu0 0.0
      %686 = vmatprep.subr.mxu0 0.0
      %687 = vmatpush1.msra.mxu0 0.0
      %688 = vmatprep.subr.mxu0 0.0
      %689 = vmatpush1.msra.mxu0 0.0
      %690 = vmatprep.subr.mxu0 0.0
      %691 = vmatpush1.msra.mxu0 0.0
      %692 = vmatprep.subr.mxu0 0.0
      %693 = vmatpush1.msra.mxu0 0.0
      %694 = vmatprep.mubr.f32.mxu0 0.0
      %695 = vmatmul.mubr.f32.gmra.mrb[0].mxu0 %v295
      %v696 = vpop.f32.mrb[0].mxu0
      %v697 = vadd.f32 %v625, %v696
      %v698 = vpop.f32.mrb[0].mxu0
      %699 = vmatprep.mubr.f32.mxu0 0.0
      %700 = vmatmul.mubr.f32.gmra.mrb[0].mxu0 %v298
      %v701 = vpop.f32.mrb[0].mxu0
      %v702 = vadd.f32 %v625, %v701
      %v703 = vpop.f32.mrb[0].mxu0
      %704 = vmatprep.mubr.f32.mxu0 0.0
      %705 = vmatmul.mubr.f32.gmra.mrb[0].mxu0 %v301
      %v706 = vpop.f32.mrb[0].mxu0
      %v707 = vadd.f32 %v625, %v706
      %v708 = vpop.f32.mrb[0].mxu0
      %709 = vmatprep.mubr.f32.mxu0 0.0
      %710 = vmatmul.mubr.f32.gmra.mrb[0].mxu0 %v304
      %v711 = vpop.f32.mrb[0].mxu0
      %v712 = vadd.f32 %v625, %v711
      %v713 = vpop.f32.mrb[0].mxu0
      %714 = vmatprep.mubr.f32.mxu0 0.0
      %715 = vmatmul.mubr.f32.gmra.mrb[0].mxu0 %v307
      %v716 = vpop.f32.mrb[0].mxu0
      %v717 = vadd.f32 %v625, %v716
      %v718 = vpop.f32.mrb[0].mxu0
      %719 = vmatprep.mubr.f32.mxu0 0.0
      %720 = vmatmul.mubr.f32.gmra.mrb[0].mxu0 %v310
      %v721 = vpop.f32.mrb[0].mxu0
      %v722 = vadd.f32 %v625, %v721
      %v723 = vpop.f32.mrb[0].mxu0
      %724 = vmatprep.mubr.f32.mxu0 0.0
      %725 = vmatmul.mubr.f32.gmra.mrb[0].mxu0 %v313
      %v726 = vpop.f32.mrb[0].mxu0
      %v727 = vadd.f32 %v625, %v726
      %v728 = vpop.f32.mrb[0].mxu0
      %729 = vmatprep.mubr.f32.mxu0 0.0
      %730 = vmatmul.mubr.f32.gmra.mrb[0].mxu0 %v316
      %v731 = vpop.f32.mrb[0].mxu0
      %v732 = vadd.f32 %v625, %v731
      %v733 = vpop.f32.mrb[0].mxu0
      %734 = vmatprep.mubr.f32.mxu0 0.0
      %735 = vmatmul.mubr.f32.gmra.mrb[0].mxu0 %v319
      %v736 = vpop.f32.mrb[0].mxu0
      %v737 = vadd.f32 %v625, %v736
      %v738 = vpop.f32.mrb[0].mxu0
      %739 = vmatprep.mubr.f32.mxu0 0.0
      %740 = vmatmul.mubr.f32.gmra.mrb[0].mxu0 %v322
      %v741 = vpop.f32.mrb[0].mxu0
      %v742 = vadd.f32 %v625, %v741
      %v743 = vpop.f32.mrb[0].mxu0
      %744 = vmatprep.mubr.f32.mxu0 0.0
      %745 = vmatmul.mubr.f32.gmra.mrb[0].mxu0 %v325
      %v746 = vpop.f32.mrb[0].mxu0
      %v747 = vadd.f32 %v625, %v746
      %v748 = vpop.f32.mrb[0].mxu0
      %749 = vmatprep.mubr.f32.mxu0 0.0
      %750 = vmatmul.mubr.f32.gmra.mrb[0].mxu0 %v328
      %v751 = vpop.f32.mrb[0].mxu0
      %v752 = vadd.f32 %v625, %v751
      %v753 = vpop.f32.mrb[0].mxu0
      %754 = vmatprep.mubr.f32.mxu0 0.0
      %755 = vmatmul.mubr.f32.gmra.mrb[0].mxu0 %v331
      %v756 = vpop.f32.mrb[0].mxu0
      %v757 = vadd.f32 %v625, %v756
      %v758 = vpop.f32.mrb[0].mxu0
      %759 = vmatprep.mubr.f32.mxu0 0.0
      %760 = vmatmul.mubr.f32.gmra.mrb[0].mxu0 %v334
      %v761 = vpop.f32.mrb[0].mxu0
      %v762 = vadd.f32 %v625, %v761
      %v763 = vpop.f32.mrb[0].mxu0
      %764 = vmatprep.mubr.f32.mxu0 0.0
      %765 = vmatmul.mubr.f32.gmra.mrb[0].mxu0 %v337
      %v766 = vpop.f32.mrb[0].mxu0
      %v767 = vadd.f32 %v625, %v766
      %v768 = vpop.f32.mrb[0].mxu0
      %769 = vmatprep.mubr.f32.mxu0 0.0
      %770 = vmatmul.mubr.f32.gmra.mrb[0].mxu0 %v340
      %v771 = vpop.f32.mrb[0].mxu0
      %v772 = vadd.f32 %v625, %v771
      %v773 = vpop.f32.mrb[0].mxu0
      %774 = vdwg.mxu0
      %v775 = vxor.u32 %v697, 2147483648
      %v776 = vxor.u32 %v702, 2147483648
      %v777 = vxor.u32 %v707, 2147483648
      %v778 = vxor.u32 %v712, 2147483648
      %v779 = vxor.u32 %v717, 2147483648
      %v780 = vxor.u32 %v722, 2147483648
      %v781 = vxor.u32 %v727, 2147483648
      %v782 = vxor.u32 %v732, 2147483648
      %v783 = vxor.u32 %v737, 2147483648
      %v784 = vxor.u32 %v742, 2147483648
      %v785 = vxor.u32 %v747, 2147483648
      %v786 = vxor.u32 %v752, 2147483648
      %v787 = vxor.u32 %v757, 2147483648
      %v788 = vxor.u32 %v762, 2147483648
      %v789 = vxor.u32 %v767, 2147483648
      %v790 = vxor.u32 %v772, 2147483648
      %v791 = vmul.f32 %v775, 1.442695
      %v792 = vpow.pop %v791
      %v793 = vmul.f32 %v776, 1.442695
      %v794 = vpow.pop %v793
      %v795 = vmul.f32 %v777, 1.442695
      %v796 = vpow.pop %v795
      %v797 = vmul.f32 %v778, 1.442695
      %v798 = vpow.pop %v797
      %v799 = vmul.f32 %v779, 1.442695
      %v800 = vpow.pop %v799
      %v801 = vmul.f32 %v780, 1.442695
      %v802 = vpow.pop %v801
      %v803 = vmul.f32 %v781, 1.442695
      %v804 = vpow.pop %v803
      %v805 = vmul.f32 %v782, 1.442695
      %v806 = vpow.pop %v805
      %v807 = vmul.f32 %v783, 1.442695
      %v808 = vpow.pop %v807
      %v809 = vmul.f32 %v784, 1.442695
      %v810 = vpow.pop %v809
      %v811 = vmul.f32 %v785, 1.442695
      %v812 = vpow.pop %v811
      %v813 = vmul.f32 %v786, 1.442695
      %v814 = vpow.pop %v813
      %v815 = vmul.f32 %v787, 1.442695
      %v816 = vpow.pop %v815
      %v817 = vmul.f32 %v788, 1.442695
      %v818 = vpow.pop %v817
      %v819 = vmul.f32 %v789, 1.442695
      %v820 = vpow.pop %v819
      %v821 = vmul.f32 %v790, 1.442695
      %v822 = vpow.pop %v821
      %v823 = vadd.f32 %v792, 1.0
      %v824 = vadd.f32 %v794, 1.0
      %v825 = vadd.f32 %v796, 1.0
      %v826 = vadd.f32 %v798, 1.0
      %v827 = vadd.f32 %v800, 1.0
      %v828 = vadd.f32 %v802, 1.0
      %v829 = vadd.f32 %v804, 1.0
      %v830 = vadd.f32 %v806, 1.0
      %v831 = vadd.f32 %v808, 1.0
      %v832 = vadd.f32 %v810, 1.0
      %v833 = vadd.f32 %v812, 1.0
      %v834 = vadd.f32 %v814, 1.0
      %v835 = vadd.f32 %v816, 1.0
      %v836 = vadd.f32 %v818, 1.0
      %v837 = vadd.f32 %v820, 1.0
      %v838 = vadd.f32 %v822, 1.0
      %v839 = vrcp.pop %v823
      %v840 = vmul.f32 1.0, %v839
      %v841 = vrcp.pop %v824
      %v842 = vmul.f32 1.0, %v841
      %v843 = vrcp.pop %v825
      %v844 = vmul.f32 1.0, %v843
      %v845 = vrcp.pop %v826
      %v846 = vmul.f32 1.0, %v845
      %v847 = vrcp.pop %v827
      %v848 = vmul.f32 1.0, %v847
      %v849 = vrcp.pop %v828
      %v850 = vmul.f32 1.0, %v849
      %v851 = vrcp.pop %v829
      %v852 = vmul.f32 1.0, %v851
      %v853 = vrcp.pop %v830
      %v854 = vmul.f32 1.0, %v853
      %v855 = vrcp.pop %v831
      %v856 = vmul.f32 1.0, %v855
      %v857 = vrcp.pop %v832
      %v858 = vmul.f32 1.0, %v857
      %v859 = vrcp.pop %v833
      %v860 = vmul.f32 1.0, %v859
      %v861 = vrcp.pop %v834
      %v862 = vmul.f32 1.0, %v861
      %v863 = vrcp.pop %v835
      %v864 = vmul.f32 1.0, %v863
      %v865 = vrcp.pop %v836
      %v866 = vmul.f32 1.0, %v865
      %v867 = vrcp.pop %v837
      %v868 = vmul.f32 1.0, %v867
      %v869 = vrcp.pop %v838
      %v870 = vmul.f32 1.0, %v869
      %v871 = vmul.f32 %v697, %v840
      %v872 = vmul.f32 %v702, %v842
      %v873 = vmul.f32 %v707, %v844
      %v874 = vmul.f32 %v712, %v846
      %v875 = vmul.f32 %v717, %v848
      %v876 = vmul.f32 %v722, %v850
      %v877 = vmul.f32 %v727, %v852
      %v878 = vmul.f32 %v732, %v854
      %v879 = vmul.f32 %v737, %v856
      %v880 = vmul.f32 %v742, %v858
      %v881 = vmul.f32 %v747, %v860
      %v882 = vmul.f32 %v752, %v862
      %v883 = vmul.f32 %v757, %v864
      %v884 = vmul.f32 %v762, %v866
      %v885 = vmul.f32 %v767, %v868
      %v886 = vmul.f32 %v772, %v870
      %887 = vst.msk [vmem:[%s267] sm:$0xff] %vm293, %v871
      %888 = vst.msk [vmem:[%s267 + $0x8] sm:$0xff] %vm293, %v872
      %889 = vst.msk [vmem:[%s267 + $0x10] sm:$0xff] %vm293, %v873
      %890 = vst.msk [vmem:[%s267 + $0x18] sm:$0xff] %vm293, %v874
      %891 = vst.msk [vmem:[%s267 + $0x20] sm:$0xff] %vm293, %v875
      %892 = vst.msk [vmem:[%s267 + $0x28] sm:$0xff] %vm293, %v876
      %893 = vst.msk [vmem:[%s267 + $0x30] sm:$0xff] %vm293, %v877
      %894 = vst.msk [vmem:[%s267 + $0x38] sm:$0xff] %vm293, %v878
      %895 = vst.msk [vmem:[%s267 + $0x40] sm:$0xff] %vm293, %v879
      %896 = vst.msk [vmem:[%s267 + $0x48] sm:$0xff] %vm293, %v880
      %897 = vst.msk [vmem:[%s267 + $0x50] sm:$0xff] %vm293, %v881
      %898 = vst.msk [vmem:[%s267 + $0x58] sm:$0xff] %vm293, %v882
      %899 = vst.msk [vmem:[%s267 + $0x60] sm:$0xff] %vm293, %v883
      %900 = vst.msk [vmem:[%s267 + $0x68] sm:$0xff] %vm293, %v884
      %901 = vst.msk [vmem:[%s267 + $0x70] sm:$0xff] %vm293, %v885
      %902 = vst.msk [vmem:[%s267 + $0x78] sm:$0xff] %vm293, %v886
      %s903 = smul.u32 16, %s18
      %p904 = scmp.lt.s32.totalorder %s903, 63
      %s905 = scalar_select %p904, %s903, 63
      %s906 = smul.addr %s905, 8
      %s907 = scalar_lea.vmem %s5, %s906
      %s908 = smul.u32 16, %s18
      %p909 = scmp.lt.s32.totalorder %s908, 63
      %s910 = scalar_select %p909, %s908, 63
      %s911 = smul.addr %s910, 8
      %s912 = scalar_lea.vmem %s6, %s911
      // Predicated region
      $region41: #{c3_forward.3} parent=39 // pred_check
        %p913 = pneg %p146
      $region42: #{c3_forward.3} parent=39 // pred_check_branch
        %915 = sbr.rel (%p913) target = $region44
      $region43: #{c3_forward.3} parent=39 // pred_region
        %s916 = smul.u32 16, %s18
      $region44: #{c3_forward.3} parent=39 // pred_fallthru
        _
      // Predicated region
      $region45: #{c3_forward.3} parent=39 // pred_check
        %p917 = pneg %p172
      $region46: #{c3_forward.3} parent=39 // pred_check_branch
        %919 = sbr.rel (%p917) target = $region48
      $region47: #{c3_forward.3} parent=39 // pred_region
        %s920 = smul.u32 16, %s18
      $region48: #{c3_forward.3} parent=39 // pred_fallthru
        _
    $region40: #{c3_forward.3} parent=5 // pred_fallthru
      _
    %p921 = scmp.le.s32.totalorder 2, %s13
    // Predicated region
    $region49: #{c3_forward.3} parent=5 // pred_check
      %p922 = pneg %p921
    $region50: #{c3_forward.3} parent=5 // pred_check_branch
      %924 = sbr.rel (%p922) target = $region52
    $region51: #{c3_forward.3} parent=5 // pred_region
      %s925 = ssub.s32 %s13, 2
      // Predicated region
      $region53: #{c3_forward.3} parent=51 // pred_check
        %p926 = pneg %p152
      $region54: #{c3_forward.3} parent=51 // pred_check_branch
        %928 = sbr.rel (%p926) target = $region56
      $region55: #{c3_forward.3} parent=51 // pred_region
        %s929 = smul.u32 16, %s19
        %p930 = scmp.lt.s32.totalorder %s929, 63
        %s931 = scalar_select %p930, %s929, 63
        %s932 = smul.addr %s931, 8
        %s933 = scalar_lea.vmem %s5, %s932
      $region56: #{c3_forward.3} parent=51 // pred_fallthru
        _
      // Predicated region
      $region57: #{c3_forward.3} parent=51 // pred_check
        %p934 = pneg %p178
      $region58: #{c3_forward.3} parent=51 // pred_check_branch
        %936 = sbr.rel (%p934) target = $region60
      $region59: #{c3_forward.3} parent=51 // pred_region
        %s937 = smul.u32 16, %s19
        %p938 = scmp.lt.s32.totalorder %s937, 63
        %s939 = scalar_select %p938, %s937, 63
        %s940 = smul.addr %s939, 8
        %s941 = scalar_lea.vmem %s6, %s940
      $region60: #{c3_forward.3} parent=51 // pred_fallthru
        _
    $region52: #{c3_forward.3} parent=5 // pred_fallthru
      _
  $region6: #{c3_forward.3} parent=0 // loop_footer
    %s17 = sadd.s32 1, %s13
  $region7: #{c3_forward.3} parent=0 // loop_footer_branch
    %12 = sbr.rel target = $region3
  $region8: #{c3_forward.3} parent=0 // loop_exit
    _

// kernel: c3_forward.5
$region0: #{c3_forward.5}
  #allocation0 [shape = 'u32[]', space=smem, size = 0x4, offset = 0x4, fixed_abs, tag = 'smem constant byte address 0x4 - core index']
  #allocation1 [shape = 'u32[144,128]{1,0:T(1,128)}', space=vmem, size = 0x12000, scoped, tag = 'internal scratch']
  %s0 = inlined_call_operand.vmem [shape: f32[512,4], index: 0, kind: input, shape index: {}]
  %s1 = inlined_call_operand.vmem [shape: f32[512,4], index: 1, kind: input, shape index: {}]
  %s2 = inlined_call_operand.vmem [shape: f32[4,8], index: 2, kind: input, shape index: {}]
  %s3 = inlined_call_operand.vmem [shape: f32[4,8], index: 3, kind: input, shape index: {}]
  %s4 = inlined_call_operand.vmem [shape: f32[1,8], index: 4, kind: input, shape index: {}]
  %s5 = inlined_call_operand.vmem [shape: f32[512,8], index: 5, kind: output, shape index: {}]
  %s6 = sld [smem:[#allocation0]]
  $region53: #{c3_forward.5} parent=0
    _
  %s8 = ssub.s32 1, %s6
  %s9 = scalar_select 0, %s8, %s6
  loop: start=0, step=1, limit=6
  $region2: #{c3_forward.5} parent=0 // loop_pre_header
    _
  $region3: #{c3_forward.5} parent=0 // loop_header
    %s11 = sphi 0, %s15
    %p12 = scmp.ge.s32.totalorder %s11, 6
    %s21 = sphi 0, %s23
    %s24 = sphi 0, %s21
    %s25 = sphi 0, %s24
    %s41 = sphi 0, %s25
    %s47 = sphi 0, %s49
    %s50 = sphi 0, %s47
    %s51 = sphi 0, %s50
    %s67 = sphi 0, %s51
    %s71 = sphi 0, %s71
    %s73 = sphi 0, %s71
    %s74 = sphi 0, %s73
    %s88 = sphi 0, %s74
    %s92 = sphi 0, %s92
    %s94 = sphi 0, %s92
    %s95 = sphi 0, %s94
    %s109 = sphi 0, %s95
    %s113 = sphi 0, %s113
    %s115 = sphi 0, %s113
    %s116 = sphi 0, %s115
    %s130 = sphi 0, %s116
    %s136 = sphi 0, %s138
    %s139 = sphi 0, %s136
    %s140 = sphi 0, %s139
    %s156 = sphi 0, %s140
  $region4: #{c3_forward.5} parent=0 // loop_header_branch
    %14 = sbr.rel (%p12) target = $region8
  $region5: #{c3_forward.5} parent=0 // loop_body
    %s16 = ssub.s32 %s11, 1
    %s17 = ssub.s32 %s11, 2
    %s18 = sadd.s32 %s11, 1
    %s19 = ssub.s32 %s11, %s18
    %p20 = scmp.eq.s32.totalorder %s19, 0
    %s22 = sadd.s32 %s21, 1
    %s23 = scalar_select %p20, %s21, %s22
    %p26 = pneg %p20
    %p27 = scmp.eq.s32.totalorder %s11, 3
    %p28 = por %p26, %p27
    %p29 = scmp.ne.s32.totalorder %s21, %s24
    %p30 = scmp.eq.s32.totalorder %s11, 0
    %p31 = por %p29, %p30
    %p32 = scmp.ne.s32.totalorder %s21, %s24
    %p33 = scmp.eq.s32.totalorder %s16, 3
    %p34 = por %p32, %p33
    %p35 = scmp.ne.s32.totalorder %s24, %s25
    %p36 = scmp.eq.s32.totalorder %s16, 0
    %p37 = por %p35, %p36
    %p38 = scmp.ne.s32.totalorder %s24, %s25
    %p39 = scmp.eq.s32.totalorder %s17, 3
    %p40 = por %p38, %p39
    %p42 = scmp.ne.s32.totalorder %s25, %s41
    %p43 = scmp.eq.s32.totalorder %s17, 0
    %p44 = por %p42, %p43
    %s45 = ssub.s32 %s11, %s18
    %p46 = scmp.eq.s32.totalorder %s45, 0
    %s48 = sadd.s32 %s47, 1
    %s49 = scalar_select %p46, %s47, %s48
    %p52 = pneg %p46
    %p53 = scmp.eq.s32.totalorder %s11, 3
    %p54 = por %p52, %p53
    %p55 = scmp.ne.s32.totalorder %s47, %s50
    %p56 = scmp.eq.s32.totalorder %s11, 0
    %p57 = por %p55, %p56
    %p58 = scmp.ne.s32.totalorder %s47, %s50
    %p59 = scmp.eq.s32.totalorder %s16, 3
    %p60 = por %p58, %p59
    %p61 = scmp.ne.s32.totalorder %s50, %s51
    %p62 = scmp.eq.s32.totalorder %s16, 0
    %p63 = por %p61, %p62
    %p64 = scmp.ne.s32.totalorder %s50, %s51
    %p65 = scmp.eq.s32.totalorder %s17, 3
    %p66 = por %p64, %p65
    %p68 = scmp.ne.s32.totalorder %s51, %s67
    %p69 = scmp.eq.s32.totalorder %s17, 0
    %p70 = por %p68, %p69
    %s72 = sadd.s32 %s71, 1
    %p75 = scmp.eq.s32.totalorder %s11, 3
    %p76 = scmp.ne.s32.totalorder %s71, %s73
    %p77 = scmp.eq.s32.totalorder %s11, 0
    %p78 = por %p76, %p77
    %p79 = scmp.ne.s32.totalorder %s71, %s73
    %p80 = scmp.eq.s32.totalorder %s16, 3
    %p81 = por %p79, %p80
    %p82 = scmp.ne.s32.totalorder %s73, %s74
    %p83 = scmp.eq.s32.totalorder %s16, 0
    %p84 = por %p82, %p83
    %p85 = scmp.ne.s32.totalorder %s73, %s74
    %p86 = scmp.eq.s32.totalorder %s17, 3
    %p87 = por %p85, %p86
    %p89 = scmp.ne.s32.totalorder %s74, %s88
    %p90 = scmp.eq.s32.totalorder %s17, 0
    %p91 = por %p89, %p90
    %s93 = sadd.s32 %s92, 1
    %p96 = scmp.eq.s32.totalorder %s11, 3
    %p97 = scmp.ne.s32.totalorder %s92, %s94
    %p98 = scmp.eq.s32.totalorder %s11, 0
    %p99 = por %p97, %p98
    %p100 = scmp.ne.s32.totalorder %s92, %s94
    %p101 = scmp.eq.s32.totalorder %s16, 3
    %p102 = por %p100, %p101
    %p103 = scmp.ne.s32.totalorder %s94, %s95
    %p104 = scmp.eq.s32.totalorder %s16, 0
    %p105 = por %p103, %p104
    %p106 = scmp.ne.s32.totalorder %s94, %s95
    %p107 = scmp.eq.s32.totalorder %s17, 3
    %p108 = por %p106, %p107
    %p110 = scmp.ne.s32.totalorder %s95, %s109
    %p111 = scmp.eq.s32.totalorder %s17, 0
    %p112 = por %p110, %p111
    %s114 = sadd.s32 %s113, 1
    %p117 = scmp.eq.s32.totalorder %s11, 3
    %p118 = scmp.ne.s32.totalorder %s113, %s115
    %p119 = scmp.eq.s32.totalorder %s11, 0
    %p120 = por %p118, %p119
    %p121 = scmp.ne.s32.totalorder %s113, %s115
    %p122 = scmp.eq.s32.totalorder %s16, 3
    %p123 = por %p121, %p122
    %p124 = scmp.ne.s32.totalorder %s115, %s116
    %p125 = scmp.eq.s32.totalorder %s16, 0
    %p126 = por %p124, %p125
    %p127 = scmp.ne.s32.totalorder %s115, %s116
    %p128 = scmp.eq.s32.totalorder %s17, 3
    %p129 = por %p127, %p128
    %p131 = scmp.ne.s32.totalorder %s116, %s130
    %p132 = scmp.eq.s32.totalorder %s17, 0
    %p133 = por %p131, %p132
    %s134 = ssub.s32 %s11, %s18
    %p135 = scmp.eq.s32.totalorder %s134, 0
    %s137 = sadd.s32 %s136, 1
    %s138 = scalar_select %p135, %s136, %s137
    %p141 = pneg %p135
    %p142 = scmp.eq.s32.totalorder %s11, 3
    %p143 = por %p141, %p142
    %p144 = scmp.ne.s32.totalorder %s136, %s139
    %p145 = scmp.eq.s32.totalorder %s11, 0
    %p146 = por %p144, %p145
    %p147 = scmp.ne.s32.totalorder %s136, %s139
    %p148 = scmp.eq.s32.totalorder %s16, 3
    %p149 = por %p147, %p148
    %p150 = scmp.ne.s32.totalorder %s139, %s140
    %p151 = scmp.eq.s32.totalorder %s16, 0
    %p152 = por %p150, %p151
    %p153 = scmp.ne.s32.totalorder %s139, %s140
    %p154 = scmp.eq.s32.totalorder %s17, 3
    %p155 = por %p153, %p154
    %p157 = scmp.ne.s32.totalorder %s140, %s156
    %p158 = scmp.eq.s32.totalorder %s17, 0
    %p159 = por %p157, %p158
    %p160 = scmp.le.s32.totalorder 1, %s11
    %p161 = scmp.lt.s32.totalorder %s11, 5
    %p162 = pnand %p160, %p161
    %p163 = pneg %p162
    // Predicated region
    $region9: #{c3_forward.5} parent=5 // pred_check
      _
    $region10: #{c3_forward.5} parent=5 // pred_check_branch
      %165 = sbr.rel (%p162) target = $region12
    $region11: #{c3_forward.5} parent=5 // pred_region
      %s166 = ssub.s32 %s11, 1
      // Predicated region
      $region13: #{c3_forward.5} parent=11 // pred_check
        %p167 = pneg %p84
      $region14: #{c3_forward.5} parent=11 // pred_check_branch
        %169 = sbr.rel (%p167) target = $region16
      $region15: #{c3_forward.5} parent=11 // pred_region
        _
      $region16: #{c3_forward.5} parent=11 // pred_fallthru
        _
      // Predicated region
      $region17: #{c3_forward.5} parent=11 // pred_check
        %p170 = pneg %p105
      $region18: #{c3_forward.5} parent=11 // pred_check_branch
        %172 = sbr.rel (%p170) target = $region20
      $region19: #{c3_forward.5} parent=11 // pred_region
        _
      $region20: #{c3_forward.5} parent=11 // pred_fallthru
        _
      // Predicated region
      $region21: #{c3_forward.5} parent=11 // pred_check
        %p173 = pneg %p126
      $region22: #{c3_forward.5} parent=11 // pred_check_branch
        %175 = sbr.rel (%p173) target = $region24
      $region23: #{c3_forward.5} parent=11 // pred_region
        _
      $region24: #{c3_forward.5} parent=11 // pred_fallthru
        _
    $region12: #{c3_forward.5} parent=5 // pred_fallthru
      _
    %p176 = scmp.lt.s32.totalorder %s11, 4
    // Predicated region
    $region25: #{c3_forward.5} parent=5 // pred_check
      %p177 = pneg %p176
    $region26: #{c3_forward.5} parent=5 // pred_check_branch
      %179 = sbr.rel (%p177) target = $region28
    $region27: #{c3_forward.5} parent=5 // pred_region
      // Predicated region
      $region29: #{c3_forward.5} parent=27 // pred_check
        %p180 = pneg %p31
      $region30: #{c3_forward.5} parent=27 // pred_check_branch
        %182 = sbr.rel (%p180) target = $region32
      $region31: #{c3_forward.5} parent=27 // pred_region
        %s183 = smul.u32 16, %s11
        %p184 = scmp.lt.s32.totalorder %s183, 63
        %s185 = scalar_select %p184, %s183, 63
        %s186 = smul.addr %s185, 8
        %s187 = scalar_lea.vmem %s0, %s186
        %s188 = smul.u32 16, %s11
      $region32: #{c3_forward.5} parent=27 // pred_fallthru
        _
      // Predicated region
      $region33: #{c3_forward.5} parent=27 // pred_check
        %p189 = pneg %p57
      $region34: #{c3_forward.5} parent=27 // pred_check_branch
        %191 = sbr.rel (%p189) target = $region36
      $region35: #{c3_forward.5} parent=27 // pred_region
        %s192 = smul.u32 16, %s11
        %p193 = scmp.lt.s32.totalorder %s192, 63
        %s194 = scalar_select %p193, %s192, 63
        %s195 = smul.addr %s194, 8
        %s196 = scalar_lea.vmem %s1, %s195
        %s197 = smul.u32 16, %s11
      $region36: #{c3_forward.5} parent=27 // pred_fallthru
        _
    $region28: #{c3_forward.5} parent=5 // pred_fallthru
      _
    %p198 = scmp.le.s32.totalorder 1, %s11
    %p199 = scmp.lt.s32.totalorder %s11, 5
    %p200 = pnand %p198, %p199
    %p201 = pneg %p200
    // Predicated region
    $region37: #{c3_forward.5} parent=5 // pred_check
      _
    $region38: #{c3_forward.5} parent=5 // pred_check_branch
      %203 = sbr.rel (%p200) target = $region40
    $region39: #{c3_forward.5} parent=5 // pred_region
      %s204 = ssub.s32 %s11, 1
      %s205 = smul.u32 16, %s16
      %p206 = scmp.lt.s32.totalorder %s205, 63
      %s207 = scalar_select %p206, %s205, 63
      %s208 = smul.addr %s207, 8
      %s209 = scalar_lea.vmem %s0, %s208
      %p210 = pneg %p37
      %p211 = pneg %p34
      %s212 = smul.u32 16, %s16
      %p213 = scmp.lt.s32.totalorder %s212, 63
      %s214 = scalar_select %p213, %s212, 63
      %s215 = smul.addr %s214, 8
      %s216 = scalar_lea.vmem %s1, %s215
      %p217 = pneg %p63
      %p218 = pneg %p60
      %p219 = pneg %p84
      %p220 = pneg %p81
      %p221 = pneg %p105
      %p222 = pneg %p102
      %p223 = pneg %p126
      %p224 = pneg %p123
      %p225 = pneg %p152
      %p226 = pneg %p149
      %s227 = smul.u32 16, %s16
      %p228 = scmp.lt.s32.totalorder %s227, 63
      %s229 = scalar_select %p228, %s227, 63
      %s230 = smul.addr %s229, 8
      %s231 = scalar_lea.vmem %s5, %s230
      %s232 = smul.u32 16, %s16
      %p233 = scmp.lt.s32.totalorder %s232, 63
      %s234 = scalar_select %p233, %s232, 63
      %s235 = smul.addr %s234, 8
      %s236 = scalar_lea.vmem %s0, %s235
      %s237 = smul.u32 16, %s16
      %s238 = smul.u32 16, %s16
      %p239 = scmp.lt.s32.totalorder %s238, 63
      %s240 = scalar_select %p239, %s238, 63
      %s241 = smul.addr %s240, 8
      %s242 = scalar_lea.vmem %s1, %s241
      %s243 = smul.u32 16, %s16
      %s244 = smul.u32 16, %s16
      %p245 = scmp.lt.s32.totalorder %s244, 63
      %s246 = scalar_select %p245, %s244, 63
      %s247 = smul.addr %s246, 8
      %s248 = scalar_lea.vmem %s5, %s247
      %s249 = smul.u32 16, %s16
      %v250 = vld [vmem:[%s236] sm:$0xff]
      %v251 = vld [vmem:[%s236 + $0x8] sm:$0xff]
      %v252 = vld [vmem:[%s236 + $0x10] sm:$0xff]
      %v253 = vld [vmem:[%s236 + $0x18] sm:$0xff]
      %v254 = vld [vmem:[%s236 + $0x20] sm:$0xff]
      %v255 = vld [vmem:[%s236 + $0x28] sm:$0xff]
      %v256 = vld [vmem:[%s236 + $0x30] sm:$0xff]
      %v257 = vld [vmem:[%s236 + $0x38] sm:$0xff]
      %v258 = vld [vmem:[%s236 + $0x40] sm:$0xff]
      %v259 = vld [vmem:[%s236 + $0x48] sm:$0xff]
      %v260 = vld [vmem:[%s236 + $0x50] sm:$0xff]
      %v261 = vld [vmem:[%s236 + $0x58] sm:$0xff]
      %v262 = vld [vmem:[%s236 + $0x60] sm:$0xff]
      %v263 = vld [vmem:[%s236 + $0x68] sm:$0xff]
      %v264 = vld [vmem:[%s236 + $0x70] sm:$0xff]
      %v265 = vld [vmem:[%s236 + $0x78] sm:$0xff]
      %v266 = vld [vmem:[%s2] sm:$0xf]
      %v267 = vld [vmem:[%s242] sm:$0xff]
      %v268 = vld [vmem:[%s242 + $0x8] sm:$0xff]
      %v269 = vld [vmem:[%s242 + $0x10] sm:$0xff]
      %v270 = vld [vmem:[%s242 + $0x18] sm:$0xff]
      %v271 = vld [vmem:[%s242 + $0x20] sm:$0xff]
      %v272 = vld [vmem:[%s242 + $0x28] sm:$0xff]
      %v273 = vld [vmem:[%s242 + $0x30] sm:$0xff]
      %v274 = vld [vmem:[%s242 + $0x38] sm:$0xff]
      %v275 = vld [vmem:[%s242 + $0x40] sm:$0xff]
      %v276 = vld [vmem:[%s242 + $0x48] sm:$0xff]
      %v277 = vld [vmem:[%s242 + $0x50] sm:$0xff]
      %v278 = vld [vmem:[%s242 + $0x58] sm:$0xff]
      %v279 = vld [vmem:[%s242 + $0x60] sm:$0xff]
      %v280 = vld [vmem:[%s242 + $0x68] sm:$0xff]
      %v281 = vld [vmem:[%s242 + $0x70] sm:$0xff]
      %v282 = vld [vmem:[%s242 + $0x78] sm:$0xff]
      %v283 = vld [vmem:[%s3] sm:$0xf]
      %vm284 = vcmask 31744
      %v286 = vsel %vm284, %v267, 0
      %v289 = vsel %vm284, %v268, 0
      %v292 = vsel %vm284, %v269, 0
      %v295 = vsel %vm284, %v270, 0
      %v298 = vsel %vm284, %v271, 0
      %v301 = vsel %vm284, %v272, 0
      %v304 = vsel %vm284, %v273, 0
      %v307 = vsel %vm284, %v274, 0
      %v310 = vsel %vm284, %v275, 0
      %v313 = vsel %vm284, %v276, 0
      %v316 = vsel %vm284, %v277, 0
      %v319 = vsel %vm284, %v278, 0
      %v322 = vsel %vm284, %v279, 0
      %v325 = vsel %vm284, %v280, 0
      %v328 = vsel %vm284, %v281, 0
      %v331 = vsel %vm284, %v282, 0
      %vm333 = vcmask 1043456
      %v335 = vsel %vm333, %v283, 0
      %337 = vmatprep.subr.mxu0 0.0
      %338 = vmatpush1.msra.mxu0 %v335
      %339 = vmatprep.subr.mxu0 0.0
      %340 = vmatpush1.msra.mxu0 0.0
      %341 = vmatprep.subr.mxu0 0.0
      %342 = vmatpush1.msra.mxu0 0.0
      %343 = vmatprep.subr.mxu0 0.0
      %344 = vmatpush1.msra.mxu0 0.0
      %345 = vmatprep.subr.mxu0 0.0
      %346 = vmatpush1.msra.mxu0 0.0
      %347 = vmatprep.subr.mxu0 0.0
      %348 = vmatpush1.msra.mxu0 0.0
      %349 = vmatprep.subr.mxu0 0.0
      %350 = vmatpush1.msra.mxu0 0.0
      %351 = vmatprep.subr.mxu0 0.0
      %352 = vmatpush1.msra.mxu0 0.0
      %353 = vmatprep.subr.mxu0 0.0
      %354 = vmatpush1.msra.mxu0 0.0
      %355 = vmatprep.subr.mxu0 0.0
      %356 = vmatpush1.msra.mxu0 0.0
      %357 = vmatprep.subr.mxu0 0.0
      %358 = vmatpush1.msra.mxu0 0.0
      %359 = vmatprep.subr.mxu0 0.0
      %360 = vmatpush1.msra.mxu0 0.0
      %361 = vmatprep.subr.mxu0 0.0
      %362 = vmatpush1.msra.mxu0 0.0
      %363 = vmatprep.subr.mxu0 0.0
      %364 = vmatpush1.msra.mxu0 0.0
      %365 = vmatprep.subr.mxu0 0.0
      %366 = vmatpush1.msra.mxu0 0.0
      %367 = vmatprep.subr.mxu0 0.0
      %368 = vmatpush1.msra.mxu0 0.0
      %369 = vmatprep.subr.mxu0 0.0
      %370 = vmatpush1.msra.mxu0 0.0
      %371 = vmatprep.subr.mxu0 0.0
      %372 = vmatpush1.msra.mxu0 0.0
      %373 = vmatprep.subr.mxu0 0.0
      %374 = vmatpush1.msra.mxu0 0.0
      %375 = vmatprep.subr.mxu0 0.0
      %376 = vmatpush1.msra.mxu0 0.0
      %377 = vmatprep.subr.mxu0 0.0
      %378 = vmatpush1.msra.mxu0 0.0
      %379 = vmatprep.subr.mxu0 0.0
      %380 = vmatpush1.msra.mxu0 0.0
      %381 = vmatprep.subr.mxu0 0.0
      %382 = vmatpush1.msra.mxu0 0.0
      %383 = vmatprep.subr.mxu0 0.0
      %384 = vmatpush1.msra.mxu0 0.0
      %385 = vmatprep.subr.mxu0 0.0
      %386 = vmatpush1.msra.mxu0 0.0
      %387 = vmatprep.subr.mxu0 0.0
      %388 = vmatpush1.msra.mxu0 0.0
      %389 = vmatprep.subr.mxu0 0.0
      %390 = vmatpush1.msra.mxu0 0.0
      %391 = vmatprep.subr.mxu0 0.0
      %392 = vmatpush1.msra.mxu0 0.0
      %393 = vmatprep.subr.mxu0 0.0
      %394 = vmatpush1.msra.mxu0 0.0
      %395 = vmatprep.subr.mxu0 0.0
      %396 = vmatpush1.msra.mxu0 0.0
      %397 = vmatprep.subr.mxu0 0.0
      %398 = vmatpush1.msra.mxu0 0.0
      %399 = vmatprep.subr.mxu0 0.0
      %400 = vmatpush1.msra.mxu0 0.0
      %401 = vmatprep.mubr.f32.mxu0 0.0
      %402 = vmatmul.mubr.f32.gmra.mrb[0].mxu0 %v286
      %v403 = vpop.f32.mrb[0].mxu0
      %v404 = vadd.f32 0.0, %v403
      %v405 = vpop.f32.mrb[0].mxu0
      %406 = vmatprep.mubr.f32.mxu0 0.0
      %407 = vmatmul.mubr.f32.gmra.mrb[0].mxu0 %v289
      %v408 = vpop.f32.mrb[0].mxu0
      %v409 = vadd.f32 0.0, %v408
      %v410 = vpop.f32.mrb[0].mxu0
      %411 = vmatprep.mubr.f32.mxu0 0.0
      %412 = vmatmul.mubr.f32.gmra.mrb[0].mxu0 %v292
      %v413 = vpop.f32.mrb[0].mxu0
      %v414 = vadd.f32 0.0, %v413
      %v415 = vpop.f32.mrb[0].mxu0
      %416 = vmatprep.mubr.f32.mxu0 0.0
      %417 = vmatmul.mubr.f32.gmra.mrb[0].mxu0 %v295
      %v418 = vpop.f32.mrb[0].mxu0
      %v419 = vadd.f32 0.0, %v418
      %v420 = vpop.f32.mrb[0].mxu0
      %421 = vmatprep.mubr.f32.mxu0 0.0
      %422 = vmatmul.mubr.f32.gmra.mrb[0].mxu0 %v298
      %v423 = vpop.f32.mrb[0].mxu0
      %v424 = vadd.f32 0.0, %v423
      %v425 = vpop.f32.mrb[0].mxu0
      %426 = vmatprep.mubr.f32.mxu0 0.0
      %427 = vmatmul.mubr.f32.gmra.mrb[0].mxu0 %v301
      %v428 = vpop.f32.mrb[0].mxu0
      %v429 = vadd.f32 0.0, %v428
      %v430 = vpop.f32.mrb[0].mxu0
      %431 = vmatprep.mubr.f32.mxu0 0.0
      %432 = vmatmul.mubr.f32.gmra.mrb[0].mxu0 %v304
      %v433 = vpop.f32.mrb[0].mxu0
      %v434 = vadd.f32 0.0, %v433
      %v435 = vpop.f32.mrb[0].mxu0
      %436 = vmatprep.mubr.f32.mxu0 0.0
      %437 = vmatmul.mubr.f32.gmra.mrb[0].mxu0 %v307
      %v438 = vpop.f32.mrb[0].mxu0
      %v439 = vadd.f32 0.0, %v438
      %v440 = vpop.f32.mrb[0].mxu0
      %441 = vmatprep.mubr.f32.mxu0 0.0
      %442 = vmatmul.mubr.f32.gmra.mrb[0].mxu0 %v310
      %v443 = vpop.f32.mrb[0].mxu0
      %v444 = vadd.f32 0.0, %v443
      %v445 = vpop.f32.mrb[0].mxu0
      %446 = vmatprep.mubr.f32.mxu0 0.0
      %447 = vmatmul.mubr.f32.gmra.mrb[0].mxu0 %v313
      %v448 = vpop.f32.mrb[0].mxu0
      %v449 = vadd.f32 0.0, %v448
      %v450 = vpop.f32.mrb[0].mxu0
      %451 = vmatprep.mubr.f32.mxu0 0.0
      %452 = vmatmul.mubr.f32.gmra.mrb[0].mxu0 %v316
      %v453 = vpop.f32.mrb[0].mxu0
      %v454 = vadd.f32 0.0, %v453
      %v455 = vpop.f32.mrb[0].mxu0
      %456 = vmatprep.mubr.f32.mxu0 0.0
      %457 = vmatmul.mubr.f32.gmra.mrb[0].mxu0 %v319
      %v458 = vpop.f32.mrb[0].mxu0
      %v459 = vadd.f32 0.0, %v458
      %v460 = vpop.f32.mrb[0].mxu0
      %461 = vmatprep.mubr.f32.mxu0 0.0
      %462 = vmatmul.mubr.f32.gmra.mrb[0].mxu0 %v322
      %v463 = vpop.f32.mrb[0].mxu0
      %v464 = vadd.f32 0.0, %v463
      %v465 = vpop.f32.mrb[0].mxu0
      %466 = vmatprep.mubr.f32.mxu0 0.0
      %467 = vmatmul.mubr.f32.gmra.mrb[0].mxu0 %v325
      %v468 = vpop.f32.mrb[0].mxu0
      %v469 = vadd.f32 0.0, %v468
      %v470 = vpop.f32.mrb[0].mxu0
      %471 = vmatprep.mubr.f32.mxu0 0.0
      %472 = vmatmul.mubr.f32.gmra.mrb[0].mxu0 %v328
      %v473 = vpop.f32.mrb[0].mxu0
      %v474 = vadd.f32 0.0, %v473
      %v475 = vpop.f32.mrb[0].mxu0
      %476 = vmatprep.mubr.f32.mxu0 0.0
      %477 = vmatmul.mubr.f32.gmra.mrb[0].mxu0 %v331
      %v478 = vpop.f32.mrb[0].mxu0
      %v479 = vadd.f32 0.0, %v478
      %v480 = vpop.f32.mrb[0].mxu0
      %481 = vdwg.mxu0
      %v483 = vsel %vm284, %v250, 0
      %v486 = vsel %vm284, %v251, 0
      %v489 = vsel %vm284, %v252, 0
      %v492 = vsel %vm284, %v253, 0
      %v495 = vsel %vm284, %v254, 0
      %v498 = vsel %vm284, %v255, 0
      %v501 = vsel %vm284, %v256, 0
      %v504 = vsel %vm284, %v257, 0
      %v507 = vsel %vm284, %v258, 0
      %v510 = vsel %vm284, %v259, 0
      %v513 = vsel %vm284, %v260, 0
      %v516 = vsel %vm284, %v261, 0
      %v519 = vsel %vm284, %v262, 0
      %v522 = vsel %vm284, %v263, 0
      %v525 = vsel %vm284, %v264, 0
      %v528 = vsel %vm284, %v265, 0
      %v531 = vsel %vm333, %v266, 0
      %533 = vmatprep.subr.mxu0 0.0
      %534 = vmatpush1.msra.mxu0 %v531
      %535 = vmatprep.subr.mxu0 0.0
      %536 = vmatpush1.msra.mxu0 0.0
      %537 = vmatprep.subr.mxu0 0.0
      %538 = vmatpush1.msra.mxu0 0.0
      %539 = vmatprep.subr.mxu0 0.0
      %540 = vmatpush1.msra.mxu0 0.0
      %541 = vmatprep.subr.mxu0 0.0
      %542 = vmatpush1.msra.mxu0 0.0
      %543 = vmatprep.subr.mxu0 0.0
      %544 = vmatpush1.msra.mxu0 0.0
      %545 = vmatprep.subr.mxu0 0.0
      %546 = vmatpush1.msra.mxu0 0.0
      %547 = vmatprep.subr.mxu0 0.0
      %548 = vmatpush1.msra.mxu0 0.0
      %549 = vmatprep.subr.mxu0 0.0
      %550 = vmatpush1.msra.mxu0 0.0
      %551 = vmatprep.subr.mxu0 0.0
      %552 = vmatpush1.msra.mxu0 0.0
      %553 = vmatprep.subr.mxu0 0.0
      %554 = vmatpush1.msra.mxu0 0.0
      %555 = vmatprep.subr.mxu0 0.0
      %556 = vmatpush1.msra.mxu0 0.0
      %557 = vmatprep.subr.mxu0 0.0
      %558 = vmatpush1.msra.mxu0 0.0
      %559 = vmatprep.subr.mxu0 0.0
      %560 = vmatpush1.msra.mxu0 0.0
      %561 = vmatprep.subr.mxu0 0.0
      %562 = vmatpush1.msra.mxu0 0.0
      %563 = vmatprep.subr.mxu0 0.0
      %564 = vmatpush1.msra.mxu0 0.0
      %565 = vmatprep.subr.mxu0 0.0
      %566 = vmatpush1.msra.mxu0 0.0
      %567 = vmatprep.subr.mxu0 0.0
      %568 = vmatpush1.msra.mxu0 0.0
      %569 = vmatprep.subr.mxu0 0.0
      %570 = vmatpush1.msra.mxu0 0.0
      %571 = vmatprep.subr.mxu0 0.0
      %572 = vmatpush1.msra.mxu0 0.0
      %573 = vmatprep.subr.mxu0 0.0
      %574 = vmatpush1.msra.mxu0 0.0
      %575 = vmatprep.subr.mxu0 0.0
      %576 = vmatpush1.msra.mxu0 0.0
      %577 = vmatprep.subr.mxu0 0.0
      %578 = vmatpush1.msra.mxu0 0.0
      %579 = vmatprep.subr.mxu0 0.0
      %580 = vmatpush1.msra.mxu0 0.0
      %581 = vmatprep.subr.mxu0 0.0
      %582 = vmatpush1.msra.mxu0 0.0
      %583 = vmatprep.subr.mxu0 0.0
      %584 = vmatpush1.msra.mxu0 0.0
      %585 = vmatprep.subr.mxu0 0.0
      %586 = vmatpush1.msra.mxu0 0.0
      %587 = vmatprep.subr.mxu0 0.0
      %588 = vmatpush1.msra.mxu0 0.0
      %589 = vmatprep.subr.mxu0 0.0
      %590 = vmatpush1.msra.mxu0 0.0
      %591 = vmatprep.subr.mxu0 0.0
      %592 = vmatpush1.msra.mxu0 0.0
      %593 = vmatprep.subr.mxu0 0.0
      %594 = vmatpush1.msra.mxu0 0.0
      %595 = vmatprep.subr.mxu0 0.0
      %596 = vmatpush1.msra.mxu0 0.0
      %597 = vmatprep.mubr.f32.mxu0 0.0
      %598 = vmatmul.mubr.f32.gmra.mrb[0].mxu0 %v483
      %v599 = vpop.f32.mrb[0].mxu0
      %v600 = vadd.f32 %v404, %v599
      %v601 = vpop.f32.mrb[0].mxu0
      %602 = vmatprep.mubr.f32.mxu0 0.0
      %603 = vmatmul.mubr.f32.gmra.mrb[0].mxu0 %v486
      %v604 = vpop.f32.mrb[0].mxu0
      %v605 = vadd.f32 %v409, %v604
      %v606 = vpop.f32.mrb[0].mxu0
      %607 = vmatprep.mubr.f32.mxu0 0.0
      %608 = vmatmul.mubr.f32.gmra.mrb[0].mxu0 %v489
      %v609 = vpop.f32.mrb[0].mxu0
      %v610 = vadd.f32 %v414, %v609
      %v611 = vpop.f32.mrb[0].mxu0
      %612 = vmatprep.mubr.f32.mxu0 0.0
      %613 = vmatmul.mubr.f32.gmra.mrb[0].mxu0 %v492
      %v614 = vpop.f32.mrb[0].mxu0
      %v615 = vadd.f32 %v419, %v614
      %v616 = vpop.f32.mrb[0].mxu0
      %617 = vmatprep.mubr.f32.mxu0 0.0
      %618 = vmatmul.mubr.f32.gmra.mrb[0].mxu0 %v495
      %v619 = vpop.f32.mrb[0].mxu0
      %v620 = vadd.f32 %v424, %v619
      %v621 = vpop.f32.mrb[0].mxu0
      %622 = vmatprep.mubr.f32.mxu0 0.0
      %623 = vmatmul.mubr.f32.gmra.mrb[0].mxu0 %v498
      %v624 = vpop.f32.mrb[0].mxu0
      %v625 = vadd.f32 %v429, %v624
      %v626 = vpop.f32.mrb[0].mxu0
      %627 = vmatprep.mubr.f32.mxu0 0.0
      %628 = vmatmul.mubr.f32.gmra.mrb[0].mxu0 %v501
      %v629 = vpop.f32.mrb[0].mxu0
      %v630 = vadd.f32 %v434, %v629
      %v631 = vpop.f32.mrb[0].mxu0
      %632 = vmatprep.mubr.f32.mxu0 0.0
      %633 = vmatmul.mubr.f32.gmra.mrb[0].mxu0 %v504
      %v634 = vpop.f32.mrb[0].mxu0
      %v635 = vadd.f32 %v439, %v634
      %v636 = vpop.f32.mrb[0].mxu0
      %637 = vmatprep.mubr.f32.mxu0 0.0
      %638 = vmatmul.mubr.f32.gmra.mrb[0].mxu0 %v507
      %v639 = vpop.f32.mrb[0].mxu0
      %v640 = vadd.f32 %v444, %v639
      %v641 = vpop.f32.mrb[0].mxu0
      %642 = vmatprep.mubr.f32.mxu0 0.0
      %643 = vmatmul.mubr.f32.gmra.mrb[0].mxu0 %v510
      %v644 = vpop.f32.mrb[0].mxu0
      %v645 = vadd.f32 %v449, %v644
      %v646 = vpop.f32.mrb[0].mxu0
      %647 = vmatprep.mubr.f32.mxu0 0.0
      %648 = vmatmul.mubr.f32.gmra.mrb[0].mxu0 %v513
      %v649 = vpop.f32.mrb[0].mxu0
      %v650 = vadd.f32 %v454, %v649
      %v651 = vpop.f32.mrb[0].mxu0
      %652 = vmatprep.mubr.f32.mxu0 0.0
      %653 = vmatmul.mubr.f32.gmra.mrb[0].mxu0 %v516
      %v654 = vpop.f32.mrb[0].mxu0
      %v655 = vadd.f32 %v459, %v654
      %v656 = vpop.f32.mrb[0].mxu0
      %657 = vmatprep.mubr.f32.mxu0 0.0
      %658 = vmatmul.mubr.f32.gmra.mrb[0].mxu0 %v519
      %v659 = vpop.f32.mrb[0].mxu0
      %v660 = vadd.f32 %v464, %v659
      %v661 = vpop.f32.mrb[0].mxu0
      %662 = vmatprep.mubr.f32.mxu0 0.0
      %663 = vmatmul.mubr.f32.gmra.mrb[0].mxu0 %v522
      %v664 = vpop.f32.mrb[0].mxu0
      %v665 = vadd.f32 %v469, %v664
      %v666 = vpop.f32.mrb[0].mxu0
      %667 = vmatprep.mubr.f32.mxu0 0.0
      %668 = vmatmul.mubr.f32.gmra.mrb[0].mxu0 %v525
      %v669 = vpop.f32.mrb[0].mxu0
      %v670 = vadd.f32 %v474, %v669
      %v671 = vpop.f32.mrb[0].mxu0
      %672 = vmatprep.mubr.f32.mxu0 0.0
      %673 = vmatmul.mubr.f32.gmra.mrb[0].mxu0 %v528
      %v674 = vpop.f32.mrb[0].mxu0
      %v675 = vadd.f32 %v479, %v674
      %v676 = vpop.f32.mrb[0].mxu0
      %677 = vdwg.mxu0
      %v678 = vld [vmem:[%s4] sm:$0x1]
      %v680 = vlaneseq
      %v681 = vshrl.u32 %v680, 7
      %v682 = vsub.s32 0, %v681
      %v683 = vrot.slane %v678, %v682
      %v685 = vadd.f32 %v600, %v683
      %v686 = vadd.f32 %v605, %v683
      %v687 = vadd.f32 %v610, %v683
      %v688 = vadd.f32 %v615, %v683
      %v689 = vadd.f32 %v620, %v683
      %v690 = vadd.f32 %v625, %v683
      %v691 = vadd.f32 %v630, %v683
      %v692 = vadd.f32 %v635, %v683
      %v693 = vadd.f32 %v640, %v683
      %v694 = vadd.f32 %v645, %v683
      %v695 = vadd.f32 %v650, %v683
      %v696 = vadd.f32 %v655, %v683
      %v697 = vadd.f32 %v660, %v683
      %v698 = vadd.f32 %v665, %v683
      %v699 = vadd.f32 %v670, %v683
      %v700 = vadd.f32 %v675, %v683
      %v701 = vxor.u32 %v685, 2147483648
      %v702 = vxor.u32 %v686, 2147483648
      %v703 = vxor.u32 %v687, 2147483648
      %v704 = vxor.u32 %v688, 2147483648
      %v705 = vxor.u32 %v689, 2147483648
      %v706 = vxor.u32 %v690, 2147483648
      %v707 = vxor.u32 %v691, 2147483648
      %v708 = vxor.u32 %v692, 2147483648
      %v709 = vxor.u32 %v693, 2147483648
      %v710 = vxor.u32 %v694, 2147483648
      %v711 = vxor.u32 %v695, 2147483648
      %v712 = vxor.u32 %v696, 2147483648
      %v713 = vxor.u32 %v697, 2147483648
      %v714 = vxor.u32 %v698, 2147483648
      %v715 = vxor.u32 %v699, 2147483648
      %v716 = vxor.u32 %v700, 2147483648
      %v717 = vmul.f32 %v701, 1.442695
      %v718 = vpow.pop %v717
      %v719 = vmul.f32 %v702, 1.442695
      %v720 = vpow.pop %v719
      %v721 = vmul.f32 %v703, 1.442695
      %v722 = vpow.pop %v721
      %v723 = vmul.f32 %v704, 1.442695
      %v724 = vpow.pop %v723
      %v725 = vmul.f32 %v705, 1.442695
      %v726 = vpow.pop %v725
      %v727 = vmul.f32 %v706, 1.442695
      %v728 = vpow.pop %v727
      %v729 = vmul.f32 %v707, 1.442695
      %v730 = vpow.pop %v729
      %v731 = vmul.f32 %v708, 1.442695
      %v732 = vpow.pop %v731
      %v733 = vmul.f32 %v709, 1.442695
      %v734 = vpow.pop %v733
      %v735 = vmul.f32 %v710, 1.442695
      %v736 = vpow.pop %v735
      %v737 = vmul.f32 %v711, 1.442695
      %v738 = vpow.pop %v737
      %v739 = vmul.f32 %v712, 1.442695
      %v740 = vpow.pop %v739
      %v741 = vmul.f32 %v713, 1.442695
      %v742 = vpow.pop %v741
      %v743 = vmul.f32 %v714, 1.442695
      %v744 = vpow.pop %v743
      %v745 = vmul.f32 %v715, 1.442695
      %v746 = vpow.pop %v745
      %v747 = vmul.f32 %v716, 1.442695
      %v748 = vpow.pop %v747
      %v749 = vadd.f32 %v718, 1.0
      %v750 = vadd.f32 %v720, 1.0
      %v751 = vadd.f32 %v722, 1.0
      %v752 = vadd.f32 %v724, 1.0
      %v753 = vadd.f32 %v726, 1.0
      %v754 = vadd.f32 %v728, 1.0
      %v755 = vadd.f32 %v730, 1.0
      %v756 = vadd.f32 %v732, 1.0
      %v757 = vadd.f32 %v734, 1.0
      %v758 = vadd.f32 %v736, 1.0
      %v759 = vadd.f32 %v738, 1.0
      %v760 = vadd.f32 %v740, 1.0
      %v761 = vadd.f32 %v742, 1.0
      %v762 = vadd.f32 %v744, 1.0
      %v763 = vadd.f32 %v746, 1.0
      %v764 = vadd.f32 %v748, 1.0
      %v765 = vrcp.pop %v749
      %v766 = vmul.f32 1.0, %v765
      %v767 = vrcp.pop %v750
      %v768 = vmul.f32 1.0, %v767
      %v769 = vrcp.pop %v751
      %v770 = vmul.f32 1.0, %v769
      %v771 = vrcp.pop %v752
      %v772 = vmul.f32 1.0, %v771
      %v773 = vrcp.pop %v753
      %v774 = vmul.f32 1.0, %v773
      %v775 = vrcp.pop %v754
      %v776 = vmul.f32 1.0, %v775
      %v777 = vrcp.pop %v755
      %v778 = vmul.f32 1.0, %v777
      %v779 = vrcp.pop %v756
      %v780 = vmul.f32 1.0, %v779
      %v781 = vrcp.pop %v757
      %v782 = vmul.f32 1.0, %v781
      %v783 = vrcp.pop %v758
      %v784 = vmul.f32 1.0, %v783
      %v785 = vrcp.pop %v759
      %v786 = vmul.f32 1.0, %v785
      %v787 = vrcp.pop %v760
      %v788 = vmul.f32 1.0, %v787
      %v789 = vrcp.pop %v761
      %v790 = vmul.f32 1.0, %v789
      %v791 = vrcp.pop %v762
      %v792 = vmul.f32 1.0, %v791
      %v793 = vrcp.pop %v763
      %v794 = vmul.f32 1.0, %v793
      %v795 = vrcp.pop %v764
      %v796 = vmul.f32 1.0, %v795
      %v797 = vmul.f32 %v685, %v766
      %v798 = vmul.f32 %v686, %v768
      %v799 = vmul.f32 %v687, %v770
      %v800 = vmul.f32 %v688, %v772
      %v801 = vmul.f32 %v689, %v774
      %v802 = vmul.f32 %v690, %v776
      %v803 = vmul.f32 %v691, %v778
      %v804 = vmul.f32 %v692, %v780
      %v805 = vmul.f32 %v693, %v782
      %v806 = vmul.f32 %v694, %v784
      %v807 = vmul.f32 %v695, %v786
      %v808 = vmul.f32 %v696, %v788
      %v809 = vmul.f32 %v697, %v790
      %v810 = vmul.f32 %v698, %v792
      %v811 = vmul.f32 %v699, %v794
      %v812 = vmul.f32 %v700, %v796
      %vm813 = vcmask 64512
      %814 = vst.msk [vmem:[%s248] sm:$0xff] %vm813, %v797
      %815 = vst.msk [vmem:[%s248 + $0x8] sm:$0xff] %vm813, %v798
      %816 = vst.msk [vmem:[%s248 + $0x10] sm:$0xff] %vm813, %v799
      %817 = vst.msk [vmem:[%s248 + $0x18] sm:$0xff] %vm813, %v800
      %818 = vst.msk [vmem:[%s248 + $0x20] sm:$0xff] %vm813, %v801
      %819 = vst.msk [vmem:[%s248 + $0x28] sm:$0xff] %vm813, %v802
      %820 = vst.msk [vmem:[%s248 + $0x30] sm:$0xff] %vm813, %v803
      %821 = vst.msk [vmem:[%s248 + $0x38] sm:$0xff] %vm813, %v804
      %822 = vst.msk [vmem:[%s248 + $0x40] sm:$0xff] %vm813, %v805
      %823 = vst.msk [vmem:[%s248 + $0x48] sm:$0xff] %vm813, %v806
      %824 = vst.msk [vmem:[%s248 + $0x50] sm:$0xff] %vm813, %v807
      %825 = vst.msk [vmem:[%s248 + $0x58] sm:$0xff] %vm813, %v808
      %826 = vst.msk [vmem:[%s248 + $0x60] sm:$0xff] %vm813, %v809
      %827 = vst.msk [vmem:[%s248 + $0x68] sm:$0xff] %vm813, %v810
      %828 = vst.msk [vmem:[%s248 + $0x70] sm:$0xff] %vm813, %v811
      %829 = vst.msk [vmem:[%s248 + $0x78] sm:$0xff] %vm813, %v812
      %s830 = smul.u32 16, %s16
      %p831 = scmp.lt.s32.totalorder %s830, 63
      %s832 = scalar_select %p831, %s830, 63
      %s833 = smul.addr %s832, 8
      %s834 = scalar_lea.vmem %s5, %s833
      // Predicated region
      $region41: #{c3_forward.5} parent=39 // pred_check
        %p835 = pneg %p149
      $region42: #{c3_forward.5} parent=39 // pred_check_branch
        %837 = sbr.rel (%p835) target = $region44
      $region43: #{c3_forward.5} parent=39 // pred_region
        %s838 = smul.u32 16, %s16
      $region44: #{c3_forward.5} parent=39 // pred_fallthru
        _
    $region40: #{c3_forward.5} parent=5 // pred_fallthru
      _
    %p839 = scmp.le.s32.totalorder 2, %s11
    // Predicated region
    $region45: #{c3_forward.5} parent=5 // pred_check
      %p840 = pneg %p839
    $region46: #{c3_forward.5} parent=5 // pred_check_branch
      %842 = sbr.rel (%p840) target = $region48
    $region47: #{c3_forward.5} parent=5 // pred_region
      %s843 = ssub.s32 %s11, 2
      // Predicated region
      $region49: #{c3_forward.5} parent=47 // pred_check
        %p844 = pneg %p155
      $region50: #{c3_forward.5} parent=47 // pred_check_branch
        %846 = sbr.rel (%p844) target = $region52
      $region51: #{c3_forward.5} parent=47 // pred_region
        %s847 = smul.u32 16, %s17
        %p848 = scmp.lt.s32.totalorder %s847, 63
        %s849 = scalar_select %p848, %s847, 63
        %s850 = smul.addr %s849, 8
        %s851 = scalar_lea.vmem %s5, %s850
      $region52: #{c3_forward.5} parent=47 // pred_fallthru
        _
    $region48: #{c3_forward.5} parent=5 // pred_fallthru
      _
  $region6: #{c3_forward.5} parent=0 // loop_footer
    %s15 = sadd.s32 1, %s11
  $region7: #{c3_forward.5} parent=0 // loop_footer_branch
    %10 = sbr.rel target = $region3
  $region8: #{c3_forward.5} parent=0 // loop_exit
    _

// kernel: c3_forward.4
$region0: #{c3_forward.4}
  #allocation0 [shape = 'u32[]', space=smem, size = 0x4, offset = 0x4, fixed_abs, tag = 'smem constant byte address 0x4 - core index']
  #allocation1 [shape = 'u32[144,128]{1,0:T(1,128)}', space=vmem, size = 0x12000, scoped, tag = 'internal scratch']
  #allocation2 [shape = 'f32[10,18,4]{2,1,0:T(8,128)}', space=vmem, size = 0x1e000, scoped, tag = 'scratch operand']
  %s0 = inlined_call_operand.vmem [shape: f32[2,16,16,4], index: 0, kind: input, shape index: {}]
  %s1 = inlined_call_operand.vmem [shape: f32[2,2,2,16,4], index: 1, kind: input, shape index: {}]
  %s2 = inlined_call_operand.vmem [shape: f32[4,4], index: 2, kind: input, shape index: {}]
  %s3 = inlined_call_operand.vmem [shape: f32[1,4], index: 3, kind: input, shape index: {}]
  %s4 = inlined_call_operand.vmem [shape: f32[36,4], index: 4, kind: input, shape index: {}]
  %s5 = inlined_call_operand.vmem [shape: f32[1,4], index: 5, kind: input, shape index: {}]
  %s6 = inlined_call_operand.vmem [shape: f32[2,16,16,4], index: 6, kind: output, shape index: {}]
  %s7 = sld [smem:[#allocation0]]
  $region57: #{c3_forward.4} parent=0
    _
  %s9 = ssub.s32 1, %s7
  %s10 = scalar_select 0, %s9, %s7
  loop: start=0, step=1, limit=6
  $region2: #{c3_forward.4} parent=0 // loop_pre_header
    _
  $region3: #{c3_forward.4} parent=0 // loop_header
    %s12 = sphi 0, %s16
    %p13 = scmp.ge.s32.totalorder %s12, 6
    %s19 = sphi 0, %s31
    %s20 = sphi 0, %s27
    %s21 = sphi 0, %s19
    %s22 = sphi 0, %s20
    %s23 = sphi 0, %s21
    %s24 = sphi 0, %s22
    %s36 = sphi 0, %s38
    %s39 = sphi 0, %s36
    %s40 = sphi 0, %s39
    %s56 = sphi 0, %s40
    %s64 = sphi 0, %s66
    %s67 = sphi 0, %s64
    %s68 = sphi 0, %s67
    %s84 = sphi 0, %s68
    %s88 = sphi 0, %s88
    %s90 = sphi 0, %s88
    %s91 = sphi 0, %s90
    %s105 = sphi 0, %s91
    %s109 = sphi 0, %s109
    %s111 = sphi 0, %s109
    %s112 = sphi 0, %s111
    %s126 = sphi 0, %s112
    %s130 = sphi 0, %s130
    %s132 = sphi 0, %s130
    %s133 = sphi 0, %s132
    %s147 = sphi 0, %s133
    %s151 = sphi 0, %s151
    %s153 = sphi 0, %s151
    %s154 = sphi 0, %s153
    %s168 = sphi 0, %s154
    %s176 = sphi 0, %s178
    %s179 = sphi 0, %s176
    %s180 = sphi 0, %s179
    %s196 = sphi 0, %s180
  $region4: #{c3_forward.4} parent=0 // loop_header_branch
    %15 = sbr.rel (%p13) target = $region8
  $region5: #{c3_forward.4} parent=0 // loop_body
    %s17 = ssub.s32 %s12, 1
    %s18 = ssub.s32 %s12, 2
    %s25 = sadd.s32 1, %s20
    %p26 = scmp.ge.s32.totalorder %s25, 2
    %s27 = scalar_select %p26, 0, %s25
    %s28 = sadd.s32 1, %s19
    %s29 = scalar_select %p26, %s28, %s19
    %p30 = scmp.ge.s32.totalorder %s29, 2
    %s31 = scalar_select %p30, 0, %s29
    %s32 = ssub.s32 %s19, %s31
    %s33 = ssub.s32 %s20, %s27
    %s34 = sor.u32 %s32, %s33
    %p35 = scmp.eq.s32.totalorder %s34, 0
    %s37 = sadd.s32 %s36, 1
    %s38 = scalar_select %p35, %s36, %s37
    %p41 = pneg %p35
    %p42 = scmp.eq.s32.totalorder %s12, 3
    %p43 = por %p41, %p42
    %p44 = scmp.ne.s32.totalorder %s36, %s39
    %p45 = scmp.eq.s32.totalorder %s12, 0
    %p46 = por %p44, %p45
    %p47 = scmp.ne.s32.totalorder %s36, %s39
    %p48 = scmp.eq.s32.totalorder %s17, 3
    %p49 = por %p47, %p48
    %p50 = scmp.ne.s32.totalorder %s39, %s40
    %p51 = scmp.eq.s32.totalorder %s17, 0
    %p52 = por %p50, %p51
    %p53 = scmp.ne.s32.totalorder %s39, %s40
    %p54 = scmp.eq.s32.totalorder %s18, 3
    %p55 = por %p53, %p54
    %p57 = scmp.ne.s32.totalorder %s40, %s56
    %p58 = scmp.eq.s32.totalorder %s18, 0
    %p59 = por %p57, %p58
    %s60 = ssub.s32 %s19, %s31
    %s61 = ssub.s32 %s20, %s27
    %s62 = sor.u32 %s60, %s61
    %p63 = scmp.eq.s32.totalorder %s62, 0
    %s65 = sadd.s32 %s64, 1
    %s66 = scalar_select %p63, %s64, %s65
    %p69 = pneg %p63
    %p70 = scmp.eq.s32.totalorder %s12, 3
    %p71 = por %p69, %p70
    %p72 = scmp.ne.s32.totalorder %s64, %s67
    %p73 = scmp.eq.s32.totalorder %s12, 0
    %p74 = por %p72, %p73
    %p75 = scmp.ne.s32.totalorder %s64, %s67
    %p76 = scmp.eq.s32.totalorder %s17, 3
    %p77 = por %p75, %p76
    %p78 = scmp.ne.s32.totalorder %s67, %s68
    %p79 = scmp.eq.s32.totalorder %s17, 0
    %p80 = por %p78, %p79
    %p81 = scmp.ne.s32.totalorder %s67, %s68
    %p82 = scmp.eq.s32.totalorder %s18, 3
    %p83 = por %p81, %p82
    %p85 = scmp.ne.s32.totalorder %s68, %s84
    %p86 = scmp.eq.s32.totalorder %s18, 0
    %p87 = por %p85, %p86
    %s89 = sadd.s32 %s88, 1
    %p92 = scmp.eq.s32.totalorder %s12, 3
    %p93 = scmp.ne.s32.totalorder %s88, %s90
    %p94 = scmp.eq.s32.totalorder %s12, 0
    %p95 = por %p93, %p94
    %p96 = scmp.ne.s32.totalorder %s88, %s90
    %p97 = scmp.eq.s32.totalorder %s17, 3
    %p98 = por %p96, %p97
    %p99 = scmp.ne.s32.totalorder %s90, %s91
    %p100 = scmp.eq.s32.totalorder %s17, 0
    %p101 = por %p99, %p100
    %p102 = scmp.ne.s32.totalorder %s90, %s91
    %p103 = scmp.eq.s32.totalorder %s18, 3
    %p104 = por %p102, %p103
    %p106 = scmp.ne.s32.totalorder %s91, %s105
    %p107 = scmp.eq.s32.totalorder %s18, 0
    %p108 = por %p106, %p107
    %s110 = sadd.s32 %s109, 1
    %p113 = scmp.eq.s32.totalorder %s12, 3
    %p114 = scmp.ne.s32.totalorder %s109, %s111
    %p115 = scmp.eq.s32.totalorder %s12, 0
    %p116 = por %p114, %p115
    %p117 = scmp.ne.s32.totalorder %s109, %s111
    %p118 = scmp.eq.s32.totalorder %s17, 3
    %p119 = por %p117, %p118
    %p120 = scmp.ne.s32.totalorder %s111, %s112
    %p121 = scmp.eq.s32.totalorder %s17, 0
    %p122 = por %p120, %p121
    %p123 = scmp.ne.s32.totalorder %s111, %s112
    %p124 = scmp.eq.s32.totalorder %s18, 3
    %p125 = por %p123, %p124
    %p127 = scmp.ne.s32.totalorder %s112, %s126
    %p128 = scmp.eq.s32.totalorder %s18, 0
    %p129 = por %p127, %p128
    %s131 = sadd.s32 %s130, 1
    %p134 = scmp.eq.s32.totalorder %s12, 3
    %p135 = scmp.ne.s32.totalorder %s130, %s132
    %p136 = scmp.eq.s32.totalorder %s12, 0
    %p137 = por %p135, %p136
    %p138 = scmp.ne.s32.totalorder %s130, %s132
    %p139 = scmp.eq.s32.totalorder %s17, 3
    %p140 = por %p138, %p139
    %p141 = scmp.ne.s32.totalorder %s132, %s133
    %p142 = scmp.eq.s32.totalorder %s17, 0
    %p143 = por %p141, %p142
    %p144 = scmp.ne.s32.totalorder %s132, %s133
    %p145 = scmp.eq.s32.totalorder %s18, 3
    %p146 = por %p144, %p145
    %p148 = scmp.ne.s32.totalorder %s133, %s147
    %p149 = scmp.eq.s32.totalorder %s18, 0
    %p150 = por %p148, %p149
    %s152 = sadd.s32 %s151, 1
    %p155 = scmp.eq.s32.totalorder %s12, 3
    %p156 = scmp.ne.s32.totalorder %s151, %s153
    %p157 = scmp.eq.s32.totalorder %s12, 0
    %p158 = por %p156, %p157
    %p159 = scmp.ne.s32.totalorder %s151, %s153
    %p160 = scmp.eq.s32.totalorder %s17, 3
    %p161 = por %p159, %p160
    %p162 = scmp.ne.s32.totalorder %s153, %s154
    %p163 = scmp.eq.s32.totalorder %s17, 0
    %p164 = por %p162, %p163
    %p165 = scmp.ne.s32.totalorder %s153, %s154
    %p166 = scmp.eq.s32.totalorder %s18, 3
    %p167 = por %p165, %p166
    %p169 = scmp.ne.s32.totalorder %s154, %s168
    %p170 = scmp.eq.s32.totalorder %s18, 0
    %p171 = por %p169, %p170
    %s172 = ssub.s32 %s19, %s31
    %s173 = ssub.s32 %s20, %s27
    %s174 = sor.u32 %s172, %s173
    %p175 = scmp.eq.s32.totalorder %s174, 0
    %s177 = sadd.s32 %s176, 1
    %s178 = scalar_select %p175, %s176, %s177
    %p181 = pneg %p175
    %p182 = scmp.eq.s32.totalorder %s12, 3
    %p183 = por %p181, %p182
    %p184 = scmp.ne.s32.totalorder %s176, %s179
    %p185 = scmp.eq.s32.totalorder %s12, 0
    %p186 = por %p184, %p185
    %p187 = scmp.ne.s32.totalorder %s176, %s179
    %p188 = scmp.eq.s32.totalorder %s17, 3
    %p189 = por %p187, %p188
    %p190 = scmp.ne.s32.totalorder %s179, %s180
    %p191 = scmp.eq.s32.totalorder %s17, 0
    %p192 = por %p190, %p191
    %p193 = scmp.ne.s32.totalorder %s179, %s180
    %p194 = scmp.eq.s32.totalorder %s18, 3
    %p195 = por %p193, %p194
    %p197 = scmp.ne.s32.totalorder %s180, %s196
    %p198 = scmp.eq.s32.totalorder %s18, 0
    %p199 = por %p197, %p198
    %p200 = scmp.le.s32.totalorder 1, %s12
    %p201 = scmp.lt.s32.totalorder %s12, 5
    %p202 = pnand %p200, %p201
    %p203 = pneg %p202
    // Predicated region
    $region9: #{c3_forward.4} parent=5 // pred_check
      _
    $region10: #{c3_forward.4} parent=5 // pred_check_branch
      %205 = sbr.rel (%p202) target = $region12
    $region11: #{c3_forward.4} parent=5 // pred_region
      %s206 = ssub.s32 %s12, 1
      // Predicated region
      $region13: #{c3_forward.4} parent=11 // pred_check
        %p207 = pneg %p101
      $region14: #{c3_forward.4} parent=11 // pred_check_branch
        %209 = sbr.rel (%p207) target = $region16
      $region15: #{c3_forward.4} parent=11 // pred_region
        _
      $region16: #{c3_forward.4} parent=11 // pred_fallthru
        _
      // Predicated region
      $region17: #{c3_forward.4} parent=11 // pred_check
        %p210 = pneg %p122
      $region18: #{c3_forward.4} parent=11 // pred_check_branch
        %212 = sbr.rel (%p210) target = $region20
      $region19: #{c3_forward.4} parent=11 // pred_region
        _
      $region20: #{c3_forward.4} parent=11 // pred_fallthru
        _
      // Predicated region
      $region21: #{c3_forward.4} parent=11 // pred_check
        %p213 = pneg %p143
      $region22: #{c3_forward.4} parent=11 // pred_check_branch
        %215 = sbr.rel (%p213) target = $region24
      $region23: #{c3_forward.4} parent=11 // pred_region
        _
      $region24: #{c3_forward.4} parent=11 // pred_fallthru
        _
      // Predicated region
      $region25: #{c3_forward.4} parent=11 // pred_check
        %p216 = pneg %p164
      $region26: #{c3_forward.4} parent=11 // pred_check_branch
        %218 = sbr.rel (%p216) target = $region28
      $region27: #{c3_forward.4} parent=11 // pred_region
        _
      $region28: #{c3_forward.4} parent=11 // pred_fallthru
        _
    $region12: #{c3_forward.4} parent=5 // pred_fallthru
      _
    %p219 = scmp.lt.s32.totalorder %s12, 4
    // Predicated region
    $region29: #{c3_forward.4} parent=5 // pred_check
      %p220 = pneg %p219
    $region30: #{c3_forward.4} parent=5 // pred_check_branch
      %222 = sbr.rel (%p220) target = $region32
    $region31: #{c3_forward.4} parent=5 // pred_region
      // Predicated region
      $region33: #{c3_forward.4} parent=31 // pred_check
        %p223 = pneg %p46
      $region34: #{c3_forward.4} parent=31 // pred_check_branch
        %225 = sbr.rel (%p223) target = $region36
      $region35: #{c3_forward.4} parent=31 // pred_region
        %s226 = smul.u32 8, %s20
        %p227 = scmp.lt.s32.totalorder %s19, 1
        %s228 = scalar_select %p227, %s19, 1
        %p229 = scmp.lt.s32.totalorder %s226, 15
        %s230 = scalar_select %p229, %s226, 15
        %s231 = smul.addr %s230, 2
        %s232 = smul.addr %s228, 32
        %s233 = sadd.s32 %s231, %s232
        %s234 = smul.addr %s233, 8
        %s235 = scalar_lea.vmem %s0, %s234
        %s236 = smul.u32 8, %s20
      $region36: #{c3_forward.4} parent=31 // pred_fallthru
        _
      // Predicated region
      $region37: #{c3_forward.4} parent=31 // pred_check
        %p237 = pneg %p74
      $region38: #{c3_forward.4} parent=31 // pred_check_branch
        %239 = sbr.rel (%p237) target = $region40
      $region39: #{c3_forward.4} parent=31 // pred_region
        %p240 = scmp.lt.s32.totalorder %s19, 1
        %s241 = scalar_select %p240, %s19, 1
        %p242 = scmp.lt.s32.totalorder %s20, 1
        %s243 = scalar_select %p242, %s20, 1
        %s244 = smul.addr %s243, 4
        %s245 = smul.addr %s241, 8
        %s246 = sadd.s32 %s244, %s245
        %s247 = smul.addr %s246, 8
        %s248 = scalar_lea.vmem %s1, %s247
      $region40: #{c3_forward.4} parent=31 // pred_fallthru
        _
    $region32: #{c3_forward.4} parent=5 // pred_fallthru
      _
    %p249 = scmp.le.s32.totalorder 1, %s12
    %p250 = scmp.lt.s32.totalorder %s12, 5
    %p251 = pnand %p249, %p250
    %p252 = pneg %p251
    // Predicated region
    $region41: #{c3_forward.4} parent=5 // pred_check
      _
    $region42: #{c3_forward.4} parent=5 // pred_check_branch
      %254 = sbr.rel (%p251) target = $region44
    $region43: #{c3_forward.4} parent=5 // pred_region
      %s255 = ssub.s32 %s12, 1
      %s256 = smul.u32 8, %s22
      %p257 = scmp.lt.s32.totalorder %s21, 1
      %s258 = scalar_select %p257, %s21, 1
      %p259 = scmp.lt.s32.totalorder %s256, 15
      %s260 = scalar_select %p259, %s256, 15
      %s261 = smul.addr %s260, 2
      %s262 = smul.addr %s258, 32
      %s263 = sadd.s32 %s261, %s262
      %s264 = smul.addr %s263, 8
      %s265 = scalar_lea.vmem %s0, %s264
      %p266 = pneg %p52
      %p267 = pneg %p49
      %p268 = scmp.lt.s32.totalorder %s21, 1
      %s269 = scalar_select %p268, %s21, 1
      %p270 = scmp.lt.s32.totalorder %s22, 1
      %s271 = scalar_select %p270, %s22, 1
      %s272 = smul.addr %s271, 4
      %s273 = smul.addr %s269, 8
      %s274 = sadd.s32 %s272, %s273
      %s275 = smul.addr %s274, 8
      %s276 = scalar_lea.vmem %s1, %s275
      %p277 = pneg %p80
      %p278 = pneg %p77
      %p279 = pneg %p101
      %p280 = pneg %p98
      %p281 = pneg %p122
      %p282 = pneg %p119
      %p283 = pneg %p143
      %p284 = pneg %p140
      %p285 = pneg %p164
      %p286 = pneg %p161
      %p287 = pneg %p192
      %p288 = pneg %p189
      %s289 = smul.u32 8, %s22
      %p290 = scmp.lt.s32.totalorder %s21, 1
      %s291 = scalar_select %p290, %s21, 1
      %p292 = scmp.lt.s32.totalorder %s289, 15
      %s293 = scalar_select %p292, %s289, 15
      %s294 = smul.addr %s293, 2
      %s295 = smul.addr %s291, 32
      %s296 = sadd.s32 %s294, %s295
      %s297 = smul.addr %s296, 8
      %s298 = scalar_lea.vmem %s6, %s297
      %s299 = smul.u32 8, %s22
      %p300 = scmp.lt.s32.totalorder %s21, 1
      %s301 = scalar_select %p300, %s21, 1
      %p302 = scmp.lt.s32.totalorder %s299, 15
      %s303 = scalar_select %p302, %s299, 15
      %s304 = smul.addr %s303, 2
      %s305 = smul.addr %s301, 32
      %s306 = sadd.s32 %s304, %s305
      %s307 = smul.addr %s306, 8
      %s308 = scalar_lea.vmem %s0, %s307
      %s309 = smul.u32 8, %s22
      %p310 = scmp.lt.s32.totalorder %s21, 1
      %s311 = scalar_select %p310, %s21, 1
      %p312 = scmp.lt.s32.totalorder %s22, 1
      %s313 = scalar_select %p312, %s22, 1
      %s314 = smul.addr %s313, 4
      %s315 = smul.addr %s311, 8
      %s316 = sadd.s32 %s314, %s315
      %s317 = smul.addr %s316, 8
      %s318 = scalar_lea.vmem %s1, %s317
      %s319 = smul.u32 8, %s22
      %p320 = scmp.lt.s32.totalorder %s21, 1
      %s321 = scalar_select %p320, %s21, 1
      %p322 = scmp.lt.s32.totalorder %s319, 15
      %s323 = scalar_select %p322, %s319, 15
      %s324 = smul.addr %s323, 2
      %s325 = smul.addr %s321, 32
      %s326 = sadd.s32 %s324, %s325
      %s327 = smul.addr %s326, 8
      %s328 = scalar_lea.vmem %s6, %s327
      %s329 = smul.u32 8, %s22
      %vm330 = vcmask 24576
      %331 = vst.msk [vmem:[#allocation2] sm:$0x1] %vm330, 0.0
      %332 = vst.msk [vmem:[#allocation2 + $0x18] sm:$0x1] %vm330, 0.0
      %333 = vst.msk [vmem:[#allocation2 + $0x30] sm:$0x1] %vm330, 0.0
      %334 = vst.msk [vmem:[#allocation2 + $0x48] sm:$0x1] %vm330, 0.0
      %335 = vst.msk [vmem:[#allocation2 + $0x60] sm:$0x1] %vm330, 0.0
      %336 = vst.msk [vmem:[#allocation2 + $0x78] sm:$0x1] %vm330, 0.0
      %337 = vst.msk [vmem:[#allocation2 + $0x90] sm:$0x1] %vm330, 0.0
      %338 = vst.msk [vmem:[#allocation2 + $0xa8] sm:$0x1] %vm330, 0.0
      %339 = vst.msk [vmem:[#allocation2 + $0xc0] sm:$0x1] %vm330, 0.0
      %340 = vst.msk [vmem:[#allocation2 + $0xd8] sm:$0x1] %vm330, 0.0
      %341 = vst.msk [vmem:[#allocation2 + $0x11] sm:$0x1] %vm330, 0.0
      %342 = vst.msk [vmem:[#allocation2 + $0x29] sm:$0x1] %vm330, 0.0
      %343 = vst.msk [vmem:[#allocation2 + $0x41] sm:$0x1] %vm330, 0.0
      %344 = vst.msk [vmem:[#allocation2 + $0x59] sm:$0x1] %vm330, 0.0
      %345 = vst.msk [vmem:[#allocation2 + $0x71] sm:$0x1] %vm330, 0.0
      %346 = vst.msk [vmem:[#allocation2 + $0x89] sm:$0x1] %vm330, 0.0
      %347 = vst.msk [vmem:[#allocation2 + $0xa1] sm:$0x1] %vm330, 0.0
      %348 = vst.msk [vmem:[#allocation2 + $0xb9] sm:$0x1] %vm330, 0.0
      %349 = vst.msk [vmem:[#allocation2 + $0xd1] sm:$0x1] %vm330, 0.0
      %350 = vst.msk [vmem:[#allocation2 + $0xe9] sm:$0x1] %vm330, 0.0
      %v351 = vld [vmem:[%s308] sm:$0xff]
      %v352 = vld [vmem:[%s308 + $0x8] sm:$0xff]
      %v353 = vld [vmem:[%s308 + $0x10] sm:$0xff]
      %v354 = vld [vmem:[%s308 + $0x18] sm:$0xff]
      %v355 = vld [vmem:[%s308 + $0x20] sm:$0xff]
      %v356 = vld [vmem:[%s308 + $0x28] sm:$0xff]
      %v357 = vld [vmem:[%s308 + $0x30] sm:$0xff]
      %v358 = vld [vmem:[%s308 + $0x38] sm:$0xff]
      %v359 = vld [vmem:[%s308 + $0x40] sm:$0xff]
      %v360 = vld [vmem:[%s308 + $0x48] sm:$0xff]
      %v361 = vld [vmem:[%s308 + $0x50] sm:$0xff]
      %v362 = vld [vmem:[%s308 + $0x58] sm:$0xff]
      %v363 = vld [vmem:[%s308 + $0x60] sm:$0xff]
      %v364 = vld [vmem:[%s308 + $0x68] sm:$0xff]
      %v365 = vld [vmem:[%s308 + $0x70] sm:$0xff]
      %v366 = vld [vmem:[%s308 + $0x78] sm:$0xff]
      %v367 = vld [vmem:[%s2] sm:$0xf]
      %v368 = vld [vmem:[%s3] sm:$0x1]
      %v370 = vlaneseq
      %v371 = vshrl.u32 %v370, 7
      %v372 = vsub.s32 0, %v371
      %v373 = vrot.slane %v368, %v372
      %vm375 = vcmask 31744
      %v377 = vsel %vm375, %v351, 0
      %v380 = vsel %vm375, %v352, 0
      %v383 = vsel %vm375, %v353, 0
      %v386 = vsel %vm375, %v354, 0
      %v389 = vsel %vm375, %v355, 0
      %v392 = vsel %vm375, %v356, 0
      %v395 = vsel %vm375, %v357, 0
      %v398 = vsel %vm375, %v358, 0
      %v401 = vsel %vm375, %v359, 0
      %v404 = vsel %vm375, %v360, 0
      %v407 = vsel %vm375, %v361, 0
      %v410 = vsel %vm375, %v362, 0
      %v413 = vsel %vm375, %v363, 0
      %v416 = vsel %vm375, %v364, 0
      %v419 = vsel %vm375, %v365, 0
      %v422 = vsel %vm375, %v366, 0
      %vm424 = vcmask 1043456
      %v426 = vsel %vm424, %v367, 0
      %428 = vmatprep.subr.mxu0 0.0
      %429 = vmatpush1.msra.mxu0 %v426
      %430 = vmatprep.subr.mxu0 0.0
      %431 = vmatpush1.msra.mxu0 0.0
      %432 = vmatprep.subr.mxu0 0.0
      %433 = vmatpush1.msra.mxu0 0.0
      %434 = vmatprep.subr.mxu0 0.0
      %435 = vmatpush1.msra.mxu0 0.0
      %436 = vmatprep.subr.mxu0 0.0
      %437 = vmatpush1.msra.mxu0 0.0
      %438 = vmatprep.subr.mxu0 0.0
      %439 = vmatpush1.msra.mxu0 0.0
      %440 = vmatprep.subr.mxu0 0.0
      %441 = vmatpush1.msra.mxu0 0.0
      %442 = vmatprep.subr.mxu0 0.0
      %443 = vmatpush1.msra.mxu0 0.0
      %444 = vmatprep.subr.mxu0 0.0
      %445 = vmatpush1.msra.mxu0 0.0
      %446 = vmatprep.subr.mxu0 0.0
      %447 = vmatpush1.msra.mxu0 0.0
      %448 = vmatprep.subr.mxu0 0.0
      %449 = vmatpush1.msra.mxu0 0.0
      %450 = vmatprep.subr.mxu0 0.0
      %451 = vmatpush1.msra.mxu0 0.0
      %452 = vmatprep.subr.mxu0 0.0
      %453 = vmatpush1.msra.mxu0 0.0
      %454 = vmatprep.subr.mxu0 0.0
      %455 = vmatpush1.msra.mxu0 0.0
      %456 = vmatprep.subr.mxu0 0.0
      %457 = vmatpush1.msra.mxu0 0.0
      %458 = vmatprep.subr.mxu0 0.0
      %459 = vmatpush1.msra.mxu0 0.0
      %460 = vmatprep.subr.mxu0 0.0
      %461 = vmatpush1.msra.mxu0 0.0
      %462 = vmatprep.subr.mxu0 0.0
      %463 = vmatpush1.msra.mxu0 0.0
      %464 = vmatprep.subr.mxu0 0.0
      %465 = vmatpush1.msra.mxu0 0.0
      %466 = vmatprep.subr.mxu0 0.0
      %467 = vmatpush1.msra.mxu0 0.0
      %468 = vmatprep.subr.mxu0 0.0
      %469 = vmatpush1.msra.mxu0 0.0
      %470 = vmatprep.subr.mxu0 0.0
      %471 = vmatpush1.msra.mxu0 0.0
      %472 = vmatprep.subr.mxu0 0.0
      %473 = vmatpush1.msra.mxu0 0.0
      %474 = vmatprep.subr.mxu0 0.0
      %475 = vmatpush1.msra.mxu0 0.0
      %476 = vmatprep.subr.mxu0 0.0
      %477 = vmatpush1.msra.mxu0 0.0
      %478 = vmatprep.subr.mxu0 0.0
      %479 = vmatpush1.msra.mxu0 0.0
      %480 = vmatprep.subr.mxu0 0.0
      %481 = vmatpush1.msra.mxu0 0.0
      %482 = vmatprep.subr.mxu0 0.0
      %483 = vmatpush1.msra.mxu0 0.0
      %484 = vmatprep.subr.mxu0 0.0
      %485 = vmatpush1.msra.mxu0 0.0
      %486 = vmatprep.subr.mxu0 0.0
      %487 = vmatpush1.msra.mxu0 0.0
      %488 = vmatprep.subr.mxu0 0.0
      %489 = vmatpush1.msra.mxu0 0.0
      %490 = vmatprep.subr.mxu0 0.0
      %491 = vmatpush1.msra.mxu0 0.0
      %492 = vmatprep.mubr.f32.mxu0 0.0
      %493 = vmatmul.mubr.f32.gmra.mrb[0].mxu0 %v377
      %v494 = vpop.f32.mrb[0].mxu0
      %v495 = vadd.f32 %v373, %v494
      %v496 = vpop.f32.mrb[0].mxu0
      %497 = vmatprep.mubr.f32.mxu0 0.0
      %498 = vmatmul.mubr.f32.gmra.mrb[0].mxu0 %v380
      %v499 = vpop.f32.mrb[0].mxu0
      %v500 = vadd.f32 %v373, %v499
      %v501 = vpop.f32.mrb[0].mxu0
      %502 = vmatprep.mubr.f32.mxu0 0.0
      %503 = vmatmul.mubr.f32.gmra.mrb[0].mxu0 %v383
      %v504 = vpop.f32.mrb[0].mxu0
      %v505 = vadd.f32 %v373, %v504
      %v506 = vpop.f32.mrb[0].mxu0
      %507 = vmatprep.mubr.f32.mxu0 0.0
      %508 = vmatmul.mubr.f32.gmra.mrb[0].mxu0 %v386
      %v509 = vpop.f32.mrb[0].mxu0
      %v510 = vadd.f32 %v373, %v509
      %v511 = vpop.f32.mrb[0].mxu0
      %512 = vmatprep.mubr.f32.mxu0 0.0
      %513 = vmatmul.mubr.f32.gmra.mrb[0].mxu0 %v389
      %v514 = vpop.f32.mrb[0].mxu0
      %v515 = vadd.f32 %v373, %v514
      %v516 = vpop.f32.mrb[0].mxu0
      %517 = vmatprep.mubr.f32.mxu0 0.0
      %518 = vmatmul.mubr.f32.gmra.mrb[0].mxu0 %v392
      %v519 = vpop.f32.mrb[0].mxu0
      %v520 = vadd.f32 %v373, %v519
      %v521 = vpop.f32.mrb[0].mxu0
      %522 = vmatprep.mubr.f32.mxu0 0.0
      %523 = vmatmul.mubr.f32.gmra.mrb[0].mxu0 %v395
      %v524 = vpop.f32.mrb[0].mxu0
      %v525 = vadd.f32 %v373, %v524
      %v526 = vpop.f32.mrb[0].mxu0
      %527 = vmatprep.mubr.f32.mxu0 0.0
      %528 = vmatmul.mubr.f32.gmra.mrb[0].mxu0 %v398
      %v529 = vpop.f32.mrb[0].mxu0
      %v530 = vadd.f32 %v373, %v529
      %v531 = vpop.f32.mrb[0].mxu0
      %532 = vmatprep.mubr.f32.mxu0 0.0
      %533 = vmatmul.mubr.f32.gmra.mrb[0].mxu0 %v401
      %v534 = vpop.f32.mrb[0].mxu0
      %v535 = vadd.f32 %v373, %v534
      %v536 = vpop.f32.mrb[0].mxu0
      %537 = vmatprep.mubr.f32.mxu0 0.0
      %538 = vmatmul.mubr.f32.gmra.mrb[0].mxu0 %v404
      %v539 = vpop.f32.mrb[0].mxu0
      %v540 = vadd.f32 %v373, %v539
      %v541 = vpop.f32.mrb[0].mxu0
      %542 = vmatprep.mubr.f32.mxu0 0.0
      %543 = vmatmul.mubr.f32.gmra.mrb[0].mxu0 %v407
      %v544 = vpop.f32.mrb[0].mxu0
      %v545 = vadd.f32 %v373, %v544
      %v546 = vpop.f32.mrb[0].mxu0
      %547 = vmatprep.mubr.f32.mxu0 0.0
      %548 = vmatmul.mubr.f32.gmra.mrb[0].mxu0 %v410
      %v549 = vpop.f32.mrb[0].mxu0
      %v550 = vadd.f32 %v373, %v549
      %v551 = vpop.f32.mrb[0].mxu0
      %552 = vmatprep.mubr.f32.mxu0 0.0
      %553 = vmatmul.mubr.f32.gmra.mrb[0].mxu0 %v413
      %v554 = vpop.f32.mrb[0].mxu0
      %v555 = vadd.f32 %v373, %v554
      %v556 = vpop.f32.mrb[0].mxu0
      %557 = vmatprep.mubr.f32.mxu0 0.0
      %558 = vmatmul.mubr.f32.gmra.mrb[0].mxu0 %v416
      %v559 = vpop.f32.mrb[0].mxu0
      %v560 = vadd.f32 %v373, %v559
      %v561 = vpop.f32.mrb[0].mxu0
      %562 = vmatprep.mubr.f32.mxu0 0.0
      %563 = vmatmul.mubr.f32.gmra.mrb[0].mxu0 %v419
      %v564 = vpop.f32.mrb[0].mxu0
      %v565 = vadd.f32 %v373, %v564
      %v566 = vpop.f32.mrb[0].mxu0
      %567 = vmatprep.mubr.f32.mxu0 0.0
      %568 = vmatmul.mubr.f32.gmra.mrb[0].mxu0 %v422
      %v569 = vpop.f32.mrb[0].mxu0
      %v570 = vadd.f32 %v373, %v569
      %v571 = vpop.f32.mrb[0].mxu0
      %572 = vdwg.mxu0
      %v573 = vxor.u32 %v495, 2147483648
      %v574 = vxor.u32 %v500, 2147483648
      %v575 = vxor.u32 %v505, 2147483648
      %v576 = vxor.u32 %v510, 2147483648
      %v577 = vxor.u32 %v515, 2147483648
      %v578 = vxor.u32 %v520, 2147483648
      %v579 = vxor.u32 %v525, 2147483648
      %v580 = vxor.u32 %v530, 2147483648
      %v581 = vxor.u32 %v535, 2147483648
      %v582 = vxor.u32 %v540, 2147483648
      %v583 = vxor.u32 %v545, 2147483648
      %v584 = vxor.u32 %v550, 2147483648
      %v585 = vxor.u32 %v555, 2147483648
      %v586 = vxor.u32 %v560, 2147483648
      %v587 = vxor.u32 %v565, 2147483648
      %v588 = vxor.u32 %v570, 2147483648
      %v589 = vmul.f32 %v573, 1.442695
      %v590 = vpow.pop %v589
      %v591 = vmul.f32 %v574, 1.442695
      %v592 = vpow.pop %v591
      %v593 = vmul.f32 %v575, 1.442695
      %v594 = vpow.pop %v593
      %v595 = vmul.f32 %v576, 1.442695
      %v596 = vpow.pop %v595
      %v597 = vmul.f32 %v577, 1.442695
      %v598 = vpow.pop %v597
      %v599 = vmul.f32 %v578, 1.442695
      %v600 = vpow.pop %v599
      %v601 = vmul.f32 %v579, 1.442695
      %v602 = vpow.pop %v601
      %v603 = vmul.f32 %v580, 1.442695
      %v604 = vpow.pop %v603
      %v605 = vmul.f32 %v581, 1.442695
      %v606 = vpow.pop %v605
      %v607 = vmul.f32 %v582, 1.442695
      %v608 = vpow.pop %v607
      %v609 = vmul.f32 %v583, 1.442695
      %v610 = vpow.pop %v609
      %v611 = vmul.f32 %v584, 1.442695
      %v612 = vpow.pop %v611
      %v613 = vmul.f32 %v585, 1.442695
      %v614 = vpow.pop %v613
      %v615 = vmul.f32 %v586, 1.442695
      %v616 = vpow.pop %v615
      %v617 = vmul.f32 %v587, 1.442695
      %v618 = vpow.pop %v617
      %v619 = vmul.f32 %v588, 1.442695
      %v620 = vpow.pop %v619
      %v621 = vadd.f32 %v590, 1.0
      %v622 = vadd.f32 %v592, 1.0
      %v623 = vadd.f32 %v594, 1.0
      %v624 = vadd.f32 %v596, 1.0
      %v625 = vadd.f32 %v598, 1.0
      %v626 = vadd.f32 %v600, 1.0
      %v627 = vadd.f32 %v602, 1.0
      %v628 = vadd.f32 %v604, 1.0
      %v629 = vadd.f32 %v606, 1.0
      %v630 = vadd.f32 %v608, 1.0
      %v631 = vadd.f32 %v610, 1.0
      %v632 = vadd.f32 %v612, 1.0
      %v633 = vadd.f32 %v614, 1.0
      %v634 = vadd.f32 %v616, 1.0
      %v635 = vadd.f32 %v618, 1.0
      %v636 = vadd.f32 %v620, 1.0
      %v637 = vrcp.pop %v621
      %v638 = vmul.f32 1.0, %v637
      %v639 = vrcp.pop %v622
      %v640 = vmul.f32 1.0, %v639
      %v641 = vrcp.pop %v623
      %v642 = vmul.f32 1.0, %v641
      %v643 = vrcp.pop %v624
      %v644 = vmul.f32 1.0, %v643
      %v645 = vrcp.pop %v625
      %v646 = vmul.f32 1.0, %v645
      %v647 = vrcp.pop %v626
      %v648 = vmul.f32 1.0, %v647
      %v649 = vrcp.pop %v627
      %v650 = vmul.f32 1.0, %v649
      %v651 = vrcp.pop %v628
      %v652 = vmul.f32 1.0, %v651
      %v653 = vrcp.pop %v629
      %v654 = vmul.f32 1.0, %v653
      %v655 = vrcp.pop %v630
      %v656 = vmul.f32 1.0, %v655
      %v657 = vrcp.pop %v631
      %v658 = vmul.f32 1.0, %v657
      %v659 = vrcp.pop %v632
      %v660 = vmul.f32 1.0, %v659
      %v661 = vrcp.pop %v633
      %v662 = vmul.f32 1.0, %v661
      %v663 = vrcp.pop %v634
      %v664 = vmul.f32 1.0, %v663
      %v665 = vrcp.pop %v635
      %v666 = vmul.f32 1.0, %v665
      %v667 = vrcp.pop %v636
      %v668 = vmul.f32 1.0, %v667
      %v669 = vmul.f32 %v495, %v638
      %v670 = vmul.f32 %v500, %v640
      %v671 = vmul.f32 %v505, %v642
      %v672 = vmul.f32 %v510, %v644
      %v673 = vmul.f32 %v515, %v646
      %v674 = vmul.f32 %v520, %v648
      %v675 = vmul.f32 %v525, %v650
      %v676 = vmul.f32 %v530, %v652
      %v677 = vmul.f32 %v535, %v654
      %v678 = vmul.f32 %v540, %v656
      %v679 = vmul.f32 %v545, %v658
      %v680 = vmul.f32 %v550, %v660
      %v681 = vmul.f32 %v555, %v662
      %v682 = vmul.f32 %v560, %v664
      %v683 = vmul.f32 %v565, %v666
      %v684 = vmul.f32 %v570, %v668
      %s685 = scalar_lea.vmem [#allocation2], 24
      %686 = vst.msk [vmem:[%s685 + $0x1] sm:$0xff] %vm375, %v669
      %687 = vst.msk [vmem:[%s685 + $0x9] sm:$0xff] %vm375, %v670
      %688 = vst.msk [vmem:[%s685 + $0x19] sm:$0xff] %vm375, %v671
      %689 = vst.msk [vmem:[%s685 + $0x21] sm:$0xff] %vm375, %v672
      %690 = vst.msk [vmem:[%s685 + $0x31] sm:$0xff] %vm375, %v673
      %691 = vst.msk [vmem:[%s685 + $0x39] sm:$0xff] %vm375, %v674
      %692 = vst.msk [vmem:[%s685 + $0x49] sm:$0xff] %vm375, %v675
      %693 = vst.msk [vmem:[%s685 + $0x51] sm:$0xff] %vm375, %v676
      %694 = vst.msk [vmem:[%s685 + $0x61] sm:$0xff] %vm375, %v677
      %695 = vst.msk [vmem:[%s685 + $0x69] sm:$0xff] %vm375, %v678
      %696 = vst.msk [vmem:[%s685 + $0x79] sm:$0xff] %vm375, %v679
      %697 = vst.msk [vmem:[%s685 + $0x81] sm:$0xff] %vm375, %v680
      %698 = vst.msk [vmem:[%s685 + $0x91] sm:$0xff] %vm375, %v681
      %699 = vst.msk [vmem:[%s685 + $0x99] sm:$0xff] %vm375, %v682
      %700 = vst.msk [vmem:[%s685 + $0xa9] sm:$0xff] %vm375, %v683
      %701 = vst.msk [vmem:[%s685 + $0xb1] sm:$0xff] %vm375, %v684
      %v702 = vld [vmem:[%s318] sm:$0xff]
      %v703 = vld [vmem:[%s318 + $0x8] sm:$0xff]
      %v704 = vld [vmem:[%s318 + $0x10] sm:$0xff]
      %v705 = vld [vmem:[%s318 + $0x18] sm:$0xff]
      %v706 = vld [vmem:[%s2] sm:$0xf]
      %v707 = vld [vmem:[%s3] sm:$0x1]
      %v709 = vlaneseq
      %v710 = vshrl.u32 %v709, 7
      %v711 = vsub.s32 0, %v710
      %v712 = vrot.slane %v707, %v711
      %v715 = vsel %vm375, %v702, 0
      %v718 = vsel %vm375, %v703, 0
      %v721 = vsel %vm375, %v704, 0
      %v724 = vsel %vm375, %v705, 0
      %v727 = vsel %vm424, %v706, 0
      %729 = vmatprep.subr.mxu0 0.0
      %730 = vmatpush1.msra.mxu0 %v727
      %731 = vmatprep.subr.mxu0 0.0
      %732 = vmatpush1.msra.mxu0 0.0
      %733 = vmatprep.subr.mxu0 0.0
      %734 = vmatpush1.msra.mxu0 0.0
      %735 = vmatprep.subr.mxu0 0.0
      %736 = vmatpush1.msra.mxu0 0.0
      %737 = vmatprep.subr.mxu0 0.0
      %738 = vmatpush1.msra.mxu0 0.0
      %739 = vmatprep.subr.mxu0 0.0
      %740 = vmatpush1.msra.mxu0 0.0
      %741 = vmatprep.subr.mxu0 0.0
      %742 = vmatpush1.msra.mxu0 0.0
      %743 = vmatprep.subr.mxu0 0.0
      %744 = vmatpush1.msra.mxu0 0.0
      %745 = vmatprep.subr.mxu0 0.0
      %746 = vmatpush1.msra.mxu0 0.0
      %747 = vmatprep.subr.mxu0 0.0
      %748 = vmatpush1.msra.mxu0 0.0
      %749 = vmatprep.subr.mxu0 0.0
      %750 = vmatpush1.msra.mxu0 0.0
      %751 = vmatprep.subr.mxu0 0.0
      %752 = vmatpush1.msra.mxu0 0.0
      %753 = vmatprep.subr.mxu0 0.0
      %754 = vmatpush1.msra.mxu0 0.0
      %755 = vmatprep.subr.mxu0 0.0
      %756 = vmatpush1.msra.mxu0 0.0
      %757 = vmatprep.subr.mxu0 0.0
      %758 = vmatpush1.msra.mxu0 0.0
      %759 = vmatprep.subr.mxu0 0.0
      %760 = vmatpush1.msra.mxu0 0.0
      %761 = vmatprep.subr.mxu0 0.0
      %762 = vmatpush1.msra.mxu0 0.0
      %763 = vmatprep.subr.mxu0 0.0
      %764 = vmatpush1.msra.mxu0 0.0
      %765 = vmatprep.subr.mxu0 0.0
      %766 = vmatpush1.msra.mxu0 0.0
      %767 = vmatprep.subr.mxu0 0.0
      %768 = vmatpush1.msra.mxu0 0.0
      %769 = vmatprep.subr.mxu0 0.0
      %770 = vmatpush1.msra.mxu0 0.0
      %771 = vmatprep.subr.mxu0 0.0
      %772 = vmatpush1.msra.mxu0 0.0
      %773 = vmatprep.subr.mxu0 0.0
      %774 = vmatpush1.msra.mxu0 0.0
      %775 = vmatprep.subr.mxu0 0.0
      %776 = vmatpush1.msra.mxu0 0.0
      %777 = vmatprep.subr.mxu0 0.0
      %778 = vmatpush1.msra.mxu0 0.0
      %779 = vmatprep.subr.mxu0 0.0
      %780 = vmatpush1.msra.mxu0 0.0
      %781 = vmatprep.subr.mxu0 0.0
      %782 = vmatpush1.msra.mxu0 0.0
      %783 = vmatprep.subr.mxu0 0.0
      %784 = vmatpush1.msra.mxu0 0.0
      %785 = vmatprep.subr.mxu0 0.0
      %786 = vmatpush1.msra.mxu0 0.0
      %787 = vmatprep.subr.mxu0 0.0
      %788 = vmatpush1.msra.mxu0 0.0
      %789 = vmatprep.subr.mxu0 0.0
      %790 = vmatpush1.msra.mxu0 0.0
      %791 = vmatprep.subr.mxu0 0.0
      %792 = vmatpush1.msra.mxu0 0.0
      %793 = vmatprep.mubr.f32.mxu0 0.0
      %794 = vmatmul.mubr.f32.gmra.mrb[0].mxu0 %v715
      %v795 = vpop.f32.mrb[0].mxu0
      %v796 = vadd.f32 %v712, %v795
      %v797 = vpop.f32.mrb[0].mxu0
      %798 = vmatprep.mubr.f32.mxu0 0.0
      %799 = vmatmul.mubr.f32.gmra.mrb[0].mxu0 %v718
      %v800 = vpop.f32.mrb[0].mxu0
      %v801 = vadd.f32 %v712, %v800
      %v802 = vpop.f32.mrb[0].mxu0
      %803 = vmatprep.mubr.f32.mxu0 0.0
      %804 = vmatmul.mubr.f32.gmra.mrb[0].mxu0 %v721
      %v805 = vpop.f32.mrb[0].mxu0
      %v806 = vadd.f32 %v712, %v805
      %v807 = vpop.f32.mrb[0].mxu0
      %808 = vmatprep.mubr.f32.mxu0 0.0
      %809 = vmatmul.mubr.f32.gmra.mrb[0].mxu0 %v724
      %v810 = vpop.f32.mrb[0].mxu0
      %v811 = vadd.f32 %v712, %v810
      %v812 = vpop.f32.mrb[0].mxu0
      %813 = vdwg.mxu0
      %v814 = vxor.u32 %v796, 2147483648
      %v815 = vxor.u32 %v801, 2147483648
      %v816 = vxor.u32 %v806, 2147483648
      %v817 = vxor.u32 %v811, 2147483648
      %v818 = vmul.f32 %v814, 1.442695
      %v819 = vpow.pop %v818
      %v820 = vmul.f32 %v815, 1.442695
      %v821 = vpow.pop %v820
      %v822 = vmul.f32 %v816, 1.442695
      %v823 = vpow.pop %v822
      %v824 = vmul.f32 %v817, 1.442695
      %v825 = vpow.pop %v824
      %v826 = vadd.f32 %v819, 1.0
      %v827 = vadd.f32 %v821, 1.0
      %v828 = vadd.f32 %v823, 1.0
      %v829 = vadd.f32 %v825, 1.0
      %v830 = vrcp.pop %v826
      %v831 = vmul.f32 1.0, %v830
      %v832 = vrcp.pop %v827
      %v833 = vmul.f32 1.0, %v832
      %v834 = vrcp.pop %v828
      %v835 = vmul.f32 1.0, %v834
      %v836 = vrcp.pop %v829
      %v837 = vmul.f32 1.0, %v836
      %v838 = vmul.f32 %v796, %v831
      %v839 = vmul.f32 %v801, %v833
      %v840 = vmul.f32 %v806, %v835
      %v841 = vmul.f32 %v811, %v837
      %p842 = scmp.gt.s32.totalorder %s22, 0
      %s843 = scalar_select %p842, 1.0, 0.0
      %p844 = scmp.lt.s32.totalorder %s22, 1
      %s845 = scalar_select %p844, 1.0, 0.0
      %v846 = vstv %s843
      %v847 = vmul.f32 %v838, %v846
      %v848 = vmul.f32 %v839, %v846
      %849 = vst.msk [vmem:[#allocation2 + $0x1] sm:$0xff] %vm375, %v847
      %850 = vst.msk [vmem:[#allocation2 + $0x9] sm:$0xff] %vm375, %v848
      %v851 = vstv %s845
      %v852 = vmul.f32 %v840, %v851
      %v853 = vmul.f32 %v841, %v851
      %s854 = scalar_lea.vmem [#allocation2], 216
      %855 = vst.msk [vmem:[%s854 + $0x1] sm:$0xff] %vm375, %v852
      %856 = vst.msk [vmem:[%s854 + $0x9] sm:$0xff] %vm375, %v853
      %v857 = vld [vmem:[#allocation2] sm:$0xff]
      %v858 = vld [vmem:[#allocation2 + $0x8] sm:$0xff]
      %v859 = vld [vmem:[#allocation2 + $0x18] sm:$0xff]
      %v860 = vld [vmem:[#allocation2 + $0x20] sm:$0xff]
      %v861 = vld [vmem:[#allocation2 + $0x30] sm:$0xff]
      %v862 = vld [vmem:[#allocation2 + $0x38] sm:$0xff]
      %v863 = vld [vmem:[#allocation2 + $0x48] sm:$0xff]
      %v864 = vld [vmem:[#allocation2 + $0x50] sm:$0xff]
      %v865 = vld [vmem:[#allocation2 + $0x60] sm:$0xff]
      %v866 = vld [vmem:[#allocation2 + $0x68] sm:$0xff]
      %v867 = vld [vmem:[#allocation2 + $0x78] sm:$0xff]
      %v868 = vld [vmem:[#allocation2 + $0x80] sm:$0xff]
      %v869 = vld [vmem:[#allocation2 + $0x90] sm:$0xff]
      %v870 = vld [vmem:[#allocation2 + $0x98] sm:$0xff]
      %v871 = vld [vmem:[#allocation2 + $0xa8] sm:$0xff]
      %v872 = vld [vmem:[#allocation2 + $0xb0] sm:$0xff]
      %v873 = vld [vmem:[%s4] sm:$0xf]
      %v874 = vld [vmem:[#allocation2 + $0x1] sm:$0xff]
      %v875 = vld [vmem:[#allocation2 + $0x9] sm:$0xff]
      %v876 = vld [vmem:[#allocation2 + $0x19] sm:$0xff]
      %v877 = vld [vmem:[#allocation2 + $0x21] sm:$0xff]
      %v878 = vld [vmem:[#allocation2 + $0x31] sm:$0xff]
      %v879 = vld [vmem:[#allocation2 + $0x39] sm:$0xff]
      %v880 = vld [vmem:[#allocation2 + $0x49] sm:$0xff]
      %v881 = vld [vmem:[#allocation2 + $0x51] sm:$0xff]
      %v882 = vld [vmem:[#allocation2 + $0x61] sm:$0xff]
      %v883 = vld [vmem:[#allocation2 + $0x69] sm:$0xff]
      %v884 = vld [vmem:[#allocation2 + $0x79] sm:$0xff]
      %v885 = vld [vmem:[#allocation2 + $0x81] sm:$0xff]
      %v886 = vld [vmem:[#allocation2 + $0x91] sm:$0xff]
      %v887 = vld [vmem:[#allocation2 + $0x99] sm:$0xff]
      %v888 = vld [vmem:[#allocation2 + $0xa9] sm:$0xff]
      %v889 = vld [vmem:[#allocation2 + $0xb1] sm:$0xff]
      %v890 = vld [vmem:[%s4 + $0x4] sm:$0xf]
      %v892 = vsel %vm375, %v874, 0
      %v895 = vsel %vm375, %v875, 0
      %v898 = vsel %vm375, %v876, 0
      %v901 = vsel %vm375, %v877, 0
      %v904 = vsel %vm375, %v878, 0
      %v907 = vsel %vm375, %v879, 0
      %v910 = vsel %vm375, %v880, 0
      %v913 = vsel %vm375, %v881, 0
      %v916 = vsel %vm375, %v882, 0
      %v919 = vsel %vm375, %v883, 0
      %v922 = vsel %vm375, %v884, 0
      %v925 = vsel %vm375, %v885, 0
      %v928 = vsel %vm375, %v886, 0
      %v931 = vsel %vm375, %v887, 0
      %v934 = vsel %vm375, %v888, 0
      %v937 = vsel %vm375, %v889, 0
      %v940 = vsel %vm424, %v890, 0
      %942 = vmatprep.subr.mxu0 0.0
      %943 = vmatpush1.msra.mxu0 %v940
      %944 = vmatprep.subr.mxu0 0.0
      %945 = vmatpush1.msra.mxu0 0.0
      %946 = vmatprep.subr.mxu0 0.0
      %947 = vmatpush1.msra.mxu0 0.0
      %948 = vmatprep.subr.mxu0 0.0
      %949 = vmatpush1.msra.mxu0 0.0
      %950 = vmatprep.subr.mxu0 0.0
      %951 = vmatpush1.msra.mxu0 0.0
      %952 = vmatprep.subr.mxu0 0.0
      %953 = vmatpush1.msra.mxu0 0.0
      %954 = vmatprep.subr.mxu0 0.0
      %955 = vmatpush1.msra.mxu0 0.0
      %956 = vmatprep.subr.mxu0 0.0
      %957 = vmatpush1.msra.mxu0 0.0
      %958 = vmatprep.subr.mxu0 0.0
      %959 = vmatpush1.msra.mxu0 0.0
      %960 = vmatprep.subr.mxu0 0.0
      %961 = vmatpush1.msra.mxu0 0.0
      %962 = vmatprep.subr.mxu0 0.0
      %963 = vmatpush1.msra.mxu0 0.0
      %964 = vmatprep.subr.mxu0 0.0
      %965 = vmatpush1.msra.mxu0 0.0
      %966 = vmatprep.subr.mxu0 0.0
      %967 = vmatpush1.msra.mxu0 0.0
      %968 = vmatprep.subr.mxu0 0.0
      %969 = vmatpush1.msra.mxu0 0.0
      %970 = vmatprep.subr.mxu0 0.0
      %971 = vmatpush1.msra.mxu0 0.0
      %972 = vmatprep.subr.mxu0 0.0
      %973 = vmatpush1.msra.mxu0 0.0
      %974 = vmatprep.subr.mxu0 0.0
      %975 = vmatpush1.msra.mxu0 0.0
      %976 = vmatprep.subr.mxu0 0.0
      %977 = vmatpush1.msra.mxu0 0.0
      %978 = vmatprep.subr.mxu0 0.0
      %979 = vmatpush1.msra.mxu0 0.0
      %980 = vmatprep.subr.mxu0 0.0
      %981 = vmatpush1.msra.mxu0 0.0
      %982 = vmatprep.subr.mxu0 0.0
      %983 = vmatpush1.msra.mxu0 0.0
      %984 = vmatprep.subr.mxu0 0.0
      %985 = vmatpush1.msra.mxu0 0.0
      %986 = vmatprep.subr.mxu0 0.0
      %987 = vmatpush1.msra.mxu0 0.0
      %988 = vmatprep.subr.mxu0 0.0
      %989 = vmatpush1.msra.mxu0 0.0
      %990 = vmatprep.subr.mxu0 0.0
      %991 = vmatpush1.msra.mxu0 0.0
      %992 = vmatprep.subr.mxu0 0.0
      %993 = vmatpush1.msra.mxu0 0.0
      %994 = vmatprep.subr.mxu0 0.0
      %995 = vmatpush1.msra.mxu0 0.0
      %996 = vmatprep.subr.mxu0 0.0
      %997 = vmatpush1.msra.mxu0 0.0
      %998 = vmatprep.subr.mxu0 0.0
      %999 = vmatpush1.msra.mxu0 0.0
      %1000 = vmatprep.subr.mxu0 0.0
      %1001 = vmatpush1.msra.mxu0 0.0
      %1002 = vmatprep.subr.mxu0 0.0
      %1003 = vmatpush1.msra.mxu0 0.0
      %1004 = vmatprep.subr.mxu0 0.0
      %1005 = vmatpush1.msra.mxu0 0.0
      %1006 = vmatprep.mubr.f32.mxu0 0.0
      %1007 = vmatmul.mubr.f32.gmra.mrb[0].mxu0 %v892
      %v1008 = vpop.f32.mrb[0].mxu0
      %v1009 = vadd.f32 0.0, %v1008
      %v1010 = vpop.f32.mrb[0].mxu0
      %1011 = vmatprep.mubr.f32.mxu0 0.0
      %1012 = vmatmul.mubr.f32.gmra.mrb[0].mxu0 %v895
      %v1013 = vpop.f32.mrb[0].mxu0
      %v1014 = vadd.f32 0.0, %v1013
      %v1015 = vpop.f32.mrb[0].mxu0
      %1016 = vmatprep.mubr.f32.mxu0 0.0
      %1017 = vmatmul.mubr.f32.gmra.mrb[0].mxu0 %v898
      %v1018 = vpop.f32.mrb[0].mxu0
      %v1019 = vadd.f32 0.0, %v1018
      %v1020 = vpop.f32.mrb[0].mxu0
      %1021 = vmatprep.mubr.f32.mxu0 0.0
      %1022 = vmatmul.mubr.f32.gmra.mrb[0].mxu0 %v901
      %v1023 = vpop.f32.mrb[0].mxu0
      %v1024 = vadd.f32 0.0, %v1023
      %v1025 = vpop.f32.mrb[0].mxu0
      %1026 = vmatprep.mubr.f32.mxu0 0.0
      %1027 = vmatmul.mubr.f32.gmra.mrb[0].mxu0 %v904
      %v1028 = vpop.f32.mrb[0].mxu0
      %v1029 = vadd.f32 0.0, %v1028
      %v1030 = vpop.f32.mrb[0].mxu0
      %1031 = vmatprep.mubr.f32.mxu0 0.0
      %1032 = vmatmul.mubr.f32.gmra.mrb[0].mxu0 %v907
      %v1033 = vpop.f32.mrb[0].mxu0
      %v1034 = vadd.f32 0.0, %v1033
      %v1035 = vpop.f32.mrb[0].mxu0
      %1036 = vmatprep.mubr.f32.mxu0 0.0
      %1037 = vmatmul.mubr.f32.gmra.mrb[0].mxu0 %v910
      %v1038 = vpop.f32.mrb[0].mxu0
      %v1039 = vadd.f32 0.0, %v1038
      %v1040 = vpop.f32.mrb[0].mxu0
      %1041 = vmatprep.mubr.f32.mxu0 0.0
      %1042 = vmatmul.mubr.f32.gmra.mrb[0].mxu0 %v913
      %v1043 = vpop.f32.mrb[0].mxu0
      %v1044 = vadd.f32 0.0, %v1043
      %v1045 = vpop.f32.mrb[0].mxu0
      %1046 = vmatprep.mubr.f32.mxu0 0.0
      %1047 = vmatmul.mubr.f32.gmra.mrb[0].mxu0 %v916
      %v1048 = vpop.f32.mrb[0].mxu0
      %v1049 = vadd.f32 0.0, %v1048
      %v1050 = vpop.f32.mrb[0].mxu0
      %1051 = vmatprep.mubr.f32.mxu0 0.0
      %1052 = vmatmul.mubr.f32.gmra.mrb[0].mxu0 %v919
      %v1053 = vpop.f32.mrb[0].mxu0
      %v1054 = vadd.f32 0.0, %v1053
      %v1055 = vpop.f32.mrb[0].mxu0
      %1056 = vmatprep.mubr.f32.mxu0 0.0
      %1057 = vmatmul.mubr.f32.gmra.mrb[0].mxu0 %v922
      %v1058 = vpop.f32.mrb[0].mxu0
      %v1059 = vadd.f32 0.0, %v1058
      %v1060 = vpop.f32.mrb[0].mxu0
      %1061 = vmatprep.mubr.f32.mxu0 0.0
      %1062 = vmatmul.mubr.f32.gmra.mrb[0].mxu0 %v925
      %v1063 = vpop.f32.mrb[0].mxu0
      %v1064 = vadd.f32 0.0, %v1063
      %v1065 = vpop.f32.mrb[0].mxu0
      %1066 = vmatprep.mubr.f32.mxu0 0.0
      %1067 = vmatmul.mubr.f32.gmra.mrb[0].mxu0 %v928
      %v1068 = vpop.f32.mrb[0].mxu0
      %v1069 = vadd.f32 0.0, %v1068
      %v1070 = vpop.f32.mrb[0].mxu0
      %1071 = vmatprep.mubr.f32.mxu0 0.0
      %1072 = vmatmul.mubr.f32.gmra.mrb[0].mxu0 %v931
      %v1073 = vpop.f32.mrb[0].mxu0
      %v1074 = vadd.f32 0.0, %v1073
      %v1075 = vpop.f32.mrb[0].mxu0
      %1076 = vmatprep.mubr.f32.mxu0 0.0
      %1077 = vmatmul.mubr.f32.gmra.mrb[0].mxu0 %v934
      %v1078 = vpop.f32.mrb[0].mxu0
      %v1079 = vadd.f32 0.0, %v1078
      %v1080 = vpop.f32.mrb[0].mxu0
      %1081 = vmatprep.mubr.f32.mxu0 0.0
      %1082 = vmatmul.mubr.f32.gmra.mrb[0].mxu0 %v937
      %v1083 = vpop.f32.mrb[0].mxu0
      %v1084 = vadd.f32 0.0, %v1083
      %v1085 = vpop.f32.mrb[0].mxu0
      %1086 = vdwg.mxu0
      %v1088 = vsel %vm375, %v857, 0
      %v1091 = vsel %vm375, %v858, 0
      %v1094 = vsel %vm375, %v859, 0
      %v1097 = vsel %vm375, %v860, 0
      %v1100 = vsel %vm375, %v861, 0
      %v1103 = vsel %vm375, %v862, 0
      %v1106 = vsel %vm375, %v863, 0
      %v1109 = vsel %vm375, %v864, 0
      %v1112 = vsel %vm375, %v865, 0
      %v1115 = vsel %vm375, %v866, 0
      %v1118 = vsel %vm375, %v867, 0
      %v1121 = vsel %vm375, %v868, 0
      %v1124 = vsel %vm375, %v869, 0
      %v1127 = vsel %vm375, %v870, 0
      %v1130 = vsel %vm375, %v871, 0
      %v1133 = vsel %vm375, %v872, 0
      %v1136 = vsel %vm424, %v873, 0
      %1138 = vmatprep.subr.mxu0 0.0
      %1139 = vmatpush1.msra.mxu0 %v1136
      %1140 = vmatprep.subr.mxu0 0.0
      %1141 = vmatpush1.msra.mxu0 0.0
      %1142 = vmatprep.subr.mxu0 0.0
      %1143 = vmatpush1.msra.mxu0 0.0
      %1144 = vmatprep.subr.mxu0 0.0
      %1145 = vmatpush1.msra.mxu0 0.0
      %1146 = vmatprep.subr.mxu0 0.0
      %1147 = vmatpush1.msra.mxu0 0.0
      %1148 = vmatprep.subr.mxu0 0.0
      %1149 = vmatpush1.msra.mxu0 0.0
      %1150 = vmatprep.subr.mxu0 0.0
      %1151 = vmatpush1.msra.mxu0 0.0
      %1152 = vmatprep.subr.mxu0 0.0
      %1153 = vmatpush1.msra.mxu0 0.0
      %1154 = vmatprep.subr.mxu0 0.0
      %1155 = vmatpush1.msra.mxu0 0.0
      %1156 = vmatprep.subr.mxu0 0.0
      %1157 = vmatpush1.msra.mxu0 0.0
      %1158 = vmatprep.subr.mxu0 0.0
      %1159 = vmatpush1.msra.mxu0 0.0
      %1160 = vmatprep.subr.mxu0 0.0
      %1161 = vmatpush1.msra.mxu0 0.0
      %1162 = vmatprep.subr.mxu0 0.0
      %1163 = vmatpush1.msra.mxu0 0.0
      %1164 = vmatprep.subr.mxu0 0.0
      %1165 = vmatpush1.msra.mxu0 0.0
      %1166 = vmatprep.subr.mxu0 0.0
      %1167 = vmatpush1.msra.mxu0 0.0
      %1168 = vmatprep.subr.mxu0 0.0
      %1169 = vmatpush1.msra.mxu0 0.0
      %1170 = vmatprep.subr.mxu0 0.0
      %1171 = vmatpush1.msra.mxu0 0.0
      %1172 = vmatprep.subr.mxu0 0.0
      %1173 = vmatpush1.msra.mxu0 0.0
      %1174 = vmatprep.subr.mxu0 0.0
      %1175 = vmatpush1.msra.mxu0 0.0
      %1176 = vmatprep.subr.mxu0 0.0
      %1177 = vmatpush1.msra.mxu0 0.0
      %1178 = vmatprep.subr.mxu0 0.0
      %1179 = vmatpush1.msra.mxu0 0.0
      %1180 = vmatprep.subr.mxu0 0.0
      %1181 = vmatpush1.msra.mxu0 0.0
      %1182 = vmatprep.subr.mxu0 0.0
      %1183 = vmatpush1.msra.mxu0 0.0
      %1184 = vmatprep.subr.mxu0 0.0
      %1185 = vmatpush1.msra.mxu0 0.0
      %1186 = vmatprep.subr.mxu0 0.0
      %1187 = vmatpush1.msra.mxu0 0.0
      %1188 = vmatprep.subr.mxu0 0.0
      %1189 = vmatpush1.msra.mxu0 0.0
      %1190 = vmatprep.subr.mxu0 0.0
      %1191 = vmatpush1.msra.mxu0 0.0
      %1192 = vmatprep.subr.mxu0 0.0
      %1193 = vmatpush1.msra.mxu0 0.0
      %1194 = vmatprep.subr.mxu0 0.0
      %1195 = vmatpush1.msra.mxu0 0.0
      %1196 = vmatprep.subr.mxu0 0.0
      %1197 = vmatpush1.msra.mxu0 0.0
      %1198 = vmatprep.subr.mxu0 0.0
      %1199 = vmatpush1.msra.mxu0 0.0
      %1200 = vmatprep.subr.mxu0 0.0
      %1201 = vmatpush1.msra.mxu0 0.0
      %1202 = vmatprep.mubr.f32.mxu0 0.0
      %1203 = vmatmul.mubr.f32.gmra.mrb[0].mxu0 %v1088
      %v1204 = vpop.f32.mrb[0].mxu0
      %v1205 = vadd.f32 %v1009, %v1204
      %v1206 = vpop.f32.mrb[0].mxu0
      %1207 = vmatprep.mubr.f32.mxu0 0.0
      %1208 = vmatmul.mubr.f32.gmra.mrb[0].mxu0 %v1091
      %v1209 = vpop.f32.mrb[0].mxu0
      %v1210 = vadd.f32 %v1014, %v1209
      %v1211 = vpop.f32.mrb[0].mxu0
      %1212 = vmatprep.mubr.f32.mxu0 0.0
      %1213 = vmatmul.mubr.f32.gmra.mrb[0].mxu0 %v1094
      %v1214 = vpop.f32.mrb[0].mxu0
      %v1215 = vadd.f32 %v1019, %v1214
      %v1216 = vpop.f32.mrb[0].mxu0
      %1217 = vmatprep.mubr.f32.mxu0 0.0
      %1218 = vmatmul.mubr.f32.gmra.mrb[0].mxu0 %v1097
      %v1219 = vpop.f32.mrb[0].mxu0
      %v1220 = vadd.f32 %v1024, %v1219
      %v1221 = vpop.f32.mrb[0].mxu0
      %1222 = vmatprep.mubr.f32.mxu0 0.0
      %1223 = vmatmul.mubr.f32.gmra.mrb[0].mxu0 %v1100
      %v1224 = vpop.f32.mrb[0].mxu0
      %v1225 = vadd.f32 %v1029, %v1224
      %v1226 = vpop.f32.mrb[0].mxu0
      %1227 = vmatprep.mubr.f32.mxu0 0.0
      %1228 = vmatmul.mubr.f32.gmra.mrb[0].mxu0 %v1103
      %v1229 = vpop.f32.mrb[0].mxu0
      %v1230 = vadd.f32 %v1034, %v1229
      %v1231 = vpop.f32.mrb[0].mxu0
      %1232 = vmatprep.mubr.f32.mxu0 0.0
      %1233 = vmatmul.mubr.f32.gmra.mrb[0].mxu0 %v1106
      %v1234 = vpop.f32.mrb[0].mxu0
      %v1235 = vadd.f32 %v1039, %v1234
      %v1236 = vpop.f32.mrb[0].mxu0
      %1237 = vmatprep.mubr.f32.mxu0 0.0
      %1238 = vmatmul.mubr.f32.gmra.mrb[0].mxu0 %v1109
      %v1239 = vpop.f32.mrb[0].mxu0
      %v1240 = vadd.f32 %v1044, %v1239
      %v1241 = vpop.f32.mrb[0].mxu0
      %1242 = vmatprep.mubr.f32.mxu0 0.0
      %1243 = vmatmul.mubr.f32.gmra.mrb[0].mxu0 %v1112
      %v1244 = vpop.f32.mrb[0].mxu0
      %v1245 = vadd.f32 %v1049, %v1244
      %v1246 = vpop.f32.mrb[0].mxu0
      %1247 = vmatprep.mubr.f32.mxu0 0.0
      %1248 = vmatmul.mubr.f32.gmra.mrb[0].mxu0 %v1115
      %v1249 = vpop.f32.mrb[0].mxu0
      %v1250 = vadd.f32 %v1054, %v1249
      %v1251 = vpop.f32.mrb[0].mxu0
      %1252 = vmatprep.mubr.f32.mxu0 0.0
      %1253 = vmatmul.mubr.f32.gmra.mrb[0].mxu0 %v1118
      %v1254 = vpop.f32.mrb[0].mxu0
      %v1255 = vadd.f32 %v1059, %v1254
      %v1256 = vpop.f32.mrb[0].mxu0
      %1257 = vmatprep.mubr.f32.mxu0 0.0
      %1258 = vmatmul.mubr.f32.gmra.mrb[0].mxu0 %v1121
      %v1259 = vpop.f32.mrb[0].mxu0
      %v1260 = vadd.f32 %v1064, %v1259
      %v1261 = vpop.f32.mrb[0].mxu0
      %1262 = vmatprep.mubr.f32.mxu0 0.0
      %1263 = vmatmul.mubr.f32.gmra.mrb[0].mxu0 %v1124
      %v1264 = vpop.f32.mrb[0].mxu0
      %v1265 = vadd.f32 %v1069, %v1264
      %v1266 = vpop.f32.mrb[0].mxu0
      %1267 = vmatprep.mubr.f32.mxu0 0.0
      %1268 = vmatmul.mubr.f32.gmra.mrb[0].mxu0 %v1127
      %v1269 = vpop.f32.mrb[0].mxu0
      %v1270 = vadd.f32 %v1074, %v1269
      %v1271 = vpop.f32.mrb[0].mxu0
      %1272 = vmatprep.mubr.f32.mxu0 0.0
      %1273 = vmatmul.mubr.f32.gmra.mrb[0].mxu0 %v1130
      %v1274 = vpop.f32.mrb[0].mxu0
      %v1275 = vadd.f32 %v1079, %v1274
      %v1276 = vpop.f32.mrb[0].mxu0
      %1277 = vmatprep.mubr.f32.mxu0 0.0
      %1278 = vmatmul.mubr.f32.gmra.mrb[0].mxu0 %v1133
      %v1279 = vpop.f32.mrb[0].mxu0
      %v1280 = vadd.f32 %v1084, %v1279
      %v1281 = vpop.f32.mrb[0].mxu0
      %1282 = vdwg.mxu0
      %v1283 = vld [vmem:[#allocation2 + $0x2] sm:$0xff]
      %v1284 = vld [vmem:[#allocation2 + $0xa] sm:$0xff]
      %v1285 = vld [vmem:[#allocation2 + $0x1a] sm:$0xff]
      %v1286 = vld [vmem:[#allocation2 + $0x22] sm:$0xff]
      %v1287 = vld [vmem:[#allocation2 + $0x32] sm:$0xff]
      %v1288 = vld [vmem:[#allocation2 + $0x3a] sm:$0xff]
      %v1289 = vld [vmem:[#allocation2 + $0x4a] sm:$0xff]
      %v1290 = vld [vmem:[#allocation2 + $0x52] sm:$0xff]
      %v1291 = vld [vmem:[#allocation2 + $0x62] sm:$0xff]
      %v1292 = vld [vmem:[#allocation2 + $0x6a] sm:$0xff]
      %v1293 = vld [vmem:[#allocation2 + $0x7a] sm:$0xff]
      %v1294 = vld [vmem:[#allocation2 + $0x82] sm:$0xff]
      %v1295 = vld [vmem:[#allocation2 + $0x92] sm:$0xff]
      %v1296 = vld [vmem:[#allocation2 + $0x9a] sm:$0xff]
      %v1297 = vld [vmem:[#allocation2 + $0xaa] sm:$0xff]
      %v1298 = vld [vmem:[#allocation2 + $0xb2] sm:$0xff]
      %v1299 = vld [vmem:[%s4 + $0x8] sm:$0xf]
      %v1301 = vsel %vm375, %v1283, 0
      %v1304 = vsel %vm375, %v1284, 0
      %v1307 = vsel %vm375, %v1285, 0
      %v1310 = vsel %vm375, %v1286, 0
      %v1313 = vsel %vm375, %v1287, 0
      %v1316 = vsel %vm375, %v1288, 0
      %v1319 = vsel %vm375, %v1289, 0
      %v1322 = vsel %vm375, %v1290, 0
      %v1325 = vsel %vm375, %v1291, 0
      %v1328 = vsel %vm375, %v1292, 0
      %v1331 = vsel %vm375, %v1293, 0
      %v1334 = vsel %vm375, %v1294, 0
      %v1337 = vsel %vm375, %v1295, 0
      %v1340 = vsel %vm375, %v1296, 0
      %v1343 = vsel %vm375, %v1297, 0
      %v1346 = vsel %vm375, %v1298, 0
      %v1349 = vsel %vm424, %v1299, 0
      %1351 = vmatprep.subr.mxu0 0.0
      %1352 = vmatpush1.msra.mxu0 %v1349
      %1353 = vmatprep.subr.mxu0 0.0
      %1354 = vmatpush1.msra.mxu0 0.0
      %1355 = vmatprep.subr.mxu0 0.0
      %1356 = vmatpush1.msra.mxu0 0.0
      %1357 = vmatprep.subr.mxu0 0.0
      %1358 = vmatpush1.msra.mxu0 0.0
      %1359 = vmatprep.subr.mxu0 0.0
      %1360 = vmatpush1.msra.mxu0 0.0
      %1361 = vmatprep.subr.mxu0 0.0
      %1362 = vmatpush1.msra.mxu0 0.0
      %1363 = vmatprep.subr.mxu0 0.0
      %1364 = vmatpush1.msra.mxu0 0.0
      %1365 = vmatprep.subr.mxu0 0.0
      %1366 = vmatpush1.msra.mxu0 0.0
      %1367 = vmatprep.subr.mxu0 0.0
      %1368 = vmatpush1.msra.mxu0 0.0
      %1369 = vmatprep.subr.mxu0 0.0
      %1370 = vmatpush1.msra.mxu0 0.0
      %1371 = vmatprep.subr.mxu0 0.0
      %1372 = vmatpush1.msra.mxu0 0.0
      %1373 = vmatprep.subr.mxu0 0.0
      %1374 = vmatpush1.msra.mxu0 0.0
      %1375 = vmatprep.subr.mxu0 0.0
      %1376 = vmatpush1.msra.mxu0 0.0
      %1377 = vmatprep.subr.mxu0 0.0
      %1378 = vmatpush1.msra.mxu0 0.0
      %1379 = vmatprep.subr.mxu0 0.0
      %1380 = vmatpush1.msra.mxu0 0.0
      %1381 = vmatprep.subr.mxu0 0.0
      %1382 = vmatpush1.msra.mxu0 0.0
      %1383 = vmatprep.subr.mxu0 0.0
      %1384 = vmatpush1.msra.mxu0 0.0
      %1385 = vmatprep.subr.mxu0 0.0
      %1386 = vmatpush1.msra.mxu0 0.0
      %1387 = vmatprep.subr.mxu0 0.0
      %1388 = vmatpush1.msra.mxu0 0.0
      %1389 = vmatprep.subr.mxu0 0.0
      %1390 = vmatpush1.msra.mxu0 0.0
      %1391 = vmatprep.subr.mxu0 0.0
      %1392 = vmatpush1.msra.mxu0 0.0
      %1393 = vmatprep.subr.mxu0 0.0
      %1394 = vmatpush1.msra.mxu0 0.0
      %1395 = vmatprep.subr.mxu0 0.0
      %1396 = vmatpush1.msra.mxu0 0.0
      %1397 = vmatprep.subr.mxu0 0.0
      %1398 = vmatpush1.msra.mxu0 0.0
      %1399 = vmatprep.subr.mxu0 0.0
      %1400 = vmatpush1.msra.mxu0 0.0
      %1401 = vmatprep.subr.mxu0 0.0
      %1402 = vmatpush1.msra.mxu0 0.0
      %1403 = vmatprep.subr.mxu0 0.0
      %1404 = vmatpush1.msra.mxu0 0.0
      %1405 = vmatprep.subr.mxu0 0.0
      %1406 = vmatpush1.msra.mxu0 0.0
      %1407 = vmatprep.subr.mxu0 0.0
      %1408 = vmatpush1.msra.mxu0 0.0
      %1409 = vmatprep.subr.mxu0 0.0
      %1410 = vmatpush1.msra.mxu0 0.0
      %1411 = vmatprep.subr.mxu0 0.0
      %1412 = vmatpush1.msra.mxu0 0.0
      %1413 = vmatprep.subr.mxu0 0.0
      %1414 = vmatpush1.msra.mxu0 0.0
      %1415 = vmatprep.mubr.f32.mxu0 0.0
      %1416 = vmatmul.mubr.f32.gmra.mrb[0].mxu0 %v1301
      %v1417 = vpop.f32.mrb[0].mxu0
      %v1418 = vadd.f32 0.0, %v1417
      %v1419 = vpop.f32.mrb[0].mxu0
      %1420 = vmatprep.mubr.f32.mxu0 0.0
      %1421 = vmatmul.mubr.f32.gmra.mrb[0].mxu0 %v1304
      %v1422 = vpop.f32.mrb[0].mxu0
      %v1423 = vadd.f32 0.0, %v1422
      %v1424 = vpop.f32.mrb[0].mxu0
      %1425 = vmatprep.mubr.f32.mxu0 0.0
      %1426 = vmatmul.mubr.f32.gmra.mrb[0].mxu0 %v1307
      %v1427 = vpop.f32.mrb[0].mxu0
      %v1428 = vadd.f32 0.0, %v1427
      %v1429 = vpop.f32.mrb[0].mxu0
      %1430 = vmatprep.mubr.f32.mxu0 0.0
      %1431 = vmatmul.mubr.f32.gmra.mrb[0].mxu0 %v1310
      %v1432 = vpop.f32.mrb[0].mxu0
      %v1433 = vadd.f32 0.0, %v1432
      %v1434 = vpop.f32.mrb[0].mxu0
      %1435 = vmatprep.mubr.f32.mxu0 0.0
      %1436 = vmatmul.mubr.f32.gmra.mrb[0].mxu0 %v1313
      %v1437 = vpop.f32.mrb[0].mxu0
      %v1438 = vadd.f32 0.0, %v1437
      %v1439 = vpop.f32.mrb[0].mxu0
      %1440 = vmatprep.mubr.f32.mxu0 0.0
      %1441 = vmatmul.mubr.f32.gmra.mrb[0].mxu0 %v1316
      %v1442 = vpop.f32.mrb[0].mxu0
      %v1443 = vadd.f32 0.0, %v1442
      %v1444 = vpop.f32.mrb[0].mxu0
      %1445 = vmatprep.mubr.f32.mxu0 0.0
      %1446 = vmatmul.mubr.f32.gmra.mrb[0].mxu0 %v1319
      %v1447 = vpop.f32.mrb[0].mxu0
      %v1448 = vadd.f32 0.0, %v1447
      %v1449 = vpop.f32.mrb[0].mxu0
      %1450 = vmatprep.mubr.f32.mxu0 0.0
      %1451 = vmatmul.mubr.f32.gmra.mrb[0].mxu0 %v1322
      %v1452 = vpop.f32.mrb[0].mxu0
      %v1453 = vadd.f32 0.0, %v1452
      %v1454 = vpop.f32.mrb[0].mxu0
      %1455 = vmatprep.mubr.f32.mxu0 0.0
      %1456 = vmatmul.mubr.f32.gmra.mrb[0].mxu0 %v1325
      %v1457 = vpop.f32.mrb[0].mxu0
      %v1458 = vadd.f32 0.0, %v1457
      %v1459 = vpop.f32.mrb[0].mxu0
      %1460 = vmatprep.mubr.f32.mxu0 0.0
      %1461 = vmatmul.mubr.f32.gmra.mrb[0].mxu0 %v1328
      %v1462 = vpop.f32.mrb[0].mxu0
      %v1463 = vadd.f32 0.0, %v1462
      %v1464 = vpop.f32.mrb[0].mxu0
      %1465 = vmatprep.mubr.f32.mxu0 0.0
      %1466 = vmatmul.mubr.f32.gmra.mrb[0].mxu0 %v1331
      %v1467 = vpop.f32.mrb[0].mxu0
      %v1468 = vadd.f32 0.0, %v1467
      %v1469 = vpop.f32.mrb[0].mxu0
      %1470 = vmatprep.mubr.f32.mxu0 0.0
      %1471 = vmatmul.mubr.f32.gmra.mrb[0].mxu0 %v1334
      %v1472 = vpop.f32.mrb[0].mxu0
      %v1473 = vadd.f32 0.0, %v1472
      %v1474 = vpop.f32.mrb[0].mxu0
      %1475 = vmatprep.mubr.f32.mxu0 0.0
      %1476 = vmatmul.mubr.f32.gmra.mrb[0].mxu0 %v1337
      %v1477 = vpop.f32.mrb[0].mxu0
      %v1478 = vadd.f32 0.0, %v1477
      %v1479 = vpop.f32.mrb[0].mxu0
      %1480 = vmatprep.mubr.f32.mxu0 0.0
      %1481 = vmatmul.mubr.f32.gmra.mrb[0].mxu0 %v1340
      %v1482 = vpop.f32.mrb[0].mxu0
      %v1483 = vadd.f32 0.0, %v1482
      %v1484 = vpop.f32.mrb[0].mxu0
      %1485 = vmatprep.mubr.f32.mxu0 0.0
      %1486 = vmatmul.mubr.f32.gmra.mrb[0].mxu0 %v1343
      %v1487 = vpop.f32.mrb[0].mxu0
      %v1488 = vadd.f32 0.0, %v1487
      %v1489 = vpop.f32.mrb[0].mxu0
      %1490 = vmatprep.mubr.f32.mxu0 0.0
      %1491 = vmatmul.mubr.f32.gmra.mrb[0].mxu0 %v1346
      %v1492 = vpop.f32.mrb[0].mxu0
      %v1493 = vadd.f32 0.0, %v1492
      %v1494 = vpop.f32.mrb[0].mxu0
      %1495 = vdwg.mxu0
      %v1496 = vadd.f32 %v1205, %v1418
      %v1497 = vadd.f32 %v1210, %v1423
      %v1498 = vadd.f32 %v1215, %v1428
      %v1499 = vadd.f32 %v1220, %v1433
      %v1500 = vadd.f32 %v1225, %v1438
      %v1501 = vadd.f32 %v1230, %v1443
      %v1502 = vadd.f32 %v1235, %v1448
      %v1503 = vadd.f32 %v1240, %v1453
      %v1504 = vadd.f32 %v1245, %v1458
      %v1505 = vadd.f32 %v1250, %v1463
      %v1506 = vadd.f32 %v1255, %v1468
      %v1507 = vadd.f32 %v1260, %v1473
      %v1508 = vadd.f32 %v1265, %v1478
      %v1509 = vadd.f32 %v1270, %v1483
      %v1510 = vadd.f32 %v1275, %v1488
      %v1511 = vadd.f32 %v1280, %v1493
      %v1512 = vld [vmem:[%s685] sm:$0xff]
      %v1513 = vld [vmem:[%s685 + $0x8] sm:$0xff]
      %v1514 = vld [vmem:[%s685 + $0x18] sm:$0xff]
      %v1515 = vld [vmem:[%s685 + $0x20] sm:$0xff]
      %v1516 = vld [vmem:[%s685 + $0x30] sm:$0xff]
      %v1517 = vld [vmem:[%s685 + $0x38] sm:$0xff]
      %v1518 = vld [vmem:[%s685 + $0x48] sm:$0xff]
      %v1519 = vld [vmem:[%s685 + $0x50] sm:$0xff]
      %v1520 = vld [vmem:[%s685 + $0x60] sm:$0xff]
      %v1521 = vld [vmem:[%s685 + $0x68] sm:$0xff]
      %v1522 = vld [vmem:[%s685 + $0x78] sm:$0xff]
      %v1523 = vld [vmem:[%s685 + $0x80] sm:$0xff]
      %v1524 = vld [vmem:[%s685 + $0x90] sm:$0xff]
      %v1525 = vld [vmem:[%s685 + $0x98] sm:$0xff]
      %v1526 = vld [vmem:[%s685 + $0xa8] sm:$0xff]
      %v1527 = vld [vmem:[%s685 + $0xb0] sm:$0xff]
      %v1528 = vld [vmem:[%s4 + $0xc] sm:$0xf]
      %v1530 = vsel %vm375, %v1512, 0
      %v1533 = vsel %vm375, %v1513, 0
      %v1536 = vsel %vm375, %v1514, 0
      %v1539 = vsel %vm375, %v1515, 0
      %v1542 = vsel %vm375, %v1516, 0
      %v1545 = vsel %vm375, %v1517, 0
      %v1548 = vsel %vm375, %v1518, 0
      %v1551 = vsel %vm375, %v1519, 0
      %v1554 = vsel %vm375, %v1520, 0
      %v1557 = vsel %vm375, %v1521, 0
      %v1560 = vsel %vm375, %v1522, 0
      %v1563 = vsel %vm375, %v1523, 0
      %v1566 = vsel %vm375, %v1524, 0
      %v1569 = vsel %vm375, %v1525, 0
      %v1572 = vsel %vm375, %v1526, 0
      %v1575 = vsel %vm375, %v1527, 0
      %v1578 = vsel %vm424, %v1528, 0
      %1580 = vmatprep.subr.mxu0 0.0
      %1581 = vmatpush1.msra.mxu0 %v1578
      %1582 = vmatprep.subr.mxu0 0.0
      %1583 = vmatpush1.msra.mxu0 0.0
      %1584 = vmatprep.subr.mxu0 0.0
      %1585 = vmatpush1.msra.mxu0 0.0
      %1586 = vmatprep.subr.mxu0 0.0
      %1587 = vmatpush1.msra.mxu0 0.0
      %1588 = vmatprep.subr.mxu0 0.0
      %1589 = vmatpush1.msra.mxu0 0.0
      %1590 = vmatprep.subr.mxu0 0.0
      %1591 = vmatpush1.msra.mxu0 0.0
      %1592 = vmatprep.subr.mxu0 0.0
      %1593 = vmatpush1.msra.mxu0 0.0
      %1594 = vmatprep.subr.mxu0 0.0
      %1595 = vmatpush1.msra.mxu0 0.0
      %1596 = vmatprep.subr.mxu0 0.0
      %1597 = vmatpush1.msra.mxu0 0.0
      %1598 = vmatprep.subr.mxu0 0.0
      %1599 = vmatpush1.msra.mxu0 0.0
      %1600 = vmatprep.subr.mxu0 0.0
      %1601 = vmatpush1.msra.mxu0 0.0
      %1602 = vmatprep.subr.mxu0 0.0
      %1603 = vmatpush1.msra.mxu0 0.0
      %1604 = vmatprep.subr.mxu0 0.0
      %1605 = vmatpush1.msra.mxu0 0.0
      %1606 = vmatprep.subr.mxu0 0.0
      %1607 = vmatpush1.msra.mxu0 0.0
      %1608 = vmatprep.subr.mxu0 0.0
      %1609 = vmatpush1.msra.mxu0 0.0
      %1610 = vmatprep.subr.mxu0 0.0
      %1611 = vmatpush1.msra.mxu0 0.0
      %1612 = vmatprep.subr.mxu0 0.0
      %1613 = vmatpush1.msra.mxu0 0.0
      %1614 = vmatprep.subr.mxu0 0.0
      %1615 = vmatpush1.msra.mxu0 0.0
      %1616 = vmatprep.subr.mxu0 0.0
      %1617 = vmatpush1.msra.mxu0 0.0
      %1618 = vmatprep.subr.mxu0 0.0
      %1619 = vmatpush1.msra.mxu0 0.0
      %1620 = vmatprep.subr.mxu0 0.0
      %1621 = vmatpush1.msra.mxu0 0.0
      %1622 = vmatprep.subr.mxu0 0.0
      %1623 = vmatpush1.msra.mxu0 0.0
      %1624 = vmatprep.subr.mxu0 0.0
      %1625 = vmatpush1.msra.mxu0 0.0
      %1626 = vmatprep.subr.mxu0 0.0
      %1627 = vmatpush1.msra.mxu0 0.0
      %1628 = vmatprep.subr.mxu0 0.0
      %1629 = vmatpush1.msra.mxu0 0.0
      %1630 = vmatprep.subr.mxu0 0.0
      %1631 = vmatpush1.msra.mxu0 0.0
      %1632 = vmatprep.subr.mxu0 0.0
      %1633 = vmatpush1.msra.mxu0 0.0
      %1634 = vmatprep.subr.mxu0 0.0
      %1635 = vmatpush1.msra.mxu0 0.0
      %1636 = vmatprep.subr.mxu0 0.0
      %1637 = vmatpush1.msra.mxu0 0.0
      %1638 = vmatprep.subr.mxu0 0.0
      %1639 = vmatpush1.msra.mxu0 0.0
      %1640 = vmatprep.subr.mxu0 0.0
      %1641 = vmatpush1.msra.mxu0 0.0
      %1642 = vmatprep.subr.mxu0 0.0
      %1643 = vmatpush1.msra.mxu0 0.0
      %1644 = vmatprep.mubr.f32.mxu0 0.0
      %1645 = vmatmul.mubr.f32.gmra.mrb[0].mxu0 %v1530
      %v1646 = vpop.f32.mrb[0].mxu0
      %v1647 = vadd.f32 0.0, %v1646
      %v1648 = vpop.f32.mrb[0].mxu0
      %1649 = vmatprep.mubr.f32.mxu0 0.0
      %1650 = vmatmul.mubr.f32.gmra.mrb[0].mxu0 %v1533
      %v1651 = vpop.f32.mrb[0].mxu0
      %v1652 = vadd.f32 0.0, %v1651
      %v1653 = vpop.f32.mrb[0].mxu0
      %1654 = vmatprep.mubr.f32.mxu0 0.0
      %1655 = vmatmul.mubr.f32.gmra.mrb[0].mxu0 %v1536
      %v1656 = vpop.f32.mrb[0].mxu0
      %v1657 = vadd.f32 0.0, %v1656
      %v1658 = vpop.f32.mrb[0].mxu0
      %1659 = vmatprep.mubr.f32.mxu0 0.0
      %1660 = vmatmul.mubr.f32.gmra.mrb[0].mxu0 %v1539
      %v1661 = vpop.f32.mrb[0].mxu0
      %v1662 = vadd.f32 0.0, %v1661
      %v1663 = vpop.f32.mrb[0].mxu0
      %1664 = vmatprep.mubr.f32.mxu0 0.0
      %1665 = vmatmul.mubr.f32.gmra.mrb[0].mxu0 %v1542
      %v1666 = vpop.f32.mrb[0].mxu0
      %v1667 = vadd.f32 0.0, %v1666
      %v1668 = vpop.f32.mrb[0].mxu0
      %1669 = vmatprep.mubr.f32.mxu0 0.0
      %1670 = vmatmul.mubr.f32.gmra.mrb[0].mxu0 %v1545
      %v1671 = vpop.f32.mrb[0].mxu0
      %v1672 = vadd.f32 0.0, %v1671
      %v1673 = vpop.f32.mrb[0].mxu0
      %1674 = vmatprep.mubr.f32.mxu0 0.0
      %1675 = vmatmul.mubr.f32.gmra.mrb[0].mxu0 %v1548
      %v1676 = vpop.f32.mrb[0].mxu0
      %v1677 = vadd.f32 0.0, %v1676
      %v1678 = vpop.f32.mrb[0].mxu0
      %1679 = vmatprep.mubr.f32.mxu0 0.0
      %1680 = vmatmul.mubr.f32.gmra.mrb[0].mxu0 %v1551
      %v1681 = vpop.f32.mrb[0].mxu0
      %v1682 = vadd.f32 0.0, %v1681
      %v1683 = vpop.f32.mrb[0].mxu0
      %1684 = vmatprep.mubr.f32.mxu0 0.0
      %1685 = vmatmul.mubr.f32.gmra.mrb[0].mxu0 %v1554
      %v1686 = vpop.f32.mrb[0].mxu0
      %v1687 = vadd.f32 0.0, %v1686
      %v1688 = vpop.f32.mrb[0].mxu0
      %1689 = vmatprep.mubr.f32.mxu0 0.0
      %1690 = vmatmul.mubr.f32.gmra.mrb[0].mxu0 %v1557
      %v1691 = vpop.f32.mrb[0].mxu0
      %v1692 = vadd.f32 0.0, %v1691
      %v1693 = vpop.f32.mrb[0].mxu0
      %1694 = vmatprep.mubr.f32.mxu0 0.0
      %1695 = vmatmul.mubr.f32.gmra.mrb[0].mxu0 %v1560
      %v1696 = vpop.f32.mrb[0].mxu0
      %v1697 = vadd.f32 0.0, %v1696
      %v1698 = vpop.f32.mrb[0].mxu0
      %1699 = vmatprep.mubr.f32.mxu0 0.0
      %1700 = vmatmul.mubr.f32.gmra.mrb[0].mxu0 %v1563
      %v1701 = vpop.f32.mrb[0].mxu0
      %v1702 = vadd.f32 0.0, %v1701
      %v1703 = vpop.f32.mrb[0].mxu0
      %1704 = vmatprep.mubr.f32.mxu0 0.0
      %1705 = vmatmul.mubr.f32.gmra.mrb[0].mxu0 %v1566
      %v1706 = vpop.f32.mrb[0].mxu0
      %v1707 = vadd.f32 0.0, %v1706
      %v1708 = vpop.f32.mrb[0].mxu0
      %1709 = vmatprep.mubr.f32.mxu0 0.0
      %1710 = vmatmul.mubr.f32.gmra.mrb[0].mxu0 %v1569
      %v1711 = vpop.f32.mrb[0].mxu0
      %v1712 = vadd.f32 0.0, %v1711
      %v1713 = vpop.f32.mrb[0].mxu0
      %1714 = vmatprep.mubr.f32.mxu0 0.0
      %1715 = vmatmul.mubr.f32.gmra.mrb[0].mxu0 %v1572
      %v1716 = vpop.f32.mrb[0].mxu0
      %v1717 = vadd.f32 0.0, %v1716
      %v1718 = vpop.f32.mrb[0].mxu0
      %1719 = vmatprep.mubr.f32.mxu0 0.0
      %1720 = vmatmul.mubr.f32.gmra.mrb[0].mxu0 %v1575
      %v1721 = vpop.f32.mrb[0].mxu0
      %v1722 = vadd.f32 0.0, %v1721
      %v1723 = vpop.f32.mrb[0].mxu0
      %1724 = vdwg.mxu0
      %v1725 = vadd.f32 %v1496, %v1647
      %v1726 = vadd.f32 %v1497, %v1652
      %v1727 = vadd.f32 %v1498, %v1657
      %v1728 = vadd.f32 %v1499, %v1662
      %v1729 = vadd.f32 %v1500, %v1667
      %v1730 = vadd.f32 %v1501, %v1672
      %v1731 = vadd.f32 %v1502, %v1677
      %v1732 = vadd.f32 %v1503, %v1682
      %v1733 = vadd.f32 %v1504, %v1687
      %v1734 = vadd.f32 %v1505, %v1692
      %v1735 = vadd.f32 %v1506, %v1697
      %v1736 = vadd.f32 %v1507, %v1702
      %v1737 = vadd.f32 %v1508, %v1707
      %v1738 = vadd.f32 %v1509, %v1712
      %v1739 = vadd.f32 %v1510, %v1717
      %v1740 = vadd.f32 %v1511, %v1722
      %v1741 = vld [vmem:[%s685 + $0x1] sm:$0xff]
      %v1742 = vld [vmem:[%s685 + $0x9] sm:$0xff]
      %v1743 = vld [vmem:[%s685 + $0x19] sm:$0xff]
      %v1744 = vld [vmem:[%s685 + $0x21] sm:$0xff]
      %v1745 = vld [vmem:[%s685 + $0x31] sm:$0xff]
      %v1746 = vld [vmem:[%s685 + $0x39] sm:$0xff]
      %v1747 = vld [vmem:[%s685 + $0x49] sm:$0xff]
      %v1748 = vld [vmem:[%s685 + $0x51] sm:$0xff]
      %v1749 = vld [vmem:[%s685 + $0x61] sm:$0xff]
      %v1750 = vld [vmem:[%s685 + $0x69] sm:$0xff]
      %v1751 = vld [vmem:[%s685 + $0x79] sm:$0xff]
      %v1752 = vld [vmem:[%s685 + $0x81] sm:$0xff]
      %v1753 = vld [vmem:[%s685 + $0x91] sm:$0xff]
      %v1754 = vld [vmem:[%s685 + $0x99] sm:$0xff]
      %v1755 = vld [vmem:[%s685 + $0xa9] sm:$0xff]
      %v1756 = vld [vmem:[%s685 + $0xb1] sm:$0xff]
      %v1757 = vld [vmem:[%s4 + $0x10] sm:$0xf]
      %v1759 = vsel %vm375, %v1741, 0
      %v1762 = vsel %vm375, %v1742, 0
      %v1765 = vsel %vm375, %v1743, 0
      %v1768 = vsel %vm375, %v1744, 0
      %v1771 = vsel %vm375, %v1745, 0
      %v1774 = vsel %vm375, %v1746, 0
      %v1777 = vsel %vm375, %v1747, 0
      %v1780 = vsel %vm375, %v1748, 0
      %v1783 = vsel %vm375, %v1749, 0
      %v1786 = vsel %vm375, %v1750, 0
      %v1789 = vsel %vm375, %v1751, 0
      %v1792 = vsel %vm375, %v1752, 0
      %v1795 = vsel %vm375, %v1753, 0
      %v1798 = vsel %vm375, %v1754, 0
      %v1801 = vsel %vm375, %v1755, 0
      %v1804 = vsel %vm375, %v1756, 0
      %v1807 = vsel %vm424, %v1757, 0
      %1809 = vmatprep.subr.mxu0 0.0
      %1810 = vmatpush1.msra.mxu0 %v1807
      %1811 = vmatprep.subr.mxu0 0.0
      %1812 = vmatpush1.msra.mxu0 0.0
      %1813 = vmatprep.subr.mxu0 0.0
      %1814 = vmatpush1.msra.mxu0 0.0
      %1815 = vmatprep.subr.mxu0 0.0
      %1816 = vmatpush1.msra.mxu0 0.0
      %1817 = vmatprep.subr.mxu0 0.0
      %1818 = vmatpush1.msra.mxu0 0.0
      %1819 = vmatprep.subr.mxu0 0.0
      %1820 = vmatpush1.msra.mxu0 0.0
      %1821 = vmatprep.subr.mxu0 0.0
      %1822 = vmatpush1.msra.mxu0 0.0
      %1823 = vmatprep.subr.mxu0 0.0
      %1824 = vmatpush1.msra.mxu0 0.0
      %1825 = vmatprep.subr.mxu0 0.0
      %1826 = vmatpush1.msra.mxu0 0.0
      %1827 = vmatprep.subr.mxu0 0.0
      %1828 = vmatpush1.msra.mxu0 0.0
      %1829 = vmatprep.subr.mxu0 0.0
      %1830 = vmatpush1.msra.mxu0 0.0
      %1831 = vmatprep.subr.mxu0 0.0
      %1832 = vmatpush1.msra.mxu0 0.0
      %1833 = vmatprep.subr.mxu0 0.0
      %1834 = vmatpush1.msra.mxu0 0.0
      %1835 = vmatprep.subr.mxu0 0.0
      %1836 = vmatpush1.msra.mxu0 0.0
      %1837 = vmatprep.subr.mxu0 0.0
      %1838 = vmatpush1.msra.mxu0 0.0
      %1839 = vmatprep.subr.mxu0 0.0
      %1840 = vmatpush1.msra.mxu0 0.0
      %1841 = vmatprep.subr.mxu0 0.0
      %1842 = vmatpush1.msra.mxu0 0.0
      %1843 = vmatprep.subr.mxu0 0.0
      %1844 = vmatpush1.msra.mxu0 0.0
      %1845 = vmatprep.subr.mxu0 0.0
      %1846 = vmatpush1.msra.mxu0 0.0
      %1847 = vmatprep.subr.mxu0 0.0
      %1848 = vmatpush1.msra.mxu0 0.0
      %1849 = vmatprep.subr.mxu0 0.0
      %1850 = vmatpush1.msra.mxu0 0.0
      %1851 = vmatprep.subr.mxu0 0.0
      %1852 = vmatpush1.msra.mxu0 0.0
      %1853 = vmatprep.subr.mxu0 0.0
      %1854 = vmatpush1.msra.mxu0 0.0
      %1855 = vmatprep.subr.mxu0 0.0
      %1856 = vmatpush1.msra.mxu0 0.0
      %1857 = vmatprep.subr.mxu0 0.0
      %1858 = vmatpush1.msra.mxu0 0.0
      %1859 = vmatprep.subr.mxu0 0.0
      %1860 = vmatpush1.msra.mxu0 0.0
      %1861 = vmatprep.subr.mxu0 0.0
      %1862 = vmatpush1.msra.mxu0 0.0
      %1863 = vmatprep.subr.mxu0 0.0
      %1864 = vmatpush1.msra.mxu0 0.0
      %1865 = vmatprep.subr.mxu0 0.0
      %1866 = vmatpush1.msra.mxu0 0.0
      %1867 = vmatprep.subr.mxu0 0.0
      %1868 = vmatpush1.msra.mxu0 0.0
      %1869 = vmatprep.subr.mxu0 0.0
      %1870 = vmatpush1.msra.mxu0 0.0
      %1871 = vmatprep.subr.mxu0 0.0
      %1872 = vmatpush1.msra.mxu0 0.0
      %1873 = vmatprep.mubr.f32.mxu0 0.0
      %1874 = vmatmul.mubr.f32.gmra.mrb[0].mxu0 %v1759
      %v1875 = vpop.f32.mrb[0].mxu0
      %v1876 = vadd.f32 0.0, %v1875
      %v1877 = vpop.f32.mrb[0].mxu0
      %1878 = vmatprep.mubr.f32.mxu0 0.0
      %1879 = vmatmul.mubr.f32.gmra.mrb[0].mxu0 %v1762
      %v1880 = vpop.f32.mrb[0].mxu0
      %v1881 = vadd.f32 0.0, %v1880
      %v1882 = vpop.f32.mrb[0].mxu0
      %1883 = vmatprep.mubr.f32.mxu0 0.0
      %1884 = vmatmul.mubr.f32.gmra.mrb[0].mxu0 %v1765
      %v1885 = vpop.f32.mrb[0].mxu0
      %v1886 = vadd.f32 0.0, %v1885
      %v1887 = vpop.f32.mrb[0].mxu0
      %1888 = vmatprep.mubr.f32.mxu0 0.0
      %1889 = vmatmul.mubr.f32.gmra.mrb[0].mxu0 %v1768
      %v1890 = vpop.f32.mrb[0].mxu0
      %v1891 = vadd.f32 0.0, %v1890
      %v1892 = vpop.f32.mrb[0].mxu0
      %1893 = vmatprep.mubr.f32.mxu0 0.0
      %1894 = vmatmul.mubr.f32.gmra.mrb[0].mxu0 %v1771
      %v1895 = vpop.f32.mrb[0].mxu0
      %v1896 = vadd.f32 0.0, %v1895
      %v1897 = vpop.f32.mrb[0].mxu0
      %1898 = vmatprep.mubr.f32.mxu0 0.0
      %1899 = vmatmul.mubr.f32.gmra.mrb[0].mxu0 %v1774
      %v1900 = vpop.f32.mrb[0].mxu0
      %v1901 = vadd.f32 0.0, %v1900
      %v1902 = vpop.f32.mrb[0].mxu0
      %1903 = vmatprep.mubr.f32.mxu0 0.0
      %1904 = vmatmul.mubr.f32.gmra.mrb[0].mxu0 %v1777
      %v1905 = vpop.f32.mrb[0].mxu0
      %v1906 = vadd.f32 0.0, %v1905
      %v1907 = vpop.f32.mrb[0].mxu0
      %1908 = vmatprep.mubr.f32.mxu0 0.0
      %1909 = vmatmul.mubr.f32.gmra.mrb[0].mxu0 %v1780
      %v1910 = vpop.f32.mrb[0].mxu0
      %v1911 = vadd.f32 0.0, %v1910
      %v1912 = vpop.f32.mrb[0].mxu0
      %1913 = vmatprep.mubr.f32.mxu0 0.0
      %1914 = vmatmul.mubr.f32.gmra.mrb[0].mxu0 %v1783
      %v1915 = vpop.f32.mrb[0].mxu0
      %v1916 = vadd.f32 0.0, %v1915
      %v1917 = vpop.f32.mrb[0].mxu0
      %1918 = vmatprep.mubr.f32.mxu0 0.0
      %1919 = vmatmul.mubr.f32.gmra.mrb[0].mxu0 %v1786
      %v1920 = vpop.f32.mrb[0].mxu0
      %v1921 = vadd.f32 0.0, %v1920
      %v1922 = vpop.f32.mrb[0].mxu0
      %1923 = vmatprep.mubr.f32.mxu0 0.0
      %1924 = vmatmul.mubr.f32.gmra.mrb[0].mxu0 %v1789
      %v1925 = vpop.f32.mrb[0].mxu0
      %v1926 = vadd.f32 0.0, %v1925
      %v1927 = vpop.f32.mrb[0].mxu0
      %1928 = vmatprep.mubr.f32.mxu0 0.0
      %1929 = vmatmul.mubr.f32.gmra.mrb[0].mxu0 %v1792
      %v1930 = vpop.f32.mrb[0].mxu0
      %v1931 = vadd.f32 0.0, %v1930
      %v1932 = vpop.f32.mrb[0].mxu0
      %1933 = vmatprep.mubr.f32.mxu0 0.0
      %1934 = vmatmul.mubr.f32.gmra.mrb[0].mxu0 %v1795
      %v1935 = vpop.f32.mrb[0].mxu0
      %v1936 = vadd.f32 0.0, %v1935
      %v1937 = vpop.f32.mrb[0].mxu0
      %1938 = vmatprep.mubr.f32.mxu0 0.0
      %1939 = vmatmul.mubr.f32.gmra.mrb[0].mxu0 %v1798
      %v1940 = vpop.f32.mrb[0].mxu0
      %v1941 = vadd.f32 0.0, %v1940
      %v1942 = vpop.f32.mrb[0].mxu0
      %1943 = vmatprep.mubr.f32.mxu0 0.0
      %1944 = vmatmul.mubr.f32.gmra.mrb[0].mxu0 %v1801
      %v1945 = vpop.f32.mrb[0].mxu0
      %v1946 = vadd.f32 0.0, %v1945
      %v1947 = vpop.f32.mrb[0].mxu0
      %1948 = vmatprep.mubr.f32.mxu0 0.0
      %1949 = vmatmul.mubr.f32.gmra.mrb[0].mxu0 %v1804
      %v1950 = vpop.f32.mrb[0].mxu0
      %v1951 = vadd.f32 0.0, %v1950
      %v1952 = vpop.f32.mrb[0].mxu0
      %1953 = vdwg.mxu0
      %v1954 = vadd.f32 %v1725, %v1876
      %v1955 = vadd.f32 %v1726, %v1881
      %v1956 = vadd.f32 %v1727, %v1886
      %v1957 = vadd.f32 %v1728, %v1891
      %v1958 = vadd.f32 %v1729, %v1896
      %v1959 = vadd.f32 %v1730, %v1901
      %v1960 = vadd.f32 %v1731, %v1906
      %v1961 = vadd.f32 %v1732, %v1911
      %v1962 = vadd.f32 %v1733, %v1916
      %v1963 = vadd.f32 %v1734, %v1921
      %v1964 = vadd.f32 %v1735, %v1926
      %v1965 = vadd.f32 %v1736, %v1931
      %v1966 = vadd.f32 %v1737, %v1936
      %v1967 = vadd.f32 %v1738, %v1941
      %v1968 = vadd.f32 %v1739, %v1946
      %v1969 = vadd.f32 %v1740, %v1951
      %v1970 = vld [vmem:[%s685 + $0x2] sm:$0xff]
      %v1971 = vld [vmem:[%s685 + $0xa] sm:$0xff]
      %v1972 = vld [vmem:[%s685 + $0x1a] sm:$0xff]
      %v1973 = vld [vmem:[%s685 + $0x22] sm:$0xff]
      %v1974 = vld [vmem:[%s685 + $0x32] sm:$0xff]
      %v1975 = vld [vmem:[%s685 + $0x3a] sm:$0xff]
      %v1976 = vld [vmem:[%s685 + $0x4a] sm:$0xff]
      %v1977 = vld [vmem:[%s685 + $0x52] sm:$0xff]
      %v1978 = vld [vmem:[%s685 + $0x62] sm:$0xff]
      %v1979 = vld [vmem:[%s685 + $0x6a] sm:$0xff]
      %v1980 = vld [vmem:[%s685 + $0x7a] sm:$0xff]
      %v1981 = vld [vmem:[%s685 + $0x82] sm:$0xff]
      %v1982 = vld [vmem:[%s685 + $0x92] sm:$0xff]
      %v1983 = vld [vmem:[%s685 + $0x9a] sm:$0xff]
      %v1984 = vld [vmem:[%s685 + $0xaa] sm:$0xff]
      %v1985 = vld [vmem:[%s685 + $0xb2] sm:$0xff]
      %v1986 = vld [vmem:[%s4 + $0x14] sm:$0xf]
      %v1988 = vsel %vm375, %v1970, 0
      %v1991 = vsel %vm375, %v1971, 0
      %v1994 = vsel %vm375, %v1972, 0
      %v1997 = vsel %vm375, %v1973, 0
      %v2000 = vsel %vm375, %v1974, 0
      %v2003 = vsel %vm375, %v1975, 0
      %v2006 = vsel %vm375, %v1976, 0
      %v2009 = vsel %vm375, %v1977, 0
      %v2012 = vsel %vm375, %v1978, 0
      %v2015 = vsel %vm375, %v1979, 0
      %v2018 = vsel %vm375, %v1980, 0
      %v2021 = vsel %vm375, %v1981, 0
      %v2024 = vsel %vm375, %v1982, 0
      %v2027 = vsel %vm375, %v1983, 0
      %v2030 = vsel %vm375, %v1984, 0
      %v2033 = vsel %vm375, %v1985, 0
      %v2036 = vsel %vm424, %v1986, 0
      %2038 = vmatprep.subr.mxu0 0.0
      %2039 = vmatpush1.msra.mxu0 %v2036
      %2040 = vmatprep.subr.mxu0 0.0
      %2041 = vmatpush1.msra.mxu0 0.0
      %2042 = vmatprep.subr.mxu0 0.0
      %2043 = vmatpush1.msra.mxu0 0.0
      %2044 = vmatprep.subr.mxu0 0.0
      %2045 = vmatpush1.msra.mxu0 0.0
      %2046 = vmatprep.subr.mxu0 0.0
      %2047 = vmatpush1.msra.mxu0 0.0
      %2048 = vmatprep.subr.mxu0 0.0
      %2049 = vmatpush1.msra.mxu0 0.0
      %2050 = vmatprep.subr.mxu0 0.0
      %2051 = vmatpush1.msra.mxu0 0.0
      %2052 = vmatprep.subr.mxu0 0.0
      %2053 = vmatpush1.msra.mxu0 0.0
      %2054 = vmatprep.subr.mxu0 0.0
      %2055 = vmatpush1.msra.mxu0 0.0
      %2056 = vmatprep.subr.mxu0 0.0
      %2057 = vmatpush1.msra.mxu0 0.0
      %2058 = vmatprep.subr.mxu0 0.0
      %2059 = vmatpush1.msra.mxu0 0.0
      %2060 = vmatprep.subr.mxu0 0.0
      %2061 = vmatpush1.msra.mxu0 0.0
      %2062 = vmatprep.subr.mxu0 0.0
      %2063 = vmatpush1.msra.mxu0 0.0
      %2064 = vmatprep.subr.mxu0 0.0
      %2065 = vmatpush1.msra.mxu0 0.0
      %2066 = vmatprep.subr.mxu0 0.0
      %2067 = vmatpush1.msra.mxu0 0.0
      %2068 = vmatprep.subr.mxu0 0.0
      %2069 = vmatpush1.msra.mxu0 0.0
      %2070 = vmatprep.subr.mxu0 0.0
      %2071 = vmatpush1.msra.mxu0 0.0
      %2072 = vmatprep.subr.mxu0 0.0
      %2073 = vmatpush1.msra.mxu0 0.0
      %2074 = vmatprep.subr.mxu0 0.0
      %2075 = vmatpush1.msra.mxu0 0.0
      %2076 = vmatprep.subr.mxu0 0.0
      %2077 = vmatpush1.msra.mxu0 0.0
      %2078 = vmatprep.subr.mxu0 0.0
      %2079 = vmatpush1.msra.mxu0 0.0
      %2080 = vmatprep.subr.mxu0 0.0
      %2081 = vmatpush1.msra.mxu0 0.0
      %2082 = vmatprep.subr.mxu0 0.0
      %2083 = vmatpush1.msra.mxu0 0.0
      %2084 = vmatprep.subr.mxu0 0.0
      %2085 = vmatpush1.msra.mxu0 0.0
      %2086 = vmatprep.subr.mxu0 0.0
      %2087 = vmatpush1.msra.mxu0 0.0
      %2088 = vmatprep.subr.mxu0 0.0
      %2089 = vmatpush1.msra.mxu0 0.0
      %2090 = vmatprep.subr.mxu0 0.0
      %2091 = vmatpush1.msra.mxu0 0.0
      %2092 = vmatprep.subr.mxu0 0.0
      %2093 = vmatpush1.msra.mxu0 0.0
      %2094 = vmatprep.subr.mxu0 0.0
      %2095 = vmatpush1.msra.mxu0 0.0
      %2096 = vmatprep.subr.mxu0 0.0
      %2097 = vmatpush1.msra.mxu0 0.0
      %2098 = vmatprep.subr.mxu0 0.0
      %2099 = vmatpush1.msra.mxu0 0.0
      %2100 = vmatprep.subr.mxu0 0.0
      %2101 = vmatpush1.msra.mxu0 0.0
      %2102 = vmatprep.mubr.f32.mxu0 0.0
      %2103 = vmatmul.mubr.f32.gmra.mrb[0].mxu0 %v1988
      %v2104 = vpop.f32.mrb[0].mxu0
      %v2105 = vadd.f32 0.0, %v2104
      %v2106 = vpop.f32.mrb[0].mxu0
      %2107 = vmatprep.mubr.f32.mxu0 0.0
      %2108 = vmatmul.mubr.f32.gmra.mrb[0].mxu0 %v1991
      %v2109 = vpop.f32.mrb[0].mxu0
      %v2110 = vadd.f32 0.0, %v2109
      %v2111 = vpop.f32.mrb[0].mxu0
      %2112 = vmatprep.mubr.f32.mxu0 0.0
      %2113 = vmatmul.mubr.f32.gmra.mrb[0].mxu0 %v1994
      %v2114 = vpop.f32.mrb[0].mxu0
      %v2115 = vadd.f32 0.0, %v2114
      %v2116 = vpop.f32.mrb[0].mxu0
      %2117 = vmatprep.mubr.f32.mxu0 0.0
      %2118 = vmatmul.mubr.f32.gmra.mrb[0].mxu0 %v1997
      %v2119 = vpop.f32.mrb[0].mxu0
      %v2120 = vadd.f32 0.0, %v2119
      %v2121 = vpop.f32.mrb[0].mxu0
      %2122 = vmatprep.mubr.f32.mxu0 0.0
      %2123 = vmatmul.mubr.f32.gmra.mrb[0].mxu0 %v2000
      %v2124 = vpop.f32.mrb[0].mxu0
      %v2125 = vadd.f32 0.0, %v2124
      %v2126 = vpop.f32.mrb[0].mxu0
      %2127 = vmatprep.mubr.f32.mxu0 0.0
      %2128 = vmatmul.mubr.f32.gmra.mrb[0].mxu0 %v2003
      %v2129 = vpop.f32.mrb[0].mxu0
      %v2130 = vadd.f32 0.0, %v2129
      %v2131 = vpop.f32.mrb[0].mxu0
      %2132 = vmatprep.mubr.f32.mxu0 0.0
      %2133 = vmatmul.mubr.f32.gmra.mrb[0].mxu0 %v2006
      %v2134 = vpop.f32.mrb[0].mxu0
      %v2135 = vadd.f32 0.0, %v2134
      %v2136 = vpop.f32.mrb[0].mxu0
      %2137 = vmatprep.mubr.f32.mxu0 0.0
      %2138 = vmatmul.mubr.f32.gmra.mrb[0].mxu0 %v2009
      %v2139 = vpop.f32.mrb[0].mxu0
      %v2140 = vadd.f32 0.0, %v2139
      %v2141 = vpop.f32.mrb[0].mxu0
      %2142 = vmatprep.mubr.f32.mxu0 0.0
      %2143 = vmatmul.mubr.f32.gmra.mrb[0].mxu0 %v2012
      %v2144 = vpop.f32.mrb[0].mxu0
      %v2145 = vadd.f32 0.0, %v2144
      %v2146 = vpop.f32.mrb[0].mxu0
      %2147 = vmatprep.mubr.f32.mxu0 0.0
      %2148 = vmatmul.mubr.f32.gmra.mrb[0].mxu0 %v2015
      %v2149 = vpop.f32.mrb[0].mxu0
      %v2150 = vadd.f32 0.0, %v2149
      %v2151 = vpop.f32.mrb[0].mxu0
      %2152 = vmatprep.mubr.f32.mxu0 0.0
      %2153 = vmatmul.mubr.f32.gmra.mrb[0].mxu0 %v2018
      %v2154 = vpop.f32.mrb[0].mxu0
      %v2155 = vadd.f32 0.0, %v2154
      %v2156 = vpop.f32.mrb[0].mxu0
      %2157 = vmatprep.mubr.f32.mxu0 0.0
      %2158 = vmatmul.mubr.f32.gmra.mrb[0].mxu0 %v2021
      %v2159 = vpop.f32.mrb[0].mxu0
      %v2160 = vadd.f32 0.0, %v2159
      %v2161 = vpop.f32.mrb[0].mxu0
      %2162 = vmatprep.mubr.f32.mxu0 0.0
      %2163 = vmatmul.mubr.f32.gmra.mrb[0].mxu0 %v2024
      %v2164 = vpop.f32.mrb[0].mxu0
      %v2165 = vadd.f32 0.0, %v2164
      %v2166 = vpop.f32.mrb[0].mxu0
      %2167 = vmatprep.mubr.f32.mxu0 0.0
      %2168 = vmatmul.mubr.f32.gmra.mrb[0].mxu0 %v2027
      %v2169 = vpop.f32.mrb[0].mxu0
      %v2170 = vadd.f32 0.0, %v2169
      %v2171 = vpop.f32.mrb[0].mxu0
      %2172 = vmatprep.mubr.f32.mxu0 0.0
      %2173 = vmatmul.mubr.f32.gmra.mrb[0].mxu0 %v2030
      %v2174 = vpop.f32.mrb[0].mxu0
      %v2175 = vadd.f32 0.0, %v2174
      %v2176 = vpop.f32.mrb[0].mxu0
      %2177 = vmatprep.mubr.f32.mxu0 0.0
      %2178 = vmatmul.mubr.f32.gmra.mrb[0].mxu0 %v2033
      %v2179 = vpop.f32.mrb[0].mxu0
      %v2180 = vadd.f32 0.0, %v2179
      %v2181 = vpop.f32.mrb[0].mxu0
      %2182 = vdwg.mxu0
      %v2183 = vadd.f32 %v1954, %v2105
      %v2184 = vadd.f32 %v1955, %v2110
      %v2185 = vadd.f32 %v1956, %v2115
      %v2186 = vadd.f32 %v1957, %v2120
      %v2187 = vadd.f32 %v1958, %v2125
      %v2188 = vadd.f32 %v1959, %v2130
      %v2189 = vadd.f32 %v1960, %v2135
      %v2190 = vadd.f32 %v1961, %v2140
      %v2191 = vadd.f32 %v1962, %v2145
      %v2192 = vadd.f32 %v1963, %v2150
      %v2193 = vadd.f32 %v1964, %v2155
      %v2194 = vadd.f32 %v1965, %v2160
      %v2195 = vadd.f32 %v1966, %v2165
      %v2196 = vadd.f32 %v1967, %v2170
      %v2197 = vadd.f32 %v1968, %v2175
      %v2198 = vadd.f32 %v1969, %v2180
      %s2199 = scalar_lea.vmem [#allocation2], 48
      %v2200 = vld [vmem:[%s2199] sm:$0xff]
      %v2201 = vld [vmem:[%s2199 + $0x8] sm:$0xff]
      %v2202 = vld [vmem:[%s2199 + $0x18] sm:$0xff]
      %v2203 = vld [vmem:[%s2199 + $0x20] sm:$0xff]
      %v2204 = vld [vmem:[%s2199 + $0x30] sm:$0xff]
      %v2205 = vld [vmem:[%s2199 + $0x38] sm:$0xff]
      %v2206 = vld [vmem:[%s2199 + $0x48] sm:$0xff]
      %v2207 = vld [vmem:[%s2199 + $0x50] sm:$0xff]
      %v2208 = vld [vmem:[%s2199 + $0x60] sm:$0xff]
      %v2209 = vld [vmem:[%s2199 + $0x68] sm:$0xff]
      %v2210 = vld [vmem:[%s2199 + $0x78] sm:$0xff]
      %v2211 = vld [vmem:[%s2199 + $0x80] sm:$0xff]
      %v2212 = vld [vmem:[%s2199 + $0x90] sm:$0xff]
      %v2213 = vld [vmem:[%s2199 + $0x98] sm:$0xff]
      %v2214 = vld [vmem:[%s2199 + $0xa8] sm:$0xff]
      %v2215 = vld [vmem:[%s2199 + $0xb0] sm:$0xff]
      %v2216 = vld [vmem:[%s4 + $0x18] sm:$0xf]
      %v2218 = vsel %vm375, %v2200, 0
      %v2221 = vsel %vm375, %v2201, 0
      %v2224 = vsel %vm375, %v2202, 0
      %v2227 = vsel %vm375, %v2203, 0
      %v2230 = vsel %vm375, %v2204, 0
      %v2233 = vsel %vm375, %v2205, 0
      %v2236 = vsel %vm375, %v2206, 0
      %v2239 = vsel %vm375, %v2207, 0
      %v2242 = vsel %vm375, %v2208, 0
      %v2245 = vsel %vm375, %v2209, 0
      %v2248 = vsel %vm375, %v2210, 0
      %v2251 = vsel %vm375, %v2211, 0
      %v2254 = vsel %vm375, %v2212, 0
      %v2257 = vsel %vm375, %v2213, 0
      %v2260 = vsel %vm375, %v2214, 0
      %v2263 = vsel %vm375, %v2215, 0
      %v2266 = vsel %vm424, %v2216, 0
      %2268 = vmatprep.subr.mxu0 0.0
      %2269 = vmatpush1.msra.mxu0 %v2266
      %2270 = vmatprep.subr.mxu0 0.0
      %2271 = vmatpush1.msra.mxu0 0.0
      %2272 = vmatprep.subr.mxu0 0.0
      %2273 = vmatpush1.msra.mxu0 0.0
      %2274 = vmatprep.subr.mxu0 0.0
      %2275 = vmatpush1.msra.mxu0 0.0
      %2276 = vmatprep.subr.mxu0 0.0
      %2277 = vmatpush1.msra.mxu0 0.0
      %2278 = vmatprep.subr.mxu0 0.0
      %2279 = vmatpush1.msra.mxu0 0.0
      %2280 = vmatprep.subr.mxu0 0.0
      %2281 = vmatpush1.msra.mxu0 0.0
      %2282 = vmatprep.subr.mxu0 0.0
      %2283 = vmatpush1.msra.mxu0 0.0
      %2284 = vmatprep.subr.mxu0 0.0
      %2285 = vmatpush1.msra.mxu0 0.0
      %2286 = vmatprep.subr.mxu0 0.0
      %2287 = vmatpush1.msra.mxu0 0.0
      %2288 = vmatprep.subr.mxu0 0.0
      %2289 = vmatpush1.msra.mxu0 0.0
      %2290 = vmatprep.subr.mxu0 0.0
      %2291 = vmatpush1.msra.mxu0 0.0
      %2292 = vmatprep.subr.mxu0 0.0
      %2293 = vmatpush1.msra.mxu0 0.0
      %2294 = vmatprep.subr.mxu0 0.0
      %2295 = vmatpush1.msra.mxu0 0.0
      %2296 = vmatprep.subr.mxu0 0.0
      %2297 = vmatpush1.msra.mxu0 0.0
      %2298 = vmatprep.subr.mxu0 0.0
      %2299 = vmatpush1.msra.mxu0 0.0
      %2300 = vmatprep.subr.mxu0 0.0
      %2301 = vmatpush1.msra.mxu0 0.0
      %2302 = vmatprep.subr.mxu0 0.0
      %2303 = vmatpush1.msra.mxu0 0.0
      %2304 = vmatprep.subr.mxu0 0.0
      %2305 = vmatpush1.msra.mxu0 0.0
      %2306 = vmatprep.subr.mxu0 0.0
      %2307 = vmatpush1.msra.mxu0 0.0
      %2308 = vmatprep.subr.mxu0 0.0
      %2309 = vmatpush1.msra.mxu0 0.0
      %2310 = vmatprep.subr.mxu0 0.0
      %2311 = vmatpush1.msra.mxu0 0.0
      %2312 = vmatprep.subr.mxu0 0.0
      %2313 = vmatpush1.msra.mxu0 0.0
      %2314 = vmatprep.subr.mxu0 0.0
      %2315 = vmatpush1.msra.mxu0 0.0
      %2316 = vmatprep.subr.mxu0 0.0
      %2317 = vmatpush1.msra.mxu0 0.0
      %2318 = vmatprep.subr.mxu0 0.0
      %2319 = vmatpush1.msra.mxu0 0.0
      %2320 = vmatprep.subr.mxu0 0.0
      %2321 = vmatpush1.msra.mxu0 0.0
      %2322 = vmatprep.subr.mxu0 0.0
      %2323 = vmatpush1.msra.mxu0 0.0
      %2324 = vmatprep.subr.mxu0 0.0
      %2325 = vmatpush1.msra.mxu0 0.0
      %2326 = vmatprep.subr.mxu0 0.0
      %2327 = vmatpush1.msra.mxu0 0.0
      %2328 = vmatprep.subr.mxu0 0.0
      %2329 = vmatpush1.msra.mxu0 0.0
      %2330 = vmatprep.subr.mxu0 0.0
      %2331 = vmatpush1.msra.mxu0 0.0
      %2332 = vmatprep.mubr.f32.mxu0 0.0
      %2333 = vmatmul.mubr.f32.gmra.mrb[0].mxu0 %v2218
      %v2334 = vpop.f32.mrb[0].mxu0
      %v2335 = vadd.f32 0.0, %v2334
      %v2336 = vpop.f32.mrb[0].mxu0
      %2337 = vmatprep.mubr.f32.mxu0 0.0
      %2338 = vmatmul.mubr.f32.gmra.mrb[0].mxu0 %v2221
      %v2339 = vpop.f32.mrb[0].mxu0
      %v2340 = vadd.f32 0.0, %v2339
      %v2341 = vpop.f32.mrb[0].mxu0
      %2342 = vmatprep.mubr.f32.mxu0 0.0
      %2343 = vmatmul.mubr.f32.gmra.mrb[0].mxu0 %v2224
      %v2344 = vpop.f32.mrb[0].mxu0
      %v2345 = vadd.f32 0.0, %v2344
      %v2346 = vpop.f32.mrb[0].mxu0
      %2347 = vmatprep.mubr.f32.mxu0 0.0
      %2348 = vmatmul.mubr.f32.gmra.mrb[0].mxu0 %v2227
      %v2349 = vpop.f32.mrb[0].mxu0
      %v2350 = vadd.f32 0.0, %v2349
      %v2351 = vpop.f32.mrb[0].mxu0
      %2352 = vmatprep.mubr.f32.mxu0 0.0
      %2353 = vmatmul.mubr.f32.gmra.mrb[0].mxu0 %v2230
      %v2354 = vpop.f32.mrb[0].mxu0
      %v2355 = vadd.f32 0.0, %v2354
      %v2356 = vpop.f32.mrb[0].mxu0
      %2357 = vmatprep.mubr.f32.mxu0 0.0
      %2358 = vmatmul.mubr.f32.gmra.mrb[0].mxu0 %v2233
      %v2359 = vpop.f32.mrb[0].mxu0
      %v2360 = vadd.f32 0.0, %v2359
      %v2361 = vpop.f32.mrb[0].mxu0
      %2362 = vmatprep.mubr.f32.mxu0 0.0
      %2363 = vmatmul.mubr.f32.gmra.mrb[0].mxu0 %v2236
      %v2364 = vpop.f32.mrb[0].mxu0
      %v2365 = vadd.f32 0.0, %v2364
      %v2366 = vpop.f32.mrb[0].mxu0
      %2367 = vmatprep.mubr.f32.mxu0 0.0
      %2368 = vmatmul.mubr.f32.gmra.mrb[0].mxu0 %v2239
      %v2369 = vpop.f32.mrb[0].mxu0
      %v2370 = vadd.f32 0.0, %v2369
      %v2371 = vpop.f32.mrb[0].mxu0
      %2372 = vmatprep.mubr.f32.mxu0 0.0
      %2373 = vmatmul.mubr.f32.gmra.mrb[0].mxu0 %v2242
      %v2374 = vpop.f32.mrb[0].mxu0
      %v2375 = vadd.f32 0.0, %v2374
      %v2376 = vpop.f32.mrb[0].mxu0
      %2377 = vmatprep.mubr.f32.mxu0 0.0
      %2378 = vmatmul.mubr.f32.gmra.mrb[0].mxu0 %v2245
      %v2379 = vpop.f32.mrb[0].mxu0
      %v2380 = vadd.f32 0.0, %v2379
      %v2381 = vpop.f32.mrb[0].mxu0
      %2382 = vmatprep.mubr.f32.mxu0 0.0
      %2383 = vmatmul.mubr.f32.gmra.mrb[0].mxu0 %v2248
      %v2384 = vpop.f32.mrb[0].mxu0
      %v2385 = vadd.f32 0.0, %v2384
      %v2386 = vpop.f32.mrb[0].mxu0
      %2387 = vmatprep.mubr.f32.mxu0 0.0
      %2388 = vmatmul.mubr.f32.gmra.mrb[0].mxu0 %v2251
      %v2389 = vpop.f32.mrb[0].mxu0
      %v2390 = vadd.f32 0.0, %v2389
      %v2391 = vpop.f32.mrb[0].mxu0
      %2392 = vmatprep.mubr.f32.mxu0 0.0
      %2393 = vmatmul.mubr.f32.gmra.mrb[0].mxu0 %v2254
      %v2394 = vpop.f32.mrb[0].mxu0
      %v2395 = vadd.f32 0.0, %v2394
      %v2396 = vpop.f32.mrb[0].mxu0
      %2397 = vmatprep.mubr.f32.mxu0 0.0
      %2398 = vmatmul.mubr.f32.gmra.mrb[0].mxu0 %v2257
      %v2399 = vpop.f32.mrb[0].mxu0
      %v2400 = vadd.f32 0.0, %v2399
      %v2401 = vpop.f32.mrb[0].mxu0
      %2402 = vmatprep.mubr.f32.mxu0 0.0
      %2403 = vmatmul.mubr.f32.gmra.mrb[0].mxu0 %v2260
      %v2404 = vpop.f32.mrb[0].mxu0
      %v2405 = vadd.f32 0.0, %v2404
      %v2406 = vpop.f32.mrb[0].mxu0
      %2407 = vmatprep.mubr.f32.mxu0 0.0
      %2408 = vmatmul.mubr.f32.gmra.mrb[0].mxu0 %v2263
      %v2409 = vpop.f32.mrb[0].mxu0
      %v2410 = vadd.f32 0.0, %v2409
      %v2411 = vpop.f32.mrb[0].mxu0
      %2412 = vdwg.mxu0
      %v2413 = vadd.f32 %v2183, %v2335
      %v2414 = vadd.f32 %v2184, %v2340
      %v2415 = vadd.f32 %v2185, %v2345
      %v2416 = vadd.f32 %v2186, %v2350
      %v2417 = vadd.f32 %v2187, %v2355
      %v2418 = vadd.f32 %v2188, %v2360
      %v2419 = vadd.f32 %v2189, %v2365
      %v2420 = vadd.f32 %v2190, %v2370
      %v2421 = vadd.f32 %v2191, %v2375
      %v2422 = vadd.f32 %v2192, %v2380
      %v2423 = vadd.f32 %v2193, %v2385
      %v2424 = vadd.f32 %v2194, %v2390
      %v2425 = vadd.f32 %v2195, %v2395
      %v2426 = vadd.f32 %v2196, %v2400
      %v2427 = vadd.f32 %v2197, %v2405
      %v2428 = vadd.f32 %v2198, %v2410
      %v2429 = vld [vmem:[%s2199 + $0x1] sm:$0xff]
      %v2430 = vld [vmem:[%s2199 + $0x9] sm:$0xff]
      %v2431 = vld [vmem:[%s2199 + $0x19] sm:$0xff]
      %v2432 = vld [vmem:[%s2199 + $0x21] sm:$0xff]
      %v2433 = vld [vmem:[%s2199 + $0x31] sm:$0xff]
      %v2434 = vld [vmem:[%s2199 + $0x39] sm:$0xff]
      %v2435 = vld [vmem:[%s2199 + $0x49] sm:$0xff]
      %v2436 = vld [vmem:[%s2199 + $0x51] sm:$0xff]
      %v2437 = vld [vmem:[%s2199 + $0x61] sm:$0xff]
      %v2438 = vld [vmem:[%s2199 + $0x69] sm:$0xff]
      %v2439 = vld [vmem:[%s2199 + $0x79] sm:$0xff]
      %v2440 = vld [vmem:[%s2199 + $0x81] sm:$0xff]
      %v2441 = vld [vmem:[%s2199 + $0x91] sm:$0xff]
      %v2442 = vld [vmem:[%s2199 + $0x99] sm:$0xff]
      %v2443 = vld [vmem:[%s2199 + $0xa9] sm:$0xff]
      %v2444 = vld [vmem:[%s2199 + $0xb1] sm:$0xff]
      %v2445 = vld [vmem:[%s4 + $0x1c] sm:$0xf]
      %v2447 = vsel %vm375, %v2429, 0
      %v2450 = vsel %vm375, %v2430, 0
      %v2453 = vsel %vm375, %v2431, 0
      %v2456 = vsel %vm375, %v2432, 0
      %v2459 = vsel %vm375, %v2433, 0
      %v2462 = vsel %vm375, %v2434, 0
      %v2465 = vsel %vm375, %v2435, 0
      %v2468 = vsel %vm375, %v2436, 0
      %v2471 = vsel %vm375, %v2437, 0
      %v2474 = vsel %vm375, %v2438, 0
      %v2477 = vsel %vm375, %v2439, 0
      %v2480 = vsel %vm375, %v2440, 0
      %v2483 = vsel %vm375, %v2441, 0
      %v2486 = vsel %vm375, %v2442, 0
      %v2489 = vsel %vm375, %v2443, 0
      %v2492 = vsel %vm375, %v2444, 0
      %v2495 = vsel %vm424, %v2445, 0
      %2497 = vmatprep.subr.mxu0 0.0
      %2498 = vmatpush1.msra.mxu0 %v2495
      %2499 = vmatprep.subr.mxu0 0.0
      %2500 = vmatpush1.msra.mxu0 0.0
      %2501 = vmatprep.subr.mxu0 0.0
      %2502 = vmatpush1.msra.mxu0 0.0
      %2503 = vmatprep.subr.mxu0 0.0
      %2504 = vmatpush1.msra.mxu0 0.0
      %2505 = vmatprep.subr.mxu0 0.0
      %2506 = vmatpush1.msra.mxu0 0.0
      %2507 = vmatprep.subr.mxu0 0.0
      %2508 = vmatpush1.msra.mxu0 0.0
      %2509 = vmatprep.subr.mxu0 0.0
      %2510 = vmatpush1.msra.mxu0 0.0
      %2511 = vmatprep.subr.mxu0 0.0
      %2512 = vmatpush1.msra.mxu0 0.0
      %2513 = vmatprep.subr.mxu0 0.0
      %2514 = vmatpush1.msra.mxu0 0.0
      %2515 = vmatprep.subr.mxu0 0.0
      %2516 = vmatpush1.msra.mxu0 0.0
      %2517 = vmatprep.subr.mxu0 0.0
      %2518 = vmatpush1.msra.mxu0 0.0
      %2519 = vmatprep.subr.mxu0 0.0
      %2520 = vmatpush1.msra.mxu0 0.0
      %2521 = vmatprep.subr.mxu0 0.0
      %2522 = vmatpush1.msra.mxu0 0.0
      %2523 = vmatprep.subr.mxu0 0.0
      %2524 = vmatpush1.msra.mxu0 0.0
      %2525 = vmatprep.subr.mxu0 0.0
      %2526 = vmatpush1.msra.mxu0 0.0
      %2527 = vmatprep.subr.mxu0 0.0
      %2528 = vmatpush1.msra.mxu0 0.0
      %2529 = vmatprep.subr.mxu0 0.0
      %2530 = vmatpush1.msra.mxu0 0.0
      %2531 = vmatprep.subr.mxu0 0.0
      %2532 = vmatpush1.msra.mxu0 0.0
      %2533 = vmatprep.subr.mxu0 0.0
      %2534 = vmatpush1.msra.mxu0 0.0
      %2535 = vmatprep.subr.mxu0 0.0
      %2536 = vmatpush1.msra.mxu0 0.0
      %2537 = vmatprep.subr.mxu0 0.0
      %2538 = vmatpush1.msra.mxu0 0.0
      %2539 = vmatprep.subr.mxu0 0.0
      %2540 = vmatpush1.msra.mxu0 0.0
      %2541 = vmatprep.subr.mxu0 0.0
      %2542 = vmatpush1.msra.mxu0 0.0
      %2543 = vmatprep.subr.mxu0 0.0
      %2544 = vmatpush1.msra.mxu0 0.0
      %2545 = vmatprep.subr.mxu0 0.0
      %2546 = vmatpush1.msra.mxu0 0.0
      %2547 = vmatprep.subr.mxu0 0.0
      %2548 = vmatpush1.msra.mxu0 0.0
      %2549 = vmatprep.subr.mxu0 0.0
      %2550 = vmatpush1.msra.mxu0 0.0
      %2551 = vmatprep.subr.mxu0 0.0
      %2552 = vmatpush1.msra.mxu0 0.0
      %2553 = vmatprep.subr.mxu0 0.0
      %2554 = vmatpush1.msra.mxu0 0.0
      %2555 = vmatprep.subr.mxu0 0.0
      %2556 = vmatpush1.msra.mxu0 0.0
      %2557 = vmatprep.subr.mxu0 0.0
      %2558 = vmatpush1.msra.mxu0 0.0
      %2559 = vmatprep.subr.mxu0 0.0
      %2560 = vmatpush1.msra.mxu0 0.0
      %2561 = vmatprep.mubr.f32.mxu0 0.0
      %2562 = vmatmul.mubr.f32.gmra.mrb[0].mxu0 %v2447
      %v2563 = vpop.f32.mrb[0].mxu0
      %v2564 = vadd.f32 0.0, %v2563
      %v2565 = vpop.f32.mrb[0].mxu0
      %2566 = vmatprep.mubr.f32.mxu0 0.0
      %2567 = vmatmul.mubr.f32.gmra.mrb[0].mxu0 %v2450
      %v2568 = vpop.f32.mrb[0].mxu0
      %v2569 = vadd.f32 0.0, %v2568
      %v2570 = vpop.f32.mrb[0].mxu0
      %2571 = vmatprep.mubr.f32.mxu0 0.0
      %2572 = vmatmul.mubr.f32.gmra.mrb[0].mxu0 %v2453
      %v2573 = vpop.f32.mrb[0].mxu0
      %v2574 = vadd.f32 0.0, %v2573
      %v2575 = vpop.f32.mrb[0].mxu0
      %2576 = vmatprep.mubr.f32.mxu0 0.0
      %2577 = vmatmul.mubr.f32.gmra.mrb[0].mxu0 %v2456
      %v2578 = vpop.f32.mrb[0].mxu0
      %v2579 = vadd.f32 0.0, %v2578
      %v2580 = vpop.f32.mrb[0].mxu0
      %2581 = vmatprep.mubr.f32.mxu0 0.0
      %2582 = vmatmul.mubr.f32.gmra.mrb[0].mxu0 %v2459
      %v2583 = vpop.f32.mrb[0].mxu0
      %v2584 = vadd.f32 0.0, %v2583
      %v2585 = vpop.f32.mrb[0].mxu0
      %2586 = vmatprep.mubr.f32.mxu0 0.0
      %2587 = vmatmul.mubr.f32.gmra.mrb[0].mxu0 %v2462
      %v2588 = vpop.f32.mrb[0].mxu0
      %v2589 = vadd.f32 0.0, %v2588
      %v2590 = vpop.f32.mrb[0].mxu0
      %2591 = vmatprep.mubr.f32.mxu0 0.0
      %2592 = vmatmul.mubr.f32.gmra.mrb[0].mxu0 %v2465
      %v2593 = vpop.f32.mrb[0].mxu0
      %v2594 = vadd.f32 0.0, %v2593
      %v2595 = vpop.f32.mrb[0].mxu0
      %2596 = vmatprep.mubr.f32.mxu0 0.0
      %2597 = vmatmul.mubr.f32.gmra.mrb[0].mxu0 %v2468
      %v2598 = vpop.f32.mrb[0].mxu0
      %v2599 = vadd.f32 0.0, %v2598
      %v2600 = vpop.f32.mrb[0].mxu0
      %2601 = vmatprep.mubr.f32.mxu0 0.0
      %2602 = vmatmul.mubr.f32.gmra.mrb[0].mxu0 %v2471
      %v2603 = vpop.f32.mrb[0].mxu0
      %v2604 = vadd.f32 0.0, %v2603
      %v2605 = vpop.f32.mrb[0].mxu0
      %2606 = vmatprep.mubr.f32.mxu0 0.0
      %2607 = vmatmul.mubr.f32.gmra.mrb[0].mxu0 %v2474
      %v2608 = vpop.f32.mrb[0].mxu0
      %v2609 = vadd.f32 0.0, %v2608
      %v2610 = vpop.f32.mrb[0].mxu0
      %2611 = vmatprep.mubr.f32.mxu0 0.0
      %2612 = vmatmul.mubr.f32.gmra.mrb[0].mxu0 %v2477
      %v2613 = vpop.f32.mrb[0].mxu0
      %v2614 = vadd.f32 0.0, %v2613
      %v2615 = vpop.f32.mrb[0].mxu0
      %2616 = vmatprep.mubr.f32.mxu0 0.0
      %2617 = vmatmul.mubr.f32.gmra.mrb[0].mxu0 %v2480
      %v2618 = vpop.f32.mrb[0].mxu0
      %v2619 = vadd.f32 0.0, %v2618
      %v2620 = vpop.f32.mrb[0].mxu0
      %2621 = vmatprep.mubr.f32.mxu0 0.0
      %2622 = vmatmul.mubr.f32.gmra.mrb[0].mxu0 %v2483
      %v2623 = vpop.f32.mrb[0].mxu0
      %v2624 = vadd.f32 0.0, %v2623
      %v2625 = vpop.f32.mrb[0].mxu0
      %2626 = vmatprep.mubr.f32.mxu0 0.0
      %2627 = vmatmul.mubr.f32.gmra.mrb[0].mxu0 %v2486
      %v2628 = vpop.f32.mrb[0].mxu0
      %v2629 = vadd.f32 0.0, %v2628
      %v2630 = vpop.f32.mrb[0].mxu0
      %2631 = vmatprep.mubr.f32.mxu0 0.0
      %2632 = vmatmul.mubr.f32.gmra.mrb[0].mxu0 %v2489
      %v2633 = vpop.f32.mrb[0].mxu0
      %v2634 = vadd.f32 0.0, %v2633
      %v2635 = vpop.f32.mrb[0].mxu0
      %2636 = vmatprep.mubr.f32.mxu0 0.0
      %2637 = vmatmul.mubr.f32.gmra.mrb[0].mxu0 %v2492
      %v2638 = vpop.f32.mrb[0].mxu0
      %v2639 = vadd.f32 0.0, %v2638
      %v2640 = vpop.f32.mrb[0].mxu0
      %2641 = vdwg.mxu0
      %v2642 = vadd.f32 %v2413, %v2564
      %v2643 = vadd.f32 %v2414, %v2569
      %v2644 = vadd.f32 %v2415, %v2574
      %v2645 = vadd.f32 %v2416, %v2579
      %v2646 = vadd.f32 %v2417, %v2584
      %v2647 = vadd.f32 %v2418, %v2589
      %v2648 = vadd.f32 %v2419, %v2594
      %v2649 = vadd.f32 %v2420, %v2599
      %v2650 = vadd.f32 %v2421, %v2604
      %v2651 = vadd.f32 %v2422, %v2609
      %v2652 = vadd.f32 %v2423, %v2614
      %v2653 = vadd.f32 %v2424, %v2619
      %v2654 = vadd.f32 %v2425, %v2624
      %v2655 = vadd.f32 %v2426, %v2629
      %v2656 = vadd.f32 %v2427, %v2634
      %v2657 = vadd.f32 %v2428, %v2639
      %v2658 = vld [vmem:[%s2199 + $0x2] sm:$0xff]
      %v2659 = vld [vmem:[%s2199 + $0xa] sm:$0xff]
      %v2660 = vld [vmem:[%s2199 + $0x1a] sm:$0xff]
      %v2661 = vld [vmem:[%s2199 + $0x22] sm:$0xff]
      %v2662 = vld [vmem:[%s2199 + $0x32] sm:$0xff]
      %v2663 = vld [vmem:[%s2199 + $0x3a] sm:$0xff]
      %v2664 = vld [vmem:[%s2199 + $0x4a] sm:$0xff]
      %v2665 = vld [vmem:[%s2199 + $0x52] sm:$0xff]
      %v2666 = vld [vmem:[%s2199 + $0x62] sm:$0xff]
      %v2667 = vld [vmem:[%s2199 + $0x6a] sm:$0xff]
      %v2668 = vld [vmem:[%s2199 + $0x7a] sm:$0xff]
      %v2669 = vld [vmem:[%s2199 + $0x82] sm:$0xff]
      %v2670 = vld [vmem:[%s2199 + $0x92] sm:$0xff]
      %v2671 = vld [vmem:[%s2199 + $0x9a] sm:$0xff]
      %v2672 = vld [vmem:[%s2199 + $0xaa] sm:$0xff]
      %v2673 = vld [vmem:[%s2199 + $0xb2] sm:$0xff]
      %v2674 = vld [vmem:[%s4 + $0x20] sm:$0xf]
      %v2676 = vsel %vm375, %v2658, 0
      %v2679 = vsel %vm375, %v2659, 0
      %v2682 = vsel %vm375, %v2660, 0
      %v2685 = vsel %vm375, %v2661, 0
      %v2688 = vsel %vm375, %v2662, 0
      %v2691 = vsel %vm375, %v2663, 0
      %v2694 = vsel %vm375, %v2664, 0
      %v2697 = vsel %vm375, %v2665, 0
      %v2700 = vsel %vm375, %v2666, 0
      %v2703 = vsel %vm375, %v2667, 0
      %v2706 = vsel %vm375, %v2668, 0
      %v2709 = vsel %vm375, %v2669, 0
      %v2712 = vsel %vm375, %v2670, 0
      %v2715 = vsel %vm375, %v2671, 0
      %v2718 = vsel %vm375, %v2672, 0
      %v2721 = vsel %vm375, %v2673, 0
      %v2724 = vsel %vm424, %v2674, 0
      %2726 = vmatprep.subr.mxu0 0.0
      %2727 = vmatpush1.msra.mxu0 %v2724
      %2728 = vmatprep.subr.mxu0 0.0
      %2729 = vmatpush1.msra.mxu0 0.0
      %2730 = vmatprep.subr.mxu0 0.0
      %2731 = vmatpush1.msra.mxu0 0.0
      %2732 = vmatprep.subr.mxu0 0.0
      %2733 = vmatpush1.msra.mxu0 0.0
      %2734 = vmatprep.subr.mxu0 0.0
      %2735 = vmatpush1.msra.mxu0 0.0
      %2736 = vmatprep.subr.mxu0 0.0
      %2737 = vmatpush1.msra.mxu0 0.0
      %2738 = vmatprep.subr.mxu0 0.0
      %2739 = vmatpush1.msra.mxu0 0.0
      %2740 = vmatprep.subr.mxu0 0.0
      %2741 = vmatpush1.msra.mxu0 0.0
      %2742 = vmatprep.subr.mxu0 0.0
      %2743 = vmatpush1.msra.mxu0 0.0
      %2744 = vmatprep.subr.mxu0 0.0
      %2745 = vmatpush1.msra.mxu0 0.0
      %2746 = vmatprep.subr.mxu0 0.0
      %2747 = vmatpush1.msra.mxu0 0.0
      %2748 = vmatprep.subr.mxu0 0.0
      %2749 = vmatpush1.msra.mxu0 0.0
      %2750 = vmatprep.subr.mxu0 0.0
      %2751 = vmatpush1.msra.mxu0 0.0
      %2752 = vmatprep.subr.mxu0 0.0
      %2753 = vmatpush1.msra.mxu0 0.0
      %2754 = vmatprep.subr.mxu0 0.0
      %2755 = vmatpush1.msra.mxu0 0.0
      %2756 = vmatprep.subr.mxu0 0.0
      %2757 = vmatpush1.msra.mxu0 0.0
      %2758 = vmatprep.subr.mxu0 0.0
      %2759 = vmatpush1.msra.mxu0 0.0
      %2760 = vmatprep.subr.mxu0 0.0
      %2761 = vmatpush1.msra.mxu0 0.0
      %2762 = vmatprep.subr.mxu0 0.0
      %2763 = vmatpush1.msra.mxu0 0.0
      %2764 = vmatprep.subr.mxu0 0.0
      %2765 = vmatpush1.msra.mxu0 0.0
      %2766 = vmatprep.subr.mxu0 0.0
      %2767 = vmatpush1.msra.mxu0 0.0
      %2768 = vmatprep.subr.mxu0 0.0
      %2769 = vmatpush1.msra.mxu0 0.0
      %2770 = vmatprep.subr.mxu0 0.0
      %2771 = vmatpush1.msra.mxu0 0.0
      %2772 = vmatprep.subr.mxu0 0.0
      %2773 = vmatpush1.msra.mxu0 0.0
      %2774 = vmatprep.subr.mxu0 0.0
      %2775 = vmatpush1.msra.mxu0 0.0
      %2776 = vmatprep.subr.mxu0 0.0
      %2777 = vmatpush1.msra.mxu0 0.0
      %2778 = vmatprep.subr.mxu0 0.0
      %2779 = vmatpush1.msra.mxu0 0.0
      %2780 = vmatprep.subr.mxu0 0.0
      %2781 = vmatpush1.msra.mxu0 0.0
      %2782 = vmatprep.subr.mxu0 0.0
      %2783 = vmatpush1.msra.mxu0 0.0
      %2784 = vmatprep.subr.mxu0 0.0
      %2785 = vmatpush1.msra.mxu0 0.0
      %2786 = vmatprep.subr.mxu0 0.0
      %2787 = vmatpush1.msra.mxu0 0.0
      %2788 = vmatprep.subr.mxu0 0.0
      %2789 = vmatpush1.msra.mxu0 0.0
      %2790 = vmatprep.mubr.f32.mxu0 0.0
      %2791 = vmatmul.mubr.f32.gmra.mrb[0].mxu0 %v2676
      %v2792 = vpop.f32.mrb[0].mxu0
      %v2793 = vadd.f32 0.0, %v2792
      %v2794 = vpop.f32.mrb[0].mxu0
      %2795 = vmatprep.mubr.f32.mxu0 0.0
      %2796 = vmatmul.mubr.f32.gmra.mrb[0].mxu0 %v2679
      %v2797 = vpop.f32.mrb[0].mxu0
      %v2798 = vadd.f32 0.0, %v2797
      %v2799 = vpop.f32.mrb[0].mxu0
      %2800 = vmatprep.mubr.f32.mxu0 0.0
      %2801 = vmatmul.mubr.f32.gmra.mrb[0].mxu0 %v2682
      %v2802 = vpop.f32.mrb[0].mxu0
      %v2803 = vadd.f32 0.0, %v2802
      %v2804 = vpop.f32.mrb[0].mxu0
      %2805 = vmatprep.mubr.f32.mxu0 0.0
      %2806 = vmatmul.mubr.f32.gmra.mrb[0].mxu0 %v2685
      %v2807 = vpop.f32.mrb[0].mxu0
      %v2808 = vadd.f32 0.0, %v2807
      %v2809 = vpop.f32.mrb[0].mxu0
      %2810 = vmatprep.mubr.f32.mxu0 0.0
      %2811 = vmatmul.mubr.f32.gmra.mrb[0].mxu0 %v2688
      %v2812 = vpop.f32.mrb[0].mxu0
      %v2813 = vadd.f32 0.0, %v2812
      %v2814 = vpop.f32.mrb[0].mxu0
      %2815 = vmatprep.mubr.f32.mxu0 0.0
      %2816 = vmatmul.mubr.f32.gmra.mrb[0].mxu0 %v2691
      %v2817 = vpop.f32.mrb[0].mxu0
      %v2818 = vadd.f32 0.0, %v2817
      %v2819 = vpop.f32.mrb[0].mxu0
      %2820 = vmatprep.mubr.f32.mxu0 0.0
      %2821 = vmatmul.mubr.f32.gmra.mrb[0].mxu0 %v2694
      %v2822 = vpop.f32.mrb[0].mxu0
      %v2823 = vadd.f32 0.0, %v2822
      %v2824 = vpop.f32.mrb[0].mxu0
      %2825 = vmatprep.mubr.f32.mxu0 0.0
      %2826 = vmatmul.mubr.f32.gmra.mrb[0].mxu0 %v2697
      %v2827 = vpop.f32.mrb[0].mxu0
      %v2828 = vadd.f32 0.0, %v2827
      %v2829 = vpop.f32.mrb[0].mxu0
      %2830 = vmatprep.mubr.f32.mxu0 0.0
      %2831 = vmatmul.mubr.f32.gmra.mrb[0].mxu0 %v2700
      %v2832 = vpop.f32.mrb[0].mxu0
      %v2833 = vadd.f32 0.0, %v2832
      %v2834 = vpop.f32.mrb[0].mxu0
      %2835 = vmatprep.mubr.f32.mxu0 0.0
      %2836 = vmatmul.mubr.f32.gmra.mrb[0].mxu0 %v2703
      %v2837 = vpop.f32.mrb[0].mxu0
      %v2838 = vadd.f32 0.0, %v2837
      %v2839 = vpop.f32.mrb[0].mxu0
      %2840 = vmatprep.mubr.f32.mxu0 0.0
      %2841 = vmatmul.mubr.f32.gmra.mrb[0].mxu0 %v2706
      %v2842 = vpop.f32.mrb[0].mxu0
      %v2843 = vadd.f32 0.0, %v2842
      %v2844 = vpop.f32.mrb[0].mxu0
      %2845 = vmatprep.mubr.f32.mxu0 0.0
      %2846 = vmatmul.mubr.f32.gmra.mrb[0].mxu0 %v2709
      %v2847 = vpop.f32.mrb[0].mxu0
      %v2848 = vadd.f32 0.0, %v2847
      %v2849 = vpop.f32.mrb[0].mxu0
      %2850 = vmatprep.mubr.f32.mxu0 0.0
      %2851 = vmatmul.mubr.f32.gmra.mrb[0].mxu0 %v2712
      %v2852 = vpop.f32.mrb[0].mxu0
      %v2853 = vadd.f32 0.0, %v2852
      %v2854 = vpop.f32.mrb[0].mxu0
      %2855 = vmatprep.mubr.f32.mxu0 0.0
      %2856 = vmatmul.mubr.f32.gmra.mrb[0].mxu0 %v2715
      %v2857 = vpop.f32.mrb[0].mxu0
      %v2858 = vadd.f32 0.0, %v2857
      %v2859 = vpop.f32.mrb[0].mxu0
      %2860 = vmatprep.mubr.f32.mxu0 0.0
      %2861 = vmatmul.mubr.f32.gmra.mrb[0].mxu0 %v2718
      %v2862 = vpop.f32.mrb[0].mxu0
      %v2863 = vadd.f32 0.0, %v2862
      %v2864 = vpop.f32.mrb[0].mxu0
      %2865 = vmatprep.mubr.f32.mxu0 0.0
      %2866 = vmatmul.mubr.f32.gmra.mrb[0].mxu0 %v2721
      %v2867 = vpop.f32.mrb[0].mxu0
      %v2868 = vadd.f32 0.0, %v2867
      %v2869 = vpop.f32.mrb[0].mxu0
      %2870 = vdwg.mxu0
      %v2871 = vadd.f32 %v2642, %v2793
      %v2872 = vadd.f32 %v2643, %v2798
      %v2873 = vadd.f32 %v2644, %v2803
      %v2874 = vadd.f32 %v2645, %v2808
      %v2875 = vadd.f32 %v2646, %v2813
      %v2876 = vadd.f32 %v2647, %v2818
      %v2877 = vadd.f32 %v2648, %v2823
      %v2878 = vadd.f32 %v2649, %v2828
      %v2879 = vadd.f32 %v2650, %v2833
      %v2880 = vadd.f32 %v2651, %v2838
      %v2881 = vadd.f32 %v2652, %v2843
      %v2882 = vadd.f32 %v2653, %v2848
      %v2883 = vadd.f32 %v2654, %v2853
      %v2884 = vadd.f32 %v2655, %v2858
      %v2885 = vadd.f32 %v2656, %v2863
      %v2886 = vadd.f32 %v2657, %v2868
      %v2887 = vld [vmem:[%s5] sm:$0x1]
      %v2889 = vlaneseq
      %v2890 = vshrl.u32 %v2889, 7
      %v2891 = vsub.s32 0, %v2890
      %v2892 = vrot.slane %v2887, %v2891
      %v2894 = vadd.f32 %v2871, %v2892
      %v2895 = vadd.f32 %v2872, %v2892
      %v2896 = vadd.f32 %v2873, %v2892
      %v2897 = vadd.f32 %v2874, %v2892
      %v2898 = vadd.f32 %v2875, %v2892
      %v2899 = vadd.f32 %v2876, %v2892
      %v2900 = vadd.f32 %v2877, %v2892
      %v2901 = vadd.f32 %v2878, %v2892
      %v2902 = vadd.f32 %v2879, %v2892
      %v2903 = vadd.f32 %v2880, %v2892
      %v2904 = vadd.f32 %v2881, %v2892
      %v2905 = vadd.f32 %v2882, %v2892
      %v2906 = vadd.f32 %v2883, %v2892
      %v2907 = vadd.f32 %v2884, %v2892
      %v2908 = vadd.f32 %v2885, %v2892
      %v2909 = vadd.f32 %v2886, %v2892
      %v2910 = vxor.u32 %v2894, 2147483648
      %v2911 = vxor.u32 %v2895, 2147483648
      %v2912 = vxor.u32 %v2896, 2147483648
      %v2913 = vxor.u32 %v2897, 2147483648
      %v2914 = vxor.u32 %v2898, 2147483648
      %v2915 = vxor.u32 %v2899, 2147483648
      %v2916 = vxor.u32 %v2900, 2147483648
      %v2917 = vxor.u32 %v2901, 2147483648
      %v2918 = vxor.u32 %v2902, 2147483648
      %v2919 = vxor.u32 %v2903, 2147483648
      %v2920 = vxor.u32 %v2904, 2147483648
      %v2921 = vxor.u32 %v2905, 2147483648
      %v2922 = vxor.u32 %v2906, 2147483648
      %v2923 = vxor.u32 %v2907, 2147483648
      %v2924 = vxor.u32 %v2908, 2147483648
      %v2925 = vxor.u32 %v2909, 2147483648
      %v2926 = vmul.f32 %v2910, 1.442695
      %v2927 = vpow.pop %v2926
      %v2928 = vmul.f32 %v2911, 1.442695
      %v2929 = vpow.pop %v2928
      %v2930 = vmul.f32 %v2912, 1.442695
      %v2931 = vpow.pop %v2930
      %v2932 = vmul.f32 %v2913, 1.442695
      %v2933 = vpow.pop %v2932
      %v2934 = vmul.f32 %v2914, 1.442695
      %v2935 = vpow.pop %v2934
      %v2936 = vmul.f32 %v2915, 1.442695
      %v2937 = vpow.pop %v2936
      %v2938 = vmul.f32 %v2916, 1.442695
      %v2939 = vpow.pop %v2938
      %v2940 = vmul.f32 %v2917, 1.442695
      %v2941 = vpow.pop %v2940
      %v2942 = vmul.f32 %v2918, 1.442695
      %v2943 = vpow.pop %v2942
      %v2944 = vmul.f32 %v2919, 1.442695
      %v2945 = vpow.pop %v2944
      %v2946 = vmul.f32 %v2920, 1.442695
      %v2947 = vpow.pop %v2946
      %v2948 = vmul.f32 %v2921, 1.442695
      %v2949 = vpow.pop %v2948
      %v2950 = vmul.f32 %v2922, 1.442695
      %v2951 = vpow.pop %v2950
      %v2952 = vmul.f32 %v2923, 1.442695
      %v2953 = vpow.pop %v2952
      %v2954 = vmul.f32 %v2924, 1.442695
      %v2955 = vpow.pop %v2954
      %v2956 = vmul.f32 %v2925, 1.442695
      %v2957 = vpow.pop %v2956
      %v2958 = vadd.f32 %v2927, 1.0
      %v2959 = vadd.f32 %v2929, 1.0
      %v2960 = vadd.f32 %v2931, 1.0
      %v2961 = vadd.f32 %v2933, 1.0
      %v2962 = vadd.f32 %v2935, 1.0
      %v2963 = vadd.f32 %v2937, 1.0
      %v2964 = vadd.f32 %v2939, 1.0
      %v2965 = vadd.f32 %v2941, 1.0
      %v2966 = vadd.f32 %v2943, 1.0
      %v2967 = vadd.f32 %v2945, 1.0
      %v2968 = vadd.f32 %v2947, 1.0
      %v2969 = vadd.f32 %v2949, 1.0
      %v2970 = vadd.f32 %v2951, 1.0
      %v2971 = vadd.f32 %v2953, 1.0
      %v2972 = vadd.f32 %v2955, 1.0
      %v2973 = vadd.f32 %v2957, 1.0
      %v2974 = vrcp.pop %v2958
      %v2975 = vmul.f32 1.0, %v2974
      %v2976 = vrcp.pop %v2959
      %v2977 = vmul.f32 1.0, %v2976
      %v2978 = vrcp.pop %v2960
      %v2979 = vmul.f32 1.0, %v2978
      %v2980 = vrcp.pop %v2961
      %v2981 = vmul.f32 1.0, %v2980
      %v2982 = vrcp.pop %v2962
      %v2983 = vmul.f32 1.0, %v2982
      %v2984 = vrcp.pop %v2963
      %v2985 = vmul.f32 1.0, %v2984
      %v2986 = vrcp.pop %v2964
      %v2987 = vmul.f32 1.0, %v2986
      %v2988 = vrcp.pop %v2965
      %v2989 = vmul.f32 1.0, %v2988
      %v2990 = vrcp.pop %v2966
      %v2991 = vmul.f32 1.0, %v2990
      %v2992 = vrcp.pop %v2967
      %v2993 = vmul.f32 1.0, %v2992
      %v2994 = vrcp.pop %v2968
      %v2995 = vmul.f32 1.0, %v2994
      %v2996 = vrcp.pop %v2969
      %v2997 = vmul.f32 1.0, %v2996
      %v2998 = vrcp.pop %v2970
      %v2999 = vmul.f32 1.0, %v2998
      %v3000 = vrcp.pop %v2971
      %v3001 = vmul.f32 1.0, %v3000
      %v3002 = vrcp.pop %v2972
      %v3003 = vmul.f32 1.0, %v3002
      %v3004 = vrcp.pop %v2973
      %v3005 = vmul.f32 1.0, %v3004
      %v3006 = vmul.f32 %v2894, %v2975
      %v3007 = vmul.f32 %v2895, %v2977
      %v3008 = vmul.f32 %v2896, %v2979
      %v3009 = vmul.f32 %v2897, %v2981
      %v3010 = vmul.f32 %v2898, %v2983
      %v3011 = vmul.f32 %v2899, %v2985
      %v3012 = vmul.f32 %v2900, %v2987
      %v3013 = vmul.f32 %v2901, %v2989
      %v3014 = vmul.f32 %v2902, %v2991
      %v3015 = vmul.f32 %v2903, %v2993
      %v3016 = vmul.f32 %v2904, %v2995
      %v3017 = vmul.f32 %v2905, %v2997
      %v3018 = vmul.f32 %v2906, %v2999
      %v3019 = vmul.f32 %v2907, %v3001
      %v3020 = vmul.f32 %v2908, %v3003
      %v3021 = vmul.f32 %v2909, %v3005
      %v3022 = vadd.f32 %v3006, %v351
      %v3023 = vadd.f32 %v3007, %v352
      %v3024 = vadd.f32 %v3008, %v353
      %v3025 = vadd.f32 %v3009, %v354
      %v3026 = vadd.f32 %v3010, %v355
      %v3027 = vadd.f32 %v3011, %v356
      %v3028 = vadd.f32 %v3012, %v357
      %v3029 = vadd.f32 %v3013, %v358
      %v3030 = vadd.f32 %v3014, %v359
      %v3031 = vadd.f32 %v3015, %v360
      %v3032 = vadd.f32 %v3016, %v361
      %v3033 = vadd.f32 %v3017, %v362
      %v3034 = vadd.f32 %v3018, %v363
      %v3035 = vadd.f32 %v3019, %v364
      %v3036 = vadd.f32 %v3020, %v365
      %v3037 = vadd.f32 %v3021, %v366
      %3038 = vst.msk [vmem:[%s328] sm:$0xff] %vm375, %v3022
      %3039 = vst.msk [vmem:[%s328 + $0x8] sm:$0xff] %vm375, %v3023
      %3040 = vst.msk [vmem:[%s328 + $0x10] sm:$0xff] %vm375, %v3024
      %3041 = vst.msk [vmem:[%s328 + $0x18] sm:$0xff] %vm375, %v3025
      %3042 = vst.msk [vmem:[%s328 + $0x20] sm:$0xff] %vm375, %v3026
      %3043 = vst.msk [vmem:[%s328 + $0x28] sm:$0xff] %vm375, %v3027
      %3044 = vst.msk [vmem:[%s328 + $0x30] sm:$0xff] %vm375, %v3028
      %3045 = vst.msk [vmem:[%s328 + $0x38] sm:$0xff] %vm375, %v3029
      %3046 = vst.msk [vmem:[%s328 + $0x40] sm:$0xff] %vm375, %v3030
      %3047 = vst.msk [vmem:[%s328 + $0x48] sm:$0xff] %vm375, %v3031
      %3048 = vst.msk [vmem:[%s328 + $0x50] sm:$0xff] %vm375, %v3032
      %3049 = vst.msk [vmem:[%s328 + $0x58] sm:$0xff] %vm375, %v3033
      %3050 = vst.msk [vmem:[%s328 + $0x60] sm:$0xff] %vm375, %v3034
      %3051 = vst.msk [vmem:[%s328 + $0x68] sm:$0xff] %vm375, %v3035
      %3052 = vst.msk [vmem:[%s328 + $0x70] sm:$0xff] %vm375, %v3036
      %3053 = vst.msk [vmem:[%s328 + $0x78] sm:$0xff] %vm375, %v3037
      %s3054 = smul.u32 8, %s22
      %p3055 = scmp.lt.s32.totalorder %s21, 1
      %s3056 = scalar_select %p3055, %s21, 1
      %p3057 = scmp.lt.s32.totalorder %s3054, 15
      %s3058 = scalar_select %p3057, %s3054, 15
      %s3059 = smul.addr %s3058, 2
      %s3060 = smul.addr %s3056, 32
      %s3061 = sadd.s32 %s3059, %s3060
      %s3062 = smul.addr %s3061, 8
      %s3063 = scalar_lea.vmem %s6, %s3062
      // Predicated region
      $region45: #{c3_forward.4} parent=43 // pred_check
        %p3064 = pneg %p189
      $region46: #{c3_forward.4} parent=43 // pred_check_branch
        %3066 = sbr.rel (%p3064) target = $region48
      $region47: #{c3_forward.4} parent=43 // pred_region
        %s3067 = smul.u32 8, %s22
      $region48: #{c3_forward.4} parent=43 // pred_fallthru
        _
    $region44: #{c3_forward.4} parent=5 // pred_fallthru
      _
    %p3068 = scmp.le.s32.totalorder 2, %s12
    // Predicated region
    $region49: #{c3_forward.4} parent=5 // pred_check
      %p3069 = pneg %p3068
    $region50: #{c3_forward.4} parent=5 // pred_check_branch
      %3071 = sbr.rel (%p3069) target = $region52
    $region51: #{c3_forward.4} parent=5 // pred_region
      %s3072 = ssub.s32 %s12, 2
      // Predicated region
      $region53: #{c3_forward.4} parent=51 // pred_check
        %p3073 = pneg %p195
      $region54: #{c3_forward.4} parent=51 // pred_check_branch
        %3075 = sbr.rel (%p3073) target = $region56
      $region55: #{c3_forward.4} parent=51 // pred_region
        %s3076 = smul.u32 8, %s24
        %p3077 = scmp.lt.s32.totalorder %s23, 1
        %s3078 = scalar_select %p3077, %s23, 1
        %p3079 = scmp.lt.s32.totalorder %s3076, 15
        %s3080 = scalar_select %p3079, %s3076, 15
        %s3081 = smul.addr %s3080, 2
        %s3082 = smul.addr %s3078, 32
        %s3083 = sadd.s32 %s3081, %s3082
        %s3084 = smul.addr %s3083, 8
        %s3085 = scalar_lea.vmem %s6, %s3084
      $region56: #{c3_forward.4} parent=51 // pred_fallthru
        _
    $region52: #{c3_forward.4} parent=5 // pred_fallthru
      _
  $region6: #{c3_forward.4} parent=0 // loop_footer
    %s16 = sadd.s32 1, %s12
  $region7: #{c3_forward.4} parent=0 // loop_footer_branch
    %11 = sbr.rel target = $region3
  $region8: #{c3_forward.4} parent=0 // loop_exit
    _

</llo_original>
